<compile_context>
chip_gen: v5e
topology: v5e:2x2
jax: 0.10.0
libtpu: 0.0.40
codegen_flags: <defaults>
</compile_context>

<pallas_src>
import jax
import jax.numpy as jnp
import numpy as np
from jax.experimental import pallas as pl
from jax.experimental.pallas import tpu as pltpu


def _round_up(x, m):
    return ((x + m - 1) // m) * m


# ----------------------------------------------------------------------------
# Kernel 1: relational GAT aggregation (one tile of items)
# ----------------------------------------------------------------------------
def rgat_kernel(item_ref, ent_ref, rel_ref, mask_ref, wi_ref, we_ref, out_ref):
    """item_ref (tN,D), ent_ref/rel_ref (tN,E,D), mask_ref (tN,E),
    wi_ref/we_ref (D,D) (transposed halves of the fc weight), out_ref (tN,D)."""
    item = item_ref[...]
    ent = ent_ref[...]
    rel = rel_ref[...]
    mask = mask_ref[...]

    tN, E, D = ent.shape

    # fc(concat([item, entity])) == item @ Wi + entity @ We  (Linear, no bias)
    item_proj = jnp.dot(item, wi_ref[...], preferred_element_type=jnp.float32)   # (tN, D)
    ent_proj = jnp.dot(ent.reshape(tN * E, D), we_ref[...],
                       preferred_element_type=jnp.float32).reshape(tN, E, D)

    # Relation-weighted logits, distributing the dot over the sum so the
    # (tN,E,D) fc_out = item_proj[:,None,:] + ent_proj is never materialized.
    # (Item term kept as broadcast-mul-reduce: a batched dot with a degenerate
    #  free dim would waste the MXU here.)
    e = jnp.sum(ent_proj * rel, axis=-1)                                          # (tN, E)
    e = e + jnp.sum(item_proj[:, None, :] * rel, axis=-1)
    e = jnp.where(e > 0, e, 0.2 * e)                                              # LeakyReLU(0.2)
    e = jnp.where(mask > 0, e, jnp.float32(-9e15))                                # mask padding

    # softmax over neighbors (approx reciprocal -> EUP, off the VALU)
    e_max = jnp.max(e, axis=1, keepdims=True)
    p = jnp.exp(e - e_max)
    att = p * pl.reciprocal(jnp.sum(p, axis=1, keepdims=True), approx=True)

    # attention-weighted neighbor aggregation + residual item embedding
    agg = jnp.sum(att[:, :, None] * ent, axis=1)                                  # (tN, D)
    out_ref[...] = agg + item


def rgat_forward(item_embs, entity_embs, relation_embs, padding_mask, fc_weight,
                 *, tile_n=128):
    """tile_n=128 saturates the MXU M dim on v5e; use 256 on v6e/v7x if desired."""
    N, E, D = entity_embs.shape
    # torch Linear(2D -> D, bias=False): y = x @ W.T, W: (D, 2D). Split halves.
    wi = fc_weight[:, :D].T.astype(jnp.float32)   # (D, D)
    we = fc_weight[:, D:].T.astype(jnp.float32)   # (D, D)

    tn = min(tile_n, _round_up(N, 8))
    N_pad = _round_up(N, tn)
    if N_pad != N:
        pad = N_pad - N
        item_embs = jnp.pad(item_embs, ((0, pad), (0, 0)))
        entity_embs = jnp.pad(entity_embs, ((0, pad), (0, 0), (0, 0)))
        relation_embs = jnp.pad(relation_embs, ((0, pad), (0, 0), (0, 0)))
        padding_mask = jnp.pad(padding_mask, ((0, pad), (0, 0)))

    grid = (N_pad // tn,)
    out = pl.pallas_call(
        rgat_kernel,
        out_shape=jax.ShapeDtypeStruct((N_pad, D), jnp.float32),
        grid_spec=pltpu.PrefetchScalarGridSpec(
            num_scalar_prefetch=0,
            grid=grid,
            in_specs=[
                pl.BlockSpec((tn, D), lambda i: (i, 0)),
                pl.BlockSpec((tn, E, D), lambda i: (i, 0, 0)),
                pl.BlockSpec((tn, E, D), lambda i: (i, 0, 0)),
                pl.BlockSpec((tn, E), lambda i: (i, 0)),
                pl.BlockSpec((D, D), lambda i: (0, 0)),
                pl.BlockSpec((D, D), lambda i: (0, 0)),
            ],
            out_specs=pl.BlockSpec((tn, D), lambda i: (i, 0)),
        ),
        compiler_params=pltpu.CompilerParams(
            dimension_semantics=("parallel",)),
    )(item_embs, entity_embs, relation_embs, padding_mask, wi, we)
    return out[:N]


# ----------------------------------------------------------------------------
# Kernel 2: one LightGCN layer (G @ E) as a tiled matmul streaming G from HBM
# ----------------------------------------------------------------------------
def graph_matmul_kernel(g_ref, e_ref, o_ref, acc_ref):
    """g_ref (tm,tk) bf16, e_ref (tk,td) f32, o_ref (tm,td) f32, acc f32 scratch."""
    @pl.when(pl.program_id(2) == 0)
    def _():
        acc_ref[...] = jnp.zeros_like(acc_ref)

    acc_ref[...] += jnp.dot(g_ref[...], e_ref[...].astype(jnp.bfloat16),
                            preferred_element_type=jnp.float32)

    @pl.when(pl.program_id(2) == pl.num_programs(2) - 1)
    def _():
        o_ref[...] = acc_ref[...]


def lightgcn_forward(graph, all_emb, *, n_layers):
    """n_layers of cur <- G @ cur plus the mean over layer outputs."""
    M, D = all_emb.shape

    # Tile selection: lane-dense output blocks, MXU-filling tiles, and (for
    # realistic M) >= 2 parallel grid points so megacore sharding engages.
    tm = min(256, _round_up(M, 8))
    tk = tm
    if D >= 256 and D % 256 == 0:
        td = 256
    elif D % 128 == 0:
        td = 128
    else:
        td = D

    M_pad = _round_up(M, tm)
    g = graph
    emb = all_emb
    if M_pad != M:
        pad = M_pad - M
        g = jnp.pad(graph, ((0, pad), (0, pad)))
        emb = jnp.pad(all_emb, ((0, pad), (0, 0)))
    g_bf16 = g.astype(jnp.bfloat16)   # halves HBM traffic; f32 accumulation in-kernel

    grid = (M_pad // tm, D // td, M_pad // tk)
    prop = pl.pallas_call(
        graph_matmul_kernel,
        out_shape=jax.ShapeDtypeStruct((M_pad, D), jnp.float32),
        grid_spec=pltpu.PrefetchScalarGridSpec(
            num_scalar_prefetch=0,
            grid=grid,
            in_specs=[
                pl.BlockSpec((tm, tk), lambda i, j, k: (i, k)),
                pl.BlockSpec((tk, td), lambda i, j, k: (k, j)),
            ],
            out_specs=pl.BlockSpec((tm, td), lambda i, j, k: (i, j)),
            scratch_shapes=[pltpu.VMEM((tm, td), jnp.float32)],
        ),
        compiler_params=pltpu.CompilerParams(
            dimension_semantics=("parallel", "parallel", "arbitrary")),
    )

    acc = emb
    cur = emb
    for _ in range(n_layers):
        cur = prop(g_bf16, cur)     # streamed pass over G
        acc = acc + cur             # tiny (M*D) glue vs M^2 graph traffic
    light_out = acc * jnp.float32(1.0 / (n_layers + 1))
    return light_out[:M]


# ----------------------------------------------------------------------------
# KGCL.computer()
# ----------------------------------------------------------------------------
def kgcl_computer(params, kg, graph, *, n_layers):
    """Returns (users, items, entity_table, relation_table)."""
    # --- cal_item_embedding_rgat (embedding gathers are glue) ---------------
    item_embs = params["embedding_item"]                                      # (Ni, D)
    entity_embs = jnp.take(params["embedding_entity"], kg["item_entities"],
                           axis=0)                                            # (Ni, E, D)
    relation_embs = jnp.take(params["embedding_relation"], kg["item_relations"],
                             axis=0)                                          # (Ni, E, D)
    num_entities = params["embedding_entity"].shape[0] - 1
    padding_mask = (kg["item_entities"] != num_entities).astype(jnp.float32)

    items_kg = rgat_forward(item_embs, entity_embs, relation_embs,
                            padding_mask, params["gat_fc_weight"])

    # --- LightGCN propagation + layer mean ----------------------------------
    all_emb = jnp.concatenate([params["embedding_user"], items_kg], axis=0)
    light_out = lightgcn_forward(graph, all_emb, n_layers=n_layers)

    num_users = params["embedding_user"].shape[0]
    users = light_out[:num_users]
    items = light_out[num_users:]
    return users, items, params["embedding_entity"], params["embedding_relation"]


# ----------------------------------------------------------------------------
# Pure-JAX f32 reference (for correctness check)
# ----------------------------------------------------------------------------
def kgcl_computer_ref(params, kg, graph, *, n_layers):
    item = params["embedding_item"]
    ent = jnp.take(params["embedding_entity"], kg["item_entities"], axis=0)
    rel = jnp.take(params["embedding_relation"], kg["item_relations"], axis=0)
    num_entities = params["embedding_entity"].shape[0] - 1
    mask = (kg["item_entities"] != num_entities).astype(jnp.float32)

    Wfc = params["gat_fc_weight"]
    a_input = jnp.concatenate(
        [jnp.broadcast_to(item[:, None, :], ent.shape), ent], axis=-1)
    fc = a_input @ Wfc.T
    e = jnp.sum(fc * rel, axis=-1)
    e = jnp.where(e > 0, e, 0.2 * e)
    e = jnp.where(mask > 0, e, -9e15)
    att = jax.nn.softmax(e, axis=1)
    items_kg = jnp.sum(att[:, :, None] * ent, axis=1) + item

    all_emb = jnp.concatenate([params["embedding_user"], items_kg], axis=0)
    embs = [all_emb]
    cur = all_emb
    for _ in range(n_layers):
        cur = graph @ cur
        embs.append(cur)
    light_out = jnp.mean(jnp.stack(embs, axis=1), axis=1)
    num_users = params["embedding_user"].shape[0]
    return light_out[:num_users], light_out[num_users:]


# ----------------------------------------------------------------------------
# Main
# ----------------------------------------------------------------------------
if __name__ == "__main__":
    # small synthetic KGCL instance (sized to exercise multi-tile + padding paths)
    num_users = 150
    num_items = 200
    num_entities = 300
    num_relations = 12
    latent_dim = 128          # config['latent_dim_rec']
    n_layers = 3              # config['lightGCN_n_layers']
    entity_num_per_item = 8

    key = jax.random.PRNGKey(0)
    keys = jax.random.split(key, 10)

    # nn.init.normal_(std=0.1) embedding tables
    params = {
        "embedding_user": 0.1 * jax.random.normal(keys[0], (num_users, latent_dim),
                                                  jnp.float32),
        "embedding_item": 0.1 * jax.random.normal(keys[1], (num_items, latent_dim),
                                                  jnp.float32),
        "embedding_entity": 0.1 * jax.random.normal(keys[2],
                                                    (num_entities + 1, latent_dim),
                                                    jnp.float32),
        "embedding_relation": 0.1 * jax.random.normal(keys[3],
                                                      (num_relations + 1, latent_dim),
                                                      jnp.float32),
    }
    # GraphAttentionLayer.fc = Linear(2*D, D, bias=False), xavier-uniform weight
    bound = np.sqrt(6.0 / (2 * latent_dim + latent_dim))
    params["gat_fc_weight"] = jax.random.uniform(
        keys[4], (latent_dim, 2 * latent_dim), jnp.float32, -bound, bound)
    # W_R exists in __init__ but is unused in forward(); skipped.

    # kg_dict / item2relations: per-item entity & relation neighbor ids
    # (index == num_entities / num_relations acts as padding)
    kg = {
        "item_entities": jax.random.randint(
            keys[5], (num_items, entity_num_per_item), 0, num_entities + 1),
        "item_relations": jax.random.randint(
            keys[6], (num_items, entity_num_per_item), 0, num_relations + 1),
    }

    # getSparseGraph(): symmetric-normalized bipartite adjacency (dense here)
    R = (jax.random.uniform(keys[7], (num_users, num_items)) < 0.05).astype(jnp.float32)
    M = num_users + num_items
    A = jnp.zeros((M, M), jnp.float32)
    A = A.at[:num_users, num_users:].set(R)
    A = A.at[num_users:, :num_users].set(R.T)
    deg = A.sum(axis=1)
    d_inv_sqrt = jnp.where(deg > 0, deg ** -0.5, 0.0)
    graph = d_inv_sqrt[:, None] * A * d_inv_sqrt[None, :]

    users, items, ent_tab, rel_tab = kgcl_computer(params, kg, graph,
                                                   n_layers=n_layers)
    jax.block_until_ready((users, items, ent_tab, rel_tab))

    users_ref, items_ref = kgcl_computer_ref(params, kg, graph, n_layers=n_layers)
    # bf16 graph propagation + approx softmax reciprocal => relaxed tolerance
    np.testing.assert_allclose(np.asarray(users), np.asarray(users_ref),
                               rtol=3e-2, atol=3e-3)
    np.testing.assert_allclose(np.asarray(items), np.asarray(items_ref),
                               rtol=3e-2, atol=3e-3)

    print("KERNEL_OK")
</pallas_src>

<mosaic_0001>
module attributes {stable_mosaic.version = 11 : i64} {
  func.func @rgat_kernel(%arg0: i32, %arg1: memref<128x128xf32, #tpu.memory_space<vmem>>, %arg2: memref<128x8x128xf32, #tpu.memory_space<vmem>>, %arg3: memref<128x8x128xf32, #tpu.memory_space<vmem>>, %arg4: memref<128x8xf32, #tpu.memory_space<vmem>>, %arg5: memref<128x128xf32, #tpu.memory_space<vmem>>, %arg6: memref<128x128xf32, #tpu.memory_space<vmem>>, %arg7: memref<128x128xf32, #tpu.memory_space<vmem>>) attributes {dimension_semantics = [#tpu.dimension_semantics<parallel>], iteration_bounds = array<i64: 2>, scalar_prefetch = 0 : i64, scratch_operands = 0 : i64, tpu.core_type = #tpu.core_type<tc>, window_params = [{transform_indices = @transform_0, window_bounds = array<i64: 128, 128>}, {transform_indices = @transform_1, window_bounds = array<i64: 128, 8, 128>}, {transform_indices = @transform_2, window_bounds = array<i64: 128, 8, 128>}, {transform_indices = @transform_3, window_bounds = array<i64: 128, 8>}, {pipeline_mode = #tpu.pipeline_mode<synchronous>, transform_indices = @transform_4, window_bounds = array<i64: 128, 128>}, {pipeline_mode = #tpu.pipeline_mode<synchronous>, transform_indices = @transform_5, window_bounds = array<i64: 128, 128>}, {transform_indices = @transform_6, window_bounds = array<i64: 128, 128>}]} {
    %c0 = arith.constant 0 : index
    %c0_0 = arith.constant 0 : index
    %0 = vector.load %arg1[%c0, %c0_0] : memref<128x128xf32, #tpu.memory_space<vmem>>, vector<128x128xf32>
    %c0_1 = arith.constant 0 : index
    %c0_2 = arith.constant 0 : index
    %c0_3 = arith.constant 0 : index
    %1 = vector.load %arg2[%c0_1, %c0_2, %c0_3] : memref<128x8x128xf32, #tpu.memory_space<vmem>>, vector<128x8x128xf32>
    %c0_4 = arith.constant 0 : index
    %c0_5 = arith.constant 0 : index
    %c0_6 = arith.constant 0 : index
    %2 = vector.load %arg3[%c0_4, %c0_5, %c0_6] : memref<128x8x128xf32, #tpu.memory_space<vmem>>, vector<128x8x128xf32>
    %c0_7 = arith.constant 0 : index
    %c0_8 = arith.constant 0 : index
    %3 = vector.load %arg4[%c0_7, %c0_8] : memref<128x8xf32, #tpu.memory_space<vmem>>, vector<128x8xf32>
    %c0_9 = arith.constant 0 : index
    %c0_10 = arith.constant 0 : index
    %4 = vector.load %arg5[%c0_9, %c0_10] : memref<128x128xf32, #tpu.memory_space<vmem>>, vector<128x128xf32>
    %cst = arith.constant dense<0.000000e+00> : vector<128x128xf32>
    %5 = tpu.matmul %0, %4, %cst {dimension_numbers = #tpu.dot_dimension_numbers<[1], [0], [0], [1], [0, 0, 1, 1], [], []>} : vector<128x128xf32>, vector<128x128xf32>, vector<128x128xf32> -> vector<128x128xf32>
    %6 = vector.shape_cast %1 : vector<128x8x128xf32> to vector<1024x128xf32>
    %c0_11 = arith.constant 0 : index
    %c0_12 = arith.constant 0 : index
    %7 = vector.load %arg6[%c0_11, %c0_12] : memref<128x128xf32, #tpu.memory_space<vmem>>, vector<128x128xf32>
    %cst_13 = arith.constant dense<0.000000e+00> : vector<1024x128xf32>
    %8 = tpu.matmul %6, %7, %cst_13 {dimension_numbers = #tpu.dot_dimension_numbers<[1], [0], [0], [1], [0, 0, 1, 1], [], []>} : vector<1024x128xf32>, vector<128x128xf32>, vector<1024x128xf32> -> vector<1024x128xf32>
    %9 = vector.shape_cast %8 : vector<1024x128xf32> to vector<128x8x128xf32>
    %10 = arith.mulf %9, %2 : vector<128x8x128xf32>
    %cst_14 = arith.constant dense<0.000000e+00> : vector<128x8xf32>
    %11 = vector.multi_reduction <add>, %10, %cst_14 [2] : vector<128x8x128xf32> to vector<128x8xf32>
    %12 = vector.shape_cast %5 : vector<128x128xf32> to vector<128x1x128xf32>
    %13 = vector.broadcast %12 : vector<128x1x128xf32> to vector<128x8x128xf32>
    %14 = arith.mulf %13, %2 : vector<128x8x128xf32>
    %cst_15 = arith.constant dense<0.000000e+00> : vector<128x8xf32>
    %15 = vector.multi_reduction <add>, %14, %cst_15 [2] : vector<128x8x128xf32> to vector<128x8xf32>
    %16 = arith.addf %11, %15 : vector<128x8xf32>
    %cst_16 = arith.constant 0.000000e+00 : f32
    %17 = vector.broadcast %cst_16 : f32 to vector<128x8xf32>
    %18 = arith.cmpf ogt, %16, %17 : vector<128x8xf32>
    %cst_17 = arith.constant 2.000000e-01 : f32
    %19 = vector.broadcast %cst_17 : f32 to vector<128x8xf32>
    %20 = arith.mulf %19, %16 : vector<128x8xf32>
    %21 = arith.select %18, %16, %20 : vector<128x8xi1>, vector<128x8xf32>
    %cst_18 = arith.constant 0.000000e+00 : f32
    %22 = vector.broadcast %cst_18 : f32 to vector<128x8xf32>
    %23 = arith.cmpf ogt, %3, %22 : vector<128x8xf32>
    %cst_19 = arith.constant -9.000000e+15 : f32
    %24 = vector.broadcast %cst_19 : f32 to vector<128x8xf32>
    %25 = arith.select %23, %21, %24 : vector<128x8xi1>, vector<128x8xf32>
    %cst_20 = arith.constant dense<0xFF800000> : vector<128xf32>
    %26 = vector.multi_reduction <maximumf>, %25, %cst_20 [1] : vector<128x8xf32> to vector<128xf32>
    %27 = vector.shape_cast %26 : vector<128xf32> to vector<128x1xf32>
    %28 = vector.broadcast %27 : vector<128x1xf32> to vector<128x8xf32>
    %29 = arith.subf %25, %28 : vector<128x8xf32>
    %30 = math.exp %29 : vector<128x8xf32>
    %cst_21 = arith.constant dense<0.000000e+00> : vector<128xf32>
    %31 = vector.multi_reduction <add>, %30, %cst_21 [1] : vector<128x8xf32> to vector<128xf32>
    %32 = vector.shape_cast %31 : vector<128xf32> to vector<128x1xf32>
    %33 = tpu.reciprocal %32 {approx = true} : vector<128x1xf32> -> vector<128x1xf32>
    %34 = vector.broadcast %33 : vector<128x1xf32> to vector<128x8xf32>
    %35 = arith.mulf %30, %34 : vector<128x8xf32>
    %36 = vector.shape_cast %35 : vector<128x8xf32> to vector<128x8x1xf32>
    %37 = vector.broadcast %36 : vector<128x8x1xf32> to vector<128x8x128xf32>
    %38 = arith.mulf %37, %1 : vector<128x8x128xf32>
    %cst_22 = arith.constant dense<0.000000e+00> : vector<128x128xf32>
    %39 = vector.multi_reduction <add>, %38, %cst_22 [1] : vector<128x8x128xf32> to vector<128x128xf32>
    %40 = arith.addf %39, %0 : vector<128x128xf32>
    %c0_23 = arith.constant 0 : index
    %c0_24 = arith.constant 0 : index
    %41 = vector.load %arg7[%c0_23, %c0_24] : memref<128x128xf32, #tpu.memory_space<vmem>>, vector<128x128xf32>
    tpu.vector_store %arg7[%c0_23, %c0_24], %40 {strides = array<i32>} : memref<128x128xf32, #tpu.memory_space<vmem>>, vector<128x128xf32>,
    return
  }
  func.func @transform_0(%arg0: i32) -> (i32, i32) {
    %c0_i32 = arith.constant 0 : i32
    %c0_i32_0 = arith.constant 0 : i32
    return %arg0, %c0_i32 : i32, i32
  }
  func.func @transform_1(%arg0: i32) -> (i32, i32, i32) {
    %c0_i32 = arith.constant 0 : i32
    %c0_i32_0 = arith.constant 0 : i32
    %c0_i32_1 = arith.constant 0 : i32
    return %arg0, %c0_i32, %c0_i32_0 : i32, i32, i32
  }
  func.func @transform_2(%arg0: i32) -> (i32, i32, i32) {
    %c0_i32 = arith.constant 0 : i32
    %c0_i32_0 = arith.constant 0 : i32
    %c0_i32_1 = arith.constant 0 : i32
    return %arg0, %c0_i32, %c0_i32_0 : i32, i32, i32
  }
  func.func @transform_3(%arg0: i32) -> (i32, i32) {
    %c0_i32 = arith.constant 0 : i32
    %c0_i32_0 = arith.constant 0 : i32
    return %arg0, %c0_i32 : i32, i32
  }
  func.func @transform_4(%arg0: i32) -> (i32, i32) {
    %c0_i32 = arith.constant 0 : i32
    %c0_i32_0 = arith.constant 0 : i32
    %c0_i32_1 = arith.constant 0 : i32
    return %c0_i32, %c0_i32_0 : i32, i32
  }
  func.func @transform_5(%arg0: i32) -> (i32, i32) {
    %c0_i32 = arith.constant 0 : i32
    %c0_i32_0 = arith.constant 0 : i32
    %c0_i32_1 = arith.constant 0 : i32
    return %c0_i32, %c0_i32_0 : i32, i32
  }
  func.func @transform_6(%arg0: i32) -> (i32, i32) {
    %c0_i32 = arith.constant 0 : i32
    %c0_i32_0 = arith.constant 0 : i32
    return %arg0, %c0_i32 : i32, i32
  }
}

</mosaic_0001>

<llo_original>
// kernel: tpu_custom_call.1
$region0: #{tpu_custom_call.1}
  #allocation0 [shape = 'u32[]', space=smem, size = 0x4, offset = 0x4, fixed_abs, tag = 'smem constant byte address 0x4 - core index']
  #allocation1 [shape = 'u32[72,128]{1,0:T(1,128)}', space=vmem, size = 0x9000, scoped, tag = 'internal scratch']
  %s0 = inlined_call_operand.vmem [shape: f32[256,128], index: 0, kind: input, shape index: {}]
  %s1 = inlined_call_operand.hbm [shape: f32[256,8,128], index: 1, kind: input, shape index: {}]
  %s2 = inlined_call_operand.hbm [shape: f32[256,8,128], index: 2, kind: input, shape index: {}]
  %s3 = inlined_call_operand.vmem [shape: f32[256,8], index: 3, kind: input, shape index: {}]
  %s4 = inlined_call_operand.hbm [shape: f32[128,128], index: 4, kind: input, shape index: {}]
  %s5 = inlined_call_operand.hbm [shape: f32[128,128], index: 5, kind: input, shape index: {}]
  %s6 = inlined_call_operand.hbm [shape: f32[256,128], index: 6, kind: output, shape index: {}]
  %s7 = sld [smem:[#allocation0]]
  $region73: #{tpu_custom_call.1} parent=0
    _
  %s9 = ssub.s32 1, %s7
  %s10 = scalar_select 0, %s9, %s7
  $region1: #{tpu_custom_call.1} parent=0
    #allocation2 [shape = 'u8[1048576]{0}', space=vmem, size = 0x100000, scoped, tag = 'input window, operand 1']
    #allocation3 [shape = 's32[2]{0}', space=sflag, size = 0x8, scoped, tag = 'scoped memory for tpu_custom_call.1']
    #allocation4 [shape = 's32[2]{0}', space=sflag, size = 0x8, scoped, tag = 'scoped memory for tpu_custom_call.1']
    #allocation5 [shape = 'u8[1048576]{0}', space=vmem, size = 0x100000, scoped, tag = 'input window, operand 2']
    #allocation6 [shape = 's32[2]{0}', space=sflag, size = 0x8, scoped, tag = 'scoped memory for tpu_custom_call.1']
    #allocation7 [shape = 'u8[65536]{0}', space=vmem, size = 0x10000, scoped, tag = 'input window, operand 4, single buffered']
    #allocation8 [shape = 'u8[65536]{0}', space=vmem, size = 0x10000, scoped, tag = 'input window, operand 5, single buffered']
    #allocation9 [shape = 's32[1]{0}', space=sflag, size = 0x4, scoped, tag = 'scoped memory for tpu_custom_call.1']
    #allocation10 [shape = 'u8[131072]{0}', space=vmem, size = 0x20000, scoped, tag = 'output window, operand 0']
    %11 = vsyncpa [#allocation3], 0
    %s12 = scalar_lea.sflag [#allocation3], 1
    %13 = vsyncpa %s12, 0
    %14 = vsyncpa [#allocation6], 0
    %s15 = scalar_lea.sflag [#allocation6], 1
    %16 = vsyncpa %s15, 0
    %17 = vsyncpa [#allocation9], 0
    %18 = vsyncpa [#allocation4], 0
    %s19 = scalar_lea.sflag [#allocation4], 1
    %20 = vsyncpa %s19, 0
    loop: start=0, step=1, limit=4
    $region2: #{tpu_custom_call.1} parent=1 // loop_pre_header
      _
    $region3: #{tpu_custom_call.1} parent=1 // loop_header
      %s22 = sphi 0, %s26
      %p23 = scmp.ge.s32.totalorder %s22, 4
      %s32 = sphi 0, %s34
      %s35 = sphi 0, %s32
      %s36 = sphi 0, %s35
      %s52 = sphi 0, %s36
      %s58 = sphi 0, %s60
      %s61 = sphi 0, %s58
      %s62 = sphi 0, %s61
      %s78 = sphi 0, %s62
      %s84 = sphi 0, %s86
      %s87 = sphi 0, %s84
      %s88 = sphi 0, %s87
      %s104 = sphi 0, %s88
      %s110 = sphi 0, %s112
      %s113 = sphi 0, %s110
      %s114 = sphi 0, %s113
      %s130 = sphi 0, %s114
      %s134 = sphi 0, %s134
      %s136 = sphi 0, %s134
      %s137 = sphi 0, %s136
      %s151 = sphi 0, %s137
      %s155 = sphi 0, %s155
      %s157 = sphi 0, %s155
      %s158 = sphi 0, %s157
      %s172 = sphi 0, %s158
      %s178 = sphi 0, %s180
      %s181 = sphi 0, %s178
      %s182 = sphi 0, %s181
      %s198 = sphi 0, %s182
    $region4: #{tpu_custom_call.1} parent=1 // loop_header_branch
      %25 = sbr.rel (%p23) target = $region8
    $region5: #{tpu_custom_call.1} parent=1 // loop_body
      %s27 = ssub.s32 %s22, 1
      %s28 = ssub.s32 %s22, 2
      %s29 = sadd.s32 %s22, 1
      %s30 = ssub.s32 %s22, %s29
      %p31 = scmp.eq.s32.totalorder %s30, 0
      %s33 = sadd.s32 %s32, 1
      %s34 = scalar_select %p31, %s32, %s33
      %p37 = pneg %p31
      %p38 = scmp.eq.s32.totalorder %s22, 1
      %p39 = por %p37, %p38
      %p40 = scmp.ne.s32.totalorder %s32, %s35
      %p41 = scmp.eq.s32.totalorder %s22, 0
      %p42 = por %p40, %p41
      %p43 = scmp.ne.s32.totalorder %s32, %s35
      %p44 = scmp.eq.s32.totalorder %s27, 1
      %p45 = por %p43, %p44
      %p46 = scmp.ne.s32.totalorder %s35, %s36
      %p47 = scmp.eq.s32.totalorder %s27, 0
      %p48 = por %p46, %p47
      %p49 = scmp.ne.s32.totalorder %s35, %s36
      %p50 = scmp.eq.s32.totalorder %s28, 1
      %p51 = por %p49, %p50
      %p53 = scmp.ne.s32.totalorder %s36, %s52
      %p54 = scmp.eq.s32.totalorder %s28, 0
      %p55 = por %p53, %p54
      %s56 = ssub.s32 %s22, %s29
      %p57 = scmp.eq.s32.totalorder %s56, 0
      %s59 = sadd.s32 %s58, 1
      %s60 = scalar_select %p57, %s58, %s59
      %p63 = pneg %p57
      %p64 = scmp.eq.s32.totalorder %s22, 1
      %p65 = por %p63, %p64
      %p66 = scmp.ne.s32.totalorder %s58, %s61
      %p67 = scmp.eq.s32.totalorder %s22, 0
      %p68 = por %p66, %p67
      %p69 = scmp.ne.s32.totalorder %s58, %s61
      %p70 = scmp.eq.s32.totalorder %s27, 1
      %p71 = por %p69, %p70
      %p72 = scmp.ne.s32.totalorder %s61, %s62
      %p73 = scmp.eq.s32.totalorder %s27, 0
      %p74 = por %p72, %p73
      %p75 = scmp.ne.s32.totalorder %s61, %s62
      %p76 = scmp.eq.s32.totalorder %s28, 1
      %p77 = por %p75, %p76
      %p79 = scmp.ne.s32.totalorder %s62, %s78
      %p80 = scmp.eq.s32.totalorder %s28, 0
      %p81 = por %p79, %p80
      %s82 = ssub.s32 %s22, %s29
      %p83 = scmp.eq.s32.totalorder %s82, 0
      %s85 = sadd.s32 %s84, 1
      %s86 = scalar_select %p83, %s84, %s85
      %p89 = pneg %p83
      %p90 = scmp.eq.s32.totalorder %s22, 1
      %p91 = por %p89, %p90
      %p92 = scmp.ne.s32.totalorder %s84, %s87
      %p93 = scmp.eq.s32.totalorder %s22, 0
      %p94 = por %p92, %p93
      %p95 = scmp.ne.s32.totalorder %s84, %s87
      %p96 = scmp.eq.s32.totalorder %s27, 1
      %p97 = por %p95, %p96
      %p98 = scmp.ne.s32.totalorder %s87, %s88
      %p99 = scmp.eq.s32.totalorder %s27, 0
      %p100 = por %p98, %p99
      %p101 = scmp.ne.s32.totalorder %s87, %s88
      %p102 = scmp.eq.s32.totalorder %s28, 1
      %p103 = por %p101, %p102
      %p105 = scmp.ne.s32.totalorder %s88, %s104
      %p106 = scmp.eq.s32.totalorder %s28, 0
      %p107 = por %p105, %p106
      %s108 = ssub.s32 %s22, %s29
      %p109 = scmp.eq.s32.totalorder %s108, 0
      %s111 = sadd.s32 %s110, 1
      %s112 = scalar_select %p109, %s110, %s111
      %p115 = pneg %p109
      %p116 = scmp.eq.s32.totalorder %s22, 1
      %p117 = por %p115, %p116
      %p118 = scmp.ne.s32.totalorder %s110, %s113
      %p119 = scmp.eq.s32.totalorder %s22, 0
      %p120 = por %p118, %p119
      %p121 = scmp.ne.s32.totalorder %s110, %s113
      %p122 = scmp.eq.s32.totalorder %s27, 1
      %p123 = por %p121, %p122
      %p124 = scmp.ne.s32.totalorder %s113, %s114
      %p125 = scmp.eq.s32.totalorder %s27, 0
      %p126 = por %p124, %p125
      %p127 = scmp.ne.s32.totalorder %s113, %s114
      %p128 = scmp.eq.s32.totalorder %s28, 1
      %p129 = por %p127, %p128
      %p131 = scmp.ne.s32.totalorder %s114, %s130
      %p132 = scmp.eq.s32.totalorder %s28, 0
      %p133 = por %p131, %p132
      %s135 = sadd.s32 %s134, 1
      %p138 = scmp.eq.s32.totalorder %s22, 1
      %p139 = scmp.ne.s32.totalorder %s134, %s136
      %p140 = scmp.eq.s32.totalorder %s22, 0
      %p141 = por %p139, %p140
      %p142 = scmp.ne.s32.totalorder %s134, %s136
      %p143 = scmp.eq.s32.totalorder %s27, 1
      %p144 = por %p142, %p143
      %p145 = scmp.ne.s32.totalorder %s136, %s137
      %p146 = scmp.eq.s32.totalorder %s27, 0
      %p147 = por %p145, %p146
      %p148 = scmp.ne.s32.totalorder %s136, %s137
      %p149 = scmp.eq.s32.totalorder %s28, 1
      %p150 = por %p148, %p149
      %p152 = scmp.ne.s32.totalorder %s137, %s151
      %p153 = scmp.eq.s32.totalorder %s28, 0
      %p154 = por %p152, %p153
      %s156 = sadd.s32 %s155, 1
      %p159 = scmp.eq.s32.totalorder %s22, 1
      %p160 = scmp.ne.s32.totalorder %s155, %s157
      %p161 = scmp.eq.s32.totalorder %s22, 0
      %p162 = por %p160, %p161
      %p163 = scmp.ne.s32.totalorder %s155, %s157
      %p164 = scmp.eq.s32.totalorder %s27, 1
      %p165 = por %p163, %p164
      %p166 = scmp.ne.s32.totalorder %s157, %s158
      %p167 = scmp.eq.s32.totalorder %s27, 0
      %p168 = por %p166, %p167
      %p169 = scmp.ne.s32.totalorder %s157, %s158
      %p170 = scmp.eq.s32.totalorder %s28, 1
      %p171 = por %p169, %p170
      %p173 = scmp.ne.s32.totalorder %s158, %s172
      %p174 = scmp.eq.s32.totalorder %s28, 0
      %p175 = por %p173, %p174
      %s176 = ssub.s32 %s22, %s29
      %p177 = scmp.eq.s32.totalorder %s176, 0
      %s179 = sadd.s32 %s178, 1
      %s180 = scalar_select %p177, %s178, %s179
      %p183 = pneg %p177
      %p184 = scmp.eq.s32.totalorder %s22, 1
      %p185 = por %p183, %p184
      %p186 = scmp.ne.s32.totalorder %s178, %s181
      %p187 = scmp.eq.s32.totalorder %s22, 0
      %p188 = por %p186, %p187
      %p189 = scmp.ne.s32.totalorder %s178, %s181
      %p190 = scmp.eq.s32.totalorder %s27, 1
      %p191 = por %p189, %p190
      %p192 = scmp.ne.s32.totalorder %s181, %s182
      %p193 = scmp.eq.s32.totalorder %s27, 0
      %p194 = por %p192, %p193
      %p195 = scmp.ne.s32.totalorder %s181, %s182
      %p196 = scmp.eq.s32.totalorder %s28, 1
      %p197 = por %p195, %p196
      %p199 = scmp.ne.s32.totalorder %s182, %s198
      %p200 = scmp.eq.s32.totalorder %s28, 0
      %p201 = por %p199, %p200
      %p202 = scmp.le.s32.totalorder 1, %s22
      %p203 = scmp.lt.s32.totalorder %s22, 3
      %p204 = pnand %p202, %p203
      %p205 = pneg %p204
      // Predicated region
      $region9: #{tpu_custom_call.1} parent=5 // pred_check
        _
      $region10: #{tpu_custom_call.1} parent=5 // pred_check_branch
        %207 = sbr.rel (%p204) target = $region12
      $region11: #{tpu_custom_call.1} parent=5 // pred_region
        %s208 = ssub.s32 %s22, 1
        // Predicated region
        $region13: #{tpu_custom_call.1} parent=11 // pred_check
          %p209 = pneg %p147
        $region14: #{tpu_custom_call.1} parent=11 // pred_check_branch
          %211 = sbr.rel (%p209) target = $region16
        $region15: #{tpu_custom_call.1} parent=11 // pred_region
          %213 = vsyncadd [#allocation6], 0
          %s214 = sshll.u32 %s4, 4
          %s215 = int_to_ptr.hbm [resolvable:$true] %s214
          %s216 = sshll.u32 [#allocation7], 4
          %s217 = int_to_ptr.vmem [resolvable:$true] %s216
          %222 = dma.hbm_to_vmem [thread:$0]  %s215, 2048, %s217, [#allocation6], 128, 128, 8
        $region16: #{tpu_custom_call.1} parent=11 // pred_fallthru
          _
        // Predicated region
        $region17: #{tpu_custom_call.1} parent=11 // pred_check
          %p223 = pneg %p168
        $region18: #{tpu_custom_call.1} parent=11 // pred_check_branch
          %225 = sbr.rel (%p223) target = $region20
        $region19: #{tpu_custom_call.1} parent=11 // pred_region
          %227 = vsyncadd [#allocation9], 0
          %s228 = sshll.u32 %s5, 4
          %s229 = int_to_ptr.hbm [resolvable:$true] %s228
          %s230 = sshll.u32 [#allocation8], 4
          %s231 = int_to_ptr.vmem [resolvable:$true] %s230
          %236 = dma.hbm_to_vmem [thread:$0]  %s229, 2048, %s231, [#allocation9], 128, 128, 8
        $region20: #{tpu_custom_call.1} parent=11 // pred_fallthru
          _
      $region12: #{tpu_custom_call.1} parent=5 // pred_fallthru
        _
      %p237 = scmp.lt.s32.totalorder %s22, 2
      // Predicated region
      $region21: #{tpu_custom_call.1} parent=5 // pred_check
        %p238 = pneg %p237
      $region22: #{tpu_custom_call.1} parent=5 // pred_check_branch
        %240 = sbr.rel (%p238) target = $region24
      $region23: #{tpu_custom_call.1} parent=5 // pred_region
        // Predicated region
        $region25: #{tpu_custom_call.1} parent=23 // pred_check
          %p241 = pneg %p42
        $region26: #{tpu_custom_call.1} parent=23 // pred_check_branch
          %243 = sbr.rel (%p241) target = $region28
        $region27: #{tpu_custom_call.1} parent=23 // pred_region
          %s244 = smul.u32 16, %s22
          %p245 = scmp.lt.s32.totalorder %s244, 31
          %s246 = scalar_select %p245, %s244, 31
          %s247 = smul.addr %s246, 8
          %s248 = scalar_lea.vmem %s0, %s247
          %s249 = smul.u32 16, %s22
        $region28: #{tpu_custom_call.1} parent=23 // pred_fallthru
          _
        // Predicated region
        $region29: #{tpu_custom_call.1} parent=23 // pred_check
          %p250 = pneg %p68
        $region30: #{tpu_custom_call.1} parent=23 // pred_check_branch
          %252 = sbr.rel (%p250) target = $region32
        $region31: #{tpu_custom_call.1} parent=23 // pred_region
          %s253 = sand.u32 %s58, 1
          %s254 = scalar_lea.sflag [#allocation3], %s253
          %s255 = sand.u32 %s58, 1
          %s256 = smul.addr %s255, 1024
          %s257 = scalar_lea.vmem [#allocation2], %s256
          %s258 = smul.u32 128, %s22
          %260 = vsyncadd %s254, 0
          %s261 = smul.addr %s258, 8
          %s262 = scalar_lea.hbm %s1, %s261
          %s263 = sshll.u32 %s262, 4
          %s264 = int_to_ptr.hbm [resolvable:$true] %s263
          %s265 = sshll.u32 %s257, 4
          %s266 = int_to_ptr.vmem [resolvable:$true] %s265
          %271 = dma.hbm_to_vmem [thread:$0]  %s264, 16384, %s266, %s254, 128, 128, 8
        $region32: #{tpu_custom_call.1} parent=23 // pred_fallthru
          _
        // Predicated region
        $region33: #{tpu_custom_call.1} parent=23 // pred_check
          %p272 = pneg %p94
        $region34: #{tpu_custom_call.1} parent=23 // pred_check_branch
          %274 = sbr.rel (%p272) target = $region36
        $region35: #{tpu_custom_call.1} parent=23 // pred_region
          %s275 = sand.u32 %s22, 1
          %s276 = scalar_lea.sflag [#allocation6], %s275
          %s277 = sand.u32 %s84, 1
          %s278 = smul.addr %s277, 1024
          %s279 = scalar_lea.vmem [#allocation5], %s278
          %s280 = smul.u32 128, %s22
          %282 = vsyncadd %s276, 0
          %s283 = smul.addr %s280, 8
          %s284 = scalar_lea.hbm %s2, %s283
          %s285 = sshll.u32 %s284, 4
          %s286 = int_to_ptr.hbm [resolvable:$true] %s285
          %s287 = sshll.u32 %s279, 4
          %s288 = int_to_ptr.vmem [resolvable:$true] %s287
          %293 = dma.hbm_to_vmem [thread:$0]  %s286, 16384, %s288, %s276, 128, 128, 8
        $region36: #{tpu_custom_call.1} parent=23 // pred_fallthru
          _
        // Predicated region
        $region37: #{tpu_custom_call.1} parent=23 // pred_check
          %p294 = pneg %p120
        $region38: #{tpu_custom_call.1} parent=23 // pred_check_branch
          %296 = sbr.rel (%p294) target = $region40
        $region39: #{tpu_custom_call.1} parent=23 // pred_region
          %s297 = smul.u32 16, %s22
          %p298 = scmp.lt.s32.totalorder %s297, 31
          %s299 = scalar_select %p298, %s297, 31
          %s300 = smul.addr %s299, 8
          %s301 = scalar_lea.vmem %s3, %s300
          %s302 = smul.u32 16, %s22
        $region40: #{tpu_custom_call.1} parent=23 // pred_fallthru
          _
      $region24: #{tpu_custom_call.1} parent=5 // pred_fallthru
        _
      %p303 = scmp.le.s32.totalorder 1, %s22
      %p304 = scmp.lt.s32.totalorder %s22, 3
      %p305 = pnand %p303, %p304
      %p306 = pneg %p305
      // Predicated region
      $region41: #{tpu_custom_call.1} parent=5 // pred_check
        _
      $region42: #{tpu_custom_call.1} parent=5 // pred_check_branch
        %308 = sbr.rel (%p305) target = $region44
      $region43: #{tpu_custom_call.1} parent=5 // pred_region
        %s309 = ssub.s32 %s22, 1
        %s310 = sand.u32 %s61, 1
        %s311 = scalar_lea.sflag [#allocation3], %s310
        %s312 = sand.u32 %s61, 1
        %s313 = smul.addr %s312, 1024
        %s314 = scalar_lea.vmem [#allocation2], %s313
        // Predicated region
        $region45: #{tpu_custom_call.1} parent=43 // pred_check
          %p315 = pneg %p74
        $region46: #{tpu_custom_call.1} parent=43 // pred_check_branch
          %317 = sbr.rel (%p315) target = $region48
        $region47: #{tpu_custom_call.1} parent=43 // pred_region
          %319 = dma.done %s311, 16384
        $region48: #{tpu_custom_call.1} parent=43 // pred_fallthru
          _
        %s320 = sand.u32 %s27, 1
        %s321 = scalar_lea.sflag [#allocation6], %s320
        %s322 = sand.u32 %s87, 1
        %s323 = smul.addr %s322, 1024
        %s324 = scalar_lea.vmem [#allocation5], %s323
        // Predicated region
        $region49: #{tpu_custom_call.1} parent=43 // pred_check
          %p325 = pneg %p100
        $region50: #{tpu_custom_call.1} parent=43 // pred_check_branch
          %327 = sbr.rel (%p325) target = $region52
        $region51: #{tpu_custom_call.1} parent=43 // pred_region
          %329 = dma.done %s321, 16384
        $region52: #{tpu_custom_call.1} parent=43 // pred_fallthru
          _
        // Predicated region
        $region53: #{tpu_custom_call.1} parent=43 // pred_check
          %p330 = pneg %p147
        $region54: #{tpu_custom_call.1} parent=43 // pred_check_branch
          %332 = sbr.rel (%p330) target = $region56
        $region55: #{tpu_custom_call.1} parent=43 // pred_region
          %334 = dma.done [#allocation6], 2048
        $region56: #{tpu_custom_call.1} parent=43 // pred_fallthru
          _
        // Predicated region
        $region57: #{tpu_custom_call.1} parent=43 // pred_check
          %p335 = pneg %p168
        $region58: #{tpu_custom_call.1} parent=43 // pred_check_branch
          %337 = sbr.rel (%p335) target = $region60
        $region59: #{tpu_custom_call.1} parent=43 // pred_region
          %339 = dma.done [#allocation9], 2048
        $region60: #{tpu_custom_call.1} parent=43 // pred_fallthru
          _
        %s340 = smul.u32 16, %s27
        %p341 = scmp.lt.s32.totalorder %s340, 31
        %s342 = scalar_select %p341, %s340, 31
        %s343 = smul.addr %s342, 8
        %s344 = scalar_lea.vmem %s0, %s343
        %p345 = pneg %p48
        %p346 = pneg %p45
        %s347 = sand.u32 %s61, 1
        %s348 = scalar_lea.sflag [#allocation3], %s347
        %s349 = sand.u32 %s61, 1
        %s350 = smul.addr %s349, 1024
        %s351 = scalar_lea.vmem [#allocation2], %s350
        %p352 = pneg %p74
        %p353 = pneg %p71
        %s354 = sand.u32 %s27, 1
        %s355 = scalar_lea.sflag [#allocation6], %s354
        %s356 = sand.u32 %s87, 1
        %s357 = smul.addr %s356, 1024
        %s358 = scalar_lea.vmem [#allocation5], %s357
        %p359 = pneg %p100
        %p360 = pneg %p97
        %s361 = smul.u32 16, %s27
        %p362 = scmp.lt.s32.totalorder %s361, 31
        %s363 = scalar_select %p362, %s361, 31
        %s364 = smul.addr %s363, 8
        %s365 = scalar_lea.vmem %s3, %s364
        %p366 = pneg %p126
        %p367 = pneg %p123
        %p368 = pneg %p147
        %p369 = pneg %p144
        %p370 = pneg %p168
        %p371 = pneg %p165
        %p372 = pneg %p194
        %p373 = pneg %p191
        %s374 = sand.u32 %s181, 1
        %s375 = scalar_lea.sflag [#allocation4], %s374
        %s376 = sand.u32 %s181, 1
        %s377 = smul.addr %s376, 128
        %s378 = scalar_lea.vmem [#allocation10], %s377
        %s379 = smul.u32 16, %s27
        %p380 = scmp.lt.s32.totalorder %s379, 31
        %s381 = scalar_select %p380, %s379, 31
        %s382 = smul.addr %s381, 8
        %s383 = scalar_lea.vmem %s0, %s382
        %s384 = smul.u32 16, %s27
        %s385 = smul.u32 128, %s27
        %s386 = smul.u32 128, %s27
        %s387 = smul.u32 16, %s27
        %p388 = scmp.lt.s32.totalorder %s387, 31
        %s389 = scalar_select %p388, %s387, 31
        %s390 = smul.addr %s389, 8
        %s391 = scalar_lea.vmem %s3, %s390
        %s392 = smul.u32 16, %s27
        %s393 = smul.u32 16, %s27
        %v394 = vld [vmem:[%s383] sm:$0xff]
        %v395 = vld [vmem:[%s383 + $0x8] sm:$0xff]
        %v396 = vld [vmem:[%s383 + $0x10] sm:$0xff]
        %v397 = vld [vmem:[%s383 + $0x18] sm:$0xff]
        %v398 = vld [vmem:[%s383 + $0x20] sm:$0xff]
        %v399 = vld [vmem:[%s383 + $0x28] sm:$0xff]
        %v400 = vld [vmem:[%s383 + $0x30] sm:$0xff]
        %v401 = vld [vmem:[%s383 + $0x38] sm:$0xff]
        %v402 = vld [vmem:[%s383 + $0x40] sm:$0xff]
        %v403 = vld [vmem:[%s383 + $0x48] sm:$0xff]
        %v404 = vld [vmem:[%s383 + $0x50] sm:$0xff]
        %v405 = vld [vmem:[%s383 + $0x58] sm:$0xff]
        %v406 = vld [vmem:[%s383 + $0x60] sm:$0xff]
        %v407 = vld [vmem:[%s383 + $0x68] sm:$0xff]
        %v408 = vld [vmem:[%s383 + $0x70] sm:$0xff]
        %v409 = vld [vmem:[%s383 + $0x78] sm:$0xff]
        %v410 = vld [vmem:[%s314] sm:$0xff]
        %v411 = vld [vmem:[%s314 + $0x8] sm:$0xff]
        %v412 = vld [vmem:[%s314 + $0x10] sm:$0xff]
        %v413 = vld [vmem:[%s314 + $0x18] sm:$0xff]
        %v414 = vld [vmem:[%s314 + $0x20] sm:$0xff]
        %v415 = vld [vmem:[%s314 + $0x28] sm:$0xff]
        %v416 = vld [vmem:[%s314 + $0x30] sm:$0xff]
        %v417 = vld [vmem:[%s314 + $0x38] sm:$0xff]
        %v418 = vld [vmem:[%s314 + $0x40] sm:$0xff]
        %v419 = vld [vmem:[%s314 + $0x48] sm:$0xff]
        %v420 = vld [vmem:[%s314 + $0x50] sm:$0xff]
        %v421 = vld [vmem:[%s314 + $0x58] sm:$0xff]
        %v422 = vld [vmem:[%s314 + $0x60] sm:$0xff]
        %v423 = vld [vmem:[%s314 + $0x68] sm:$0xff]
        %v424 = vld [vmem:[%s314 + $0x70] sm:$0xff]
        %v425 = vld [vmem:[%s314 + $0x78] sm:$0xff]
        %v426 = vld [vmem:[%s314 + $0x80] sm:$0xff]
        %v427 = vld [vmem:[%s314 + $0x88] sm:$0xff]
        %v428 = vld [vmem:[%s314 + $0x90] sm:$0xff]
        %v429 = vld [vmem:[%s314 + $0x98] sm:$0xff]
        %v430 = vld [vmem:[%s314 + $0xa0] sm:$0xff]
        %v431 = vld [vmem:[%s314 + $0xa8] sm:$0xff]
        %v432 = vld [vmem:[%s314 + $0xb0] sm:$0xff]
        %v433 = vld [vmem:[%s314 + $0xb8] sm:$0xff]
        %v434 = vld [vmem:[%s314 + $0xc0] sm:$0xff]
        %v435 = vld [vmem:[%s314 + $0xc8] sm:$0xff]
        %v436 = vld [vmem:[%s314 + $0xd0] sm:$0xff]
        %v437 = vld [vmem:[%s314 + $0xd8] sm:$0xff]
        %v438 = vld [vmem:[%s314 + $0xe0] sm:$0xff]
        %v439 = vld [vmem:[%s314 + $0xe8] sm:$0xff]
        %v440 = vld [vmem:[%s314 + $0xf0] sm:$0xff]
        %v441 = vld [vmem:[%s314 + $0xf8] sm:$0xff]
        %v442 = vld [vmem:[%s314 + $0x100] sm:$0xff]
        %v443 = vld [vmem:[%s314 + $0x108] sm:$0xff]
        %v444 = vld [vmem:[%s314 + $0x110] sm:$0xff]
        %v445 = vld [vmem:[%s314 + $0x118] sm:$0xff]
        %v446 = vld [vmem:[%s314 + $0x120] sm:$0xff]
        %v447 = vld [vmem:[%s314 + $0x128] sm:$0xff]
        %v448 = vld [vmem:[%s314 + $0x130] sm:$0xff]
        %v449 = vld [vmem:[%s314 + $0x138] sm:$0xff]
        %v450 = vld [vmem:[%s314 + $0x140] sm:$0xff]
        %v451 = vld [vmem:[%s314 + $0x148] sm:$0xff]
        %v452 = vld [vmem:[%s314 + $0x150] sm:$0xff]
        %v453 = vld [vmem:[%s314 + $0x158] sm:$0xff]
        %v454 = vld [vmem:[%s314 + $0x160] sm:$0xff]
        %v455 = vld [vmem:[%s314 + $0x168] sm:$0xff]
        %v456 = vld [vmem:[%s314 + $0x170] sm:$0xff]
        %v457 = vld [vmem:[%s314 + $0x178] sm:$0xff]
        %v458 = vld [vmem:[%s314 + $0x180] sm:$0xff]
        %v459 = vld [vmem:[%s314 + $0x188] sm:$0xff]
        %v460 = vld [vmem:[%s314 + $0x190] sm:$0xff]
        %v461 = vld [vmem:[%s314 + $0x198] sm:$0xff]
        %v462 = vld [vmem:[%s314 + $0x1a0] sm:$0xff]
        %v463 = vld [vmem:[%s314 + $0x1a8] sm:$0xff]
        %v464 = vld [vmem:[%s314 + $0x1b0] sm:$0xff]
        %v465 = vld [vmem:[%s314 + $0x1b8] sm:$0xff]
        %v466 = vld [vmem:[%s314 + $0x1c0] sm:$0xff]
        %v467 = vld [vmem:[%s314 + $0x1c8] sm:$0xff]
        %v468 = vld [vmem:[%s314 + $0x1d0] sm:$0xff]
        %v469 = vld [vmem:[%s314 + $0x1d8] sm:$0xff]
        %v470 = vld [vmem:[%s314 + $0x1e0] sm:$0xff]
        %v471 = vld [vmem:[%s314 + $0x1e8] sm:$0xff]
        %v472 = vld [vmem:[%s314 + $0x1f0] sm:$0xff]
        %v473 = vld [vmem:[%s314 + $0x1f8] sm:$0xff]
        %v474 = vld [vmem:[%s314 + $0x200] sm:$0xff]
        %v475 = vld [vmem:[%s314 + $0x208] sm:$0xff]
        %v476 = vld [vmem:[%s314 + $0x210] sm:$0xff]
        %v477 = vld [vmem:[%s314 + $0x218] sm:$0xff]
        %v478 = vld [vmem:[%s314 + $0x220] sm:$0xff]
        %v479 = vld [vmem:[%s314 + $0x228] sm:$0xff]
        %v480 = vld [vmem:[%s314 + $0x230] sm:$0xff]
        %v481 = vld [vmem:[%s314 + $0x238] sm:$0xff]
        %v482 = vld [vmem:[%s314 + $0x240] sm:$0xff]
        %v483 = vld [vmem:[%s314 + $0x248] sm:$0xff]
        %v484 = vld [vmem:[%s314 + $0x250] sm:$0xff]
        %v485 = vld [vmem:[%s314 + $0x258] sm:$0xff]
        %v486 = vld [vmem:[%s314 + $0x260] sm:$0xff]
        %v487 = vld [vmem:[%s314 + $0x268] sm:$0xff]
        %v488 = vld [vmem:[%s314 + $0x270] sm:$0xff]
        %v489 = vld [vmem:[%s314 + $0x278] sm:$0xff]
        %v490 = vld [vmem:[%s314 + $0x280] sm:$0xff]
        %v491 = vld [vmem:[%s314 + $0x288] sm:$0xff]
        %v492 = vld [vmem:[%s314 + $0x290] sm:$0xff]
        %v493 = vld [vmem:[%s314 + $0x298] sm:$0xff]
        %v494 = vld [vmem:[%s314 + $0x2a0] sm:$0xff]
        %v495 = vld [vmem:[%s314 + $0x2a8] sm:$0xff]
        %v496 = vld [vmem:[%s314 + $0x2b0] sm:$0xff]
        %v497 = vld [vmem:[%s314 + $0x2b8] sm:$0xff]
        %v498 = vld [vmem:[%s314 + $0x2c0] sm:$0xff]
        %v499 = vld [vmem:[%s314 + $0x2c8] sm:$0xff]
        %v500 = vld [vmem:[%s314 + $0x2d0] sm:$0xff]
        %v501 = vld [vmem:[%s314 + $0x2d8] sm:$0xff]
        %v502 = vld [vmem:[%s314 + $0x2e0] sm:$0xff]
        %v503 = vld [vmem:[%s314 + $0x2e8] sm:$0xff]
        %v504 = vld [vmem:[%s314 + $0x2f0] sm:$0xff]
        %v505 = vld [vmem:[%s314 + $0x2f8] sm:$0xff]
        %v506 = vld [vmem:[%s314 + $0x300] sm:$0xff]
        %v507 = vld [vmem:[%s314 + $0x308] sm:$0xff]
        %v508 = vld [vmem:[%s314 + $0x310] sm:$0xff]
        %v509 = vld [vmem:[%s314 + $0x318] sm:$0xff]
        %v510 = vld [vmem:[%s314 + $0x320] sm:$0xff]
        %v511 = vld [vmem:[%s314 + $0x328] sm:$0xff]
        %v512 = vld [vmem:[%s314 + $0x330] sm:$0xff]
        %v513 = vld [vmem:[%s314 + $0x338] sm:$0xff]
        %v514 = vld [vmem:[%s314 + $0x340] sm:$0xff]
        %v515 = vld [vmem:[%s314 + $0x348] sm:$0xff]
        %v516 = vld [vmem:[%s314 + $0x350] sm:$0xff]
        %v517 = vld [vmem:[%s314 + $0x358] sm:$0xff]
        %v518 = vld [vmem:[%s314 + $0x360] sm:$0xff]
        %v519 = vld [vmem:[%s314 + $0x368] sm:$0xff]
        %v520 = vld [vmem:[%s314 + $0x370] sm:$0xff]
        %v521 = vld [vmem:[%s314 + $0x378] sm:$0xff]
        %v522 = vld [vmem:[%s314 + $0x380] sm:$0xff]
        %v523 = vld [vmem:[%s314 + $0x388] sm:$0xff]
        %v524 = vld [vmem:[%s314 + $0x390] sm:$0xff]
        %v525 = vld [vmem:[%s314 + $0x398] sm:$0xff]
        %v526 = vld [vmem:[%s314 + $0x3a0] sm:$0xff]
        %v527 = vld [vmem:[%s314 + $0x3a8] sm:$0xff]
        %v528 = vld [vmem:[%s314 + $0x3b0] sm:$0xff]
        %v529 = vld [vmem:[%s314 + $0x3b8] sm:$0xff]
        %v530 = vld [vmem:[%s314 + $0x3c0] sm:$0xff]
        %v531 = vld [vmem:[%s314 + $0x3c8] sm:$0xff]
        %v532 = vld [vmem:[%s314 + $0x3d0] sm:$0xff]
        %v533 = vld [vmem:[%s314 + $0x3d8] sm:$0xff]
        %v534 = vld [vmem:[%s314 + $0x3e0] sm:$0xff]
        %v535 = vld [vmem:[%s314 + $0x3e8] sm:$0xff]
        %v536 = vld [vmem:[%s314 + $0x3f0] sm:$0xff]
        %v537 = vld [vmem:[%s314 + $0x3f8] sm:$0xff]
        %v538 = vld [vmem:[%s324] sm:$0xff]
        %v539 = vld [vmem:[%s324 + $0x8] sm:$0xff]
        %v540 = vld [vmem:[%s324 + $0x10] sm:$0xff]
        %v541 = vld [vmem:[%s324 + $0x18] sm:$0xff]
        %v542 = vld [vmem:[%s324 + $0x20] sm:$0xff]
        %v543 = vld [vmem:[%s324 + $0x28] sm:$0xff]
        %v544 = vld [vmem:[%s324 + $0x30] sm:$0xff]
        %v545 = vld [vmem:[%s324 + $0x38] sm:$0xff]
        %v546 = vld [vmem:[%s324 + $0x40] sm:$0xff]
        %v547 = vld [vmem:[%s324 + $0x48] sm:$0xff]
        %v548 = vld [vmem:[%s324 + $0x50] sm:$0xff]
        %v549 = vld [vmem:[%s324 + $0x58] sm:$0xff]
        %v550 = vld [vmem:[%s324 + $0x60] sm:$0xff]
        %v551 = vld [vmem:[%s324 + $0x68] sm:$0xff]
        %v552 = vld [vmem:[%s324 + $0x70] sm:$0xff]
        %v553 = vld [vmem:[%s324 + $0x78] sm:$0xff]
        %v554 = vld [vmem:[%s324 + $0x80] sm:$0xff]
        %v555 = vld [vmem:[%s324 + $0x88] sm:$0xff]
        %v556 = vld [vmem:[%s324 + $0x90] sm:$0xff]
        %v557 = vld [vmem:[%s324 + $0x98] sm:$0xff]
        %v558 = vld [vmem:[%s324 + $0xa0] sm:$0xff]
        %v559 = vld [vmem:[%s324 + $0xa8] sm:$0xff]
        %v560 = vld [vmem:[%s324 + $0xb0] sm:$0xff]
        %v561 = vld [vmem:[%s324 + $0xb8] sm:$0xff]
        %v562 = vld [vmem:[%s324 + $0xc0] sm:$0xff]
        %v563 = vld [vmem:[%s324 + $0xc8] sm:$0xff]
        %v564 = vld [vmem:[%s324 + $0xd0] sm:$0xff]
        %v565 = vld [vmem:[%s324 + $0xd8] sm:$0xff]
        %v566 = vld [vmem:[%s324 + $0xe0] sm:$0xff]
        %v567 = vld [vmem:[%s324 + $0xe8] sm:$0xff]
        %v568 = vld [vmem:[%s324 + $0xf0] sm:$0xff]
        %v569 = vld [vmem:[%s324 + $0xf8] sm:$0xff]
        %v570 = vld [vmem:[%s324 + $0x100] sm:$0xff]
        %v571 = vld [vmem:[%s324 + $0x108] sm:$0xff]
        %v572 = vld [vmem:[%s324 + $0x110] sm:$0xff]
        %v573 = vld [vmem:[%s324 + $0x118] sm:$0xff]
        %v574 = vld [vmem:[%s324 + $0x120] sm:$0xff]
        %v575 = vld [vmem:[%s324 + $0x128] sm:$0xff]
        %v576 = vld [vmem:[%s324 + $0x130] sm:$0xff]
        %v577 = vld [vmem:[%s324 + $0x138] sm:$0xff]
        %v578 = vld [vmem:[%s324 + $0x140] sm:$0xff]
        %v579 = vld [vmem:[%s324 + $0x148] sm:$0xff]
        %v580 = vld [vmem:[%s324 + $0x150] sm:$0xff]
        %v581 = vld [vmem:[%s324 + $0x158] sm:$0xff]
        %v582 = vld [vmem:[%s324 + $0x160] sm:$0xff]
        %v583 = vld [vmem:[%s324 + $0x168] sm:$0xff]
        %v584 = vld [vmem:[%s324 + $0x170] sm:$0xff]
        %v585 = vld [vmem:[%s324 + $0x178] sm:$0xff]
        %v586 = vld [vmem:[%s324 + $0x180] sm:$0xff]
        %v587 = vld [vmem:[%s324 + $0x188] sm:$0xff]
        %v588 = vld [vmem:[%s324 + $0x190] sm:$0xff]
        %v589 = vld [vmem:[%s324 + $0x198] sm:$0xff]
        %v590 = vld [vmem:[%s324 + $0x1a0] sm:$0xff]
        %v591 = vld [vmem:[%s324 + $0x1a8] sm:$0xff]
        %v592 = vld [vmem:[%s324 + $0x1b0] sm:$0xff]
        %v593 = vld [vmem:[%s324 + $0x1b8] sm:$0xff]
        %v594 = vld [vmem:[%s324 + $0x1c0] sm:$0xff]
        %v595 = vld [vmem:[%s324 + $0x1c8] sm:$0xff]
        %v596 = vld [vmem:[%s324 + $0x1d0] sm:$0xff]
        %v597 = vld [vmem:[%s324 + $0x1d8] sm:$0xff]
        %v598 = vld [vmem:[%s324 + $0x1e0] sm:$0xff]
        %v599 = vld [vmem:[%s324 + $0x1e8] sm:$0xff]
        %v600 = vld [vmem:[%s324 + $0x1f0] sm:$0xff]
        %v601 = vld [vmem:[%s324 + $0x1f8] sm:$0xff]
        %v602 = vld [vmem:[%s324 + $0x200] sm:$0xff]
        %v603 = vld [vmem:[%s324 + $0x208] sm:$0xff]
        %v604 = vld [vmem:[%s324 + $0x210] sm:$0xff]
        %v605 = vld [vmem:[%s324 + $0x218] sm:$0xff]
        %v606 = vld [vmem:[%s324 + $0x220] sm:$0xff]
        %v607 = vld [vmem:[%s324 + $0x228] sm:$0xff]
        %v608 = vld [vmem:[%s324 + $0x230] sm:$0xff]
        %v609 = vld [vmem:[%s324 + $0x238] sm:$0xff]
        %v610 = vld [vmem:[%s324 + $0x240] sm:$0xff]
        %v611 = vld [vmem:[%s324 + $0x248] sm:$0xff]
        %v612 = vld [vmem:[%s324 + $0x250] sm:$0xff]
        %v613 = vld [vmem:[%s324 + $0x258] sm:$0xff]
        %v614 = vld [vmem:[%s324 + $0x260] sm:$0xff]
        %v615 = vld [vmem:[%s324 + $0x268] sm:$0xff]
        %v616 = vld [vmem:[%s324 + $0x270] sm:$0xff]
        %v617 = vld [vmem:[%s324 + $0x278] sm:$0xff]
        %v618 = vld [vmem:[%s324 + $0x280] sm:$0xff]
        %v619 = vld [vmem:[%s324 + $0x288] sm:$0xff]
        %v620 = vld [vmem:[%s324 + $0x290] sm:$0xff]
        %v621 = vld [vmem:[%s324 + $0x298] sm:$0xff]
        %v622 = vld [vmem:[%s324 + $0x2a0] sm:$0xff]
        %v623 = vld [vmem:[%s324 + $0x2a8] sm:$0xff]
        %v624 = vld [vmem:[%s324 + $0x2b0] sm:$0xff]
        %v625 = vld [vmem:[%s324 + $0x2b8] sm:$0xff]
        %v626 = vld [vmem:[%s324 + $0x2c0] sm:$0xff]
        %v627 = vld [vmem:[%s324 + $0x2c8] sm:$0xff]
        %v628 = vld [vmem:[%s324 + $0x2d0] sm:$0xff]
        %v629 = vld [vmem:[%s324 + $0x2d8] sm:$0xff]
        %v630 = vld [vmem:[%s324 + $0x2e0] sm:$0xff]
        %v631 = vld [vmem:[%s324 + $0x2e8] sm:$0xff]
        %v632 = vld [vmem:[%s324 + $0x2f0] sm:$0xff]
        %v633 = vld [vmem:[%s324 + $0x2f8] sm:$0xff]
        %v634 = vld [vmem:[%s324 + $0x300] sm:$0xff]
        %v635 = vld [vmem:[%s324 + $0x308] sm:$0xff]
        %v636 = vld [vmem:[%s324 + $0x310] sm:$0xff]
        %v637 = vld [vmem:[%s324 + $0x318] sm:$0xff]
        %v638 = vld [vmem:[%s324 + $0x320] sm:$0xff]
        %v639 = vld [vmem:[%s324 + $0x328] sm:$0xff]
        %v640 = vld [vmem:[%s324 + $0x330] sm:$0xff]
        %v641 = vld [vmem:[%s324 + $0x338] sm:$0xff]
        %v642 = vld [vmem:[%s324 + $0x340] sm:$0xff]
        %v643 = vld [vmem:[%s324 + $0x348] sm:$0xff]
        %v644 = vld [vmem:[%s324 + $0x350] sm:$0xff]
        %v645 = vld [vmem:[%s324 + $0x358] sm:$0xff]
        %v646 = vld [vmem:[%s324 + $0x360] sm:$0xff]
        %v647 = vld [vmem:[%s324 + $0x368] sm:$0xff]
        %v648 = vld [vmem:[%s324 + $0x370] sm:$0xff]
        %v649 = vld [vmem:[%s324 + $0x378] sm:$0xff]
        %v650 = vld [vmem:[%s324 + $0x380] sm:$0xff]
        %v651 = vld [vmem:[%s324 + $0x388] sm:$0xff]
        %v652 = vld [vmem:[%s324 + $0x390] sm:$0xff]
        %v653 = vld [vmem:[%s324 + $0x398] sm:$0xff]
        %v654 = vld [vmem:[%s324 + $0x3a0] sm:$0xff]
        %v655 = vld [vmem:[%s324 + $0x3a8] sm:$0xff]
        %v656 = vld [vmem:[%s324 + $0x3b0] sm:$0xff]
        %v657 = vld [vmem:[%s324 + $0x3b8] sm:$0xff]
        %v658 = vld [vmem:[%s324 + $0x3c0] sm:$0xff]
        %v659 = vld [vmem:[%s324 + $0x3c8] sm:$0xff]
        %v660 = vld [vmem:[%s324 + $0x3d0] sm:$0xff]
        %v661 = vld [vmem:[%s324 + $0x3d8] sm:$0xff]
        %v662 = vld [vmem:[%s324 + $0x3e0] sm:$0xff]
        %v663 = vld [vmem:[%s324 + $0x3e8] sm:$0xff]
        %v664 = vld [vmem:[%s324 + $0x3f0] sm:$0xff]
        %v665 = vld [vmem:[%s324 + $0x3f8] sm:$0xff]
        %v666 = vld [vmem:[%s391] sm:$0xff]
        %v667 = vld [vmem:[%s391 + $0x8] sm:$0xff]
        %v668 = vld [vmem:[%s391 + $0x10] sm:$0xff]
        %v669 = vld [vmem:[%s391 + $0x18] sm:$0xff]
        %v670 = vld [vmem:[%s391 + $0x20] sm:$0xff]
        %v671 = vld [vmem:[%s391 + $0x28] sm:$0xff]
        %v672 = vld [vmem:[%s391 + $0x30] sm:$0xff]
        %v673 = vld [vmem:[%s391 + $0x38] sm:$0xff]
        %v674 = vld [vmem:[%s391 + $0x40] sm:$0xff]
        %v675 = vld [vmem:[%s391 + $0x48] sm:$0xff]
        %v676 = vld [vmem:[%s391 + $0x50] sm:$0xff]
        %v677 = vld [vmem:[%s391 + $0x58] sm:$0xff]
        %v678 = vld [vmem:[%s391 + $0x60] sm:$0xff]
        %v679 = vld [vmem:[%s391 + $0x68] sm:$0xff]
        %v680 = vld [vmem:[%s391 + $0x70] sm:$0xff]
        %v681 = vld [vmem:[%s391 + $0x78] sm:$0xff]
        %v682 = vld [vmem:[#allocation7] sm:$0xff]
        %v683 = vld [vmem:[#allocation7 + $0x8] sm:$0xff]
        %v684 = vld [vmem:[#allocation7 + $0x10] sm:$0xff]
        %v685 = vld [vmem:[#allocation7 + $0x18] sm:$0xff]
        %v686 = vld [vmem:[#allocation7 + $0x20] sm:$0xff]
        %v687 = vld [vmem:[#allocation7 + $0x28] sm:$0xff]
        %v688 = vld [vmem:[#allocation7 + $0x30] sm:$0xff]
        %v689 = vld [vmem:[#allocation7 + $0x38] sm:$0xff]
        %v690 = vld [vmem:[#allocation7 + $0x40] sm:$0xff]
        %v691 = vld [vmem:[#allocation7 + $0x48] sm:$0xff]
        %v692 = vld [vmem:[#allocation7 + $0x50] sm:$0xff]
        %v693 = vld [vmem:[#allocation7 + $0x58] sm:$0xff]
        %v694 = vld [vmem:[#allocation7 + $0x60] sm:$0xff]
        %v695 = vld [vmem:[#allocation7 + $0x68] sm:$0xff]
        %v696 = vld [vmem:[#allocation7 + $0x70] sm:$0xff]
        %v697 = vld [vmem:[#allocation7 + $0x78] sm:$0xff]
        %698 = vmatpush.msra.mxu0 %v697
        %699 = vmatpush.msra.mxu0 %v696
        %700 = vmatpush.msra.mxu0 %v695
        %701 = vmatpush.msra.mxu0 %v694
        %702 = vmatpush.msra.mxu0 %v693
        %703 = vmatpush.msra.mxu0 %v692
        %704 = vmatpush.msra.mxu0 %v691
        %705 = vmatpush.msra.mxu0 %v690
        %706 = vmatpush.msra.mxu0 %v689
        %707 = vmatpush.msra.mxu0 %v688
        %708 = vmatpush.msra.mxu0 %v687
        %709 = vmatpush.msra.mxu0 %v686
        %710 = vmatpush.msra.mxu0 %v685
        %711 = vmatpush.msra.mxu0 %v684
        %712 = vmatpush.msra.mxu0 %v683
        %713 = vmatpush.msra.mxu0 %v682
        %714 = vmatmul.f32.gmra.mxu0 %v394
        %v715 = vpop.f32.mrf.mxu0
        %v716 = vadd.f32 0.0, %v715
        %717 = vmatmul.f32.gmra.mxu0 %v395
        %v718 = vpop.f32.mrf.mxu0
        %v719 = vadd.f32 0.0, %v718
        %720 = vmatmul.f32.gmra.mxu0 %v396
        %v721 = vpop.f32.mrf.mxu0
        %v722 = vadd.f32 0.0, %v721
        %723 = vmatmul.f32.gmra.mxu0 %v397
        %v724 = vpop.f32.mrf.mxu0
        %v725 = vadd.f32 0.0, %v724
        %726 = vmatmul.f32.gmra.mxu0 %v398
        %v727 = vpop.f32.mrf.mxu0
        %v728 = vadd.f32 0.0, %v727
        %729 = vmatmul.f32.gmra.mxu0 %v399
        %v730 = vpop.f32.mrf.mxu0
        %v731 = vadd.f32 0.0, %v730
        %732 = vmatmul.f32.gmra.mxu0 %v400
        %v733 = vpop.f32.mrf.mxu0
        %v734 = vadd.f32 0.0, %v733
        %735 = vmatmul.f32.gmra.mxu0 %v401
        %v736 = vpop.f32.mrf.mxu0
        %v737 = vadd.f32 0.0, %v736
        %738 = vmatmul.f32.gmra.mxu0 %v402
        %v739 = vpop.f32.mrf.mxu0
        %v740 = vadd.f32 0.0, %v739
        %741 = vmatmul.f32.gmra.mxu0 %v403
        %v742 = vpop.f32.mrf.mxu0
        %v743 = vadd.f32 0.0, %v742
        %744 = vmatmul.f32.gmra.mxu0 %v404
        %v745 = vpop.f32.mrf.mxu0
        %v746 = vadd.f32 0.0, %v745
        %747 = vmatmul.f32.gmra.mxu0 %v405
        %v748 = vpop.f32.mrf.mxu0
        %v749 = vadd.f32 0.0, %v748
        %750 = vmatmul.f32.gmra.mxu0 %v406
        %v751 = vpop.f32.mrf.mxu0
        %v752 = vadd.f32 0.0, %v751
        %753 = vmatmul.f32.gmra.mxu0 %v407
        %v754 = vpop.f32.mrf.mxu0
        %v755 = vadd.f32 0.0, %v754
        %756 = vmatmul.f32.gmra.mxu0 %v408
        %v757 = vpop.f32.mrf.mxu0
        %v758 = vadd.f32 0.0, %v757
        %759 = vmatmul.f32.gmra.mxu0 %v409
        %v760 = vpop.f32.mrf.mxu0
        %v761 = vadd.f32 0.0, %v760
        %762 = vdwg.mxu0
        %v763 = vld [vmem:[#allocation8] sm:$0xff]
        %v764 = vld [vmem:[#allocation8 + $0x8] sm:$0xff]
        %v765 = vld [vmem:[#allocation8 + $0x10] sm:$0xff]
        %v766 = vld [vmem:[#allocation8 + $0x18] sm:$0xff]
        %v767 = vld [vmem:[#allocation8 + $0x20] sm:$0xff]
        %v768 = vld [vmem:[#allocation8 + $0x28] sm:$0xff]
        %v769 = vld [vmem:[#allocation8 + $0x30] sm:$0xff]
        %v770 = vld [vmem:[#allocation8 + $0x38] sm:$0xff]
        %v771 = vld [vmem:[#allocation8 + $0x40] sm:$0xff]
        %v772 = vld [vmem:[#allocation8 + $0x48] sm:$0xff]
        %v773 = vld [vmem:[#allocation8 + $0x50] sm:$0xff]
        %v774 = vld [vmem:[#allocation8 + $0x58] sm:$0xff]
        %v775 = vld [vmem:[#allocation8 + $0x60] sm:$0xff]
        %v776 = vld [vmem:[#allocation8 + $0x68] sm:$0xff]
        %v777 = vld [vmem:[#allocation8 + $0x70] sm:$0xff]
        %v778 = vld [vmem:[#allocation8 + $0x78] sm:$0xff]
        %779 = vmatpush.msra.mxu0 %v778
        %780 = vmatpush.msra.mxu0 %v777
        %781 = vmatpush.msra.mxu0 %v776
        %782 = vmatpush.msra.mxu0 %v775
        %783 = vmatpush.msra.mxu0 %v774
        %784 = vmatpush.msra.mxu0 %v773
        %785 = vmatpush.msra.mxu0 %v772
        %786 = vmatpush.msra.mxu0 %v771
        %787 = vmatpush.msra.mxu0 %v770
        %788 = vmatpush.msra.mxu0 %v769
        %789 = vmatpush.msra.mxu0 %v768
        %790 = vmatpush.msra.mxu0 %v767
        %791 = vmatpush.msra.mxu0 %v766
        %792 = vmatpush.msra.mxu0 %v765
        %793 = vmatpush.msra.mxu0 %v764
        %794 = vmatpush.msra.mxu0 %v763
        %795 = vmatmul.f32.gmra.mxu0 %v410
        %v796 = vpop.f32.mrf.mxu0
        %v797 = vadd.f32 0.0, %v796
        %798 = vmatmul.f32.gmra.mxu0 %v411
        %v799 = vpop.f32.mrf.mxu0
        %v800 = vadd.f32 0.0, %v799
        %801 = vmatmul.f32.gmra.mxu0 %v412
        %v802 = vpop.f32.mrf.mxu0
        %v803 = vadd.f32 0.0, %v802
        %804 = vmatmul.f32.gmra.mxu0 %v413
        %v805 = vpop.f32.mrf.mxu0
        %v806 = vadd.f32 0.0, %v805
        %807 = vmatmul.f32.gmra.mxu0 %v414
        %v808 = vpop.f32.mrf.mxu0
        %v809 = vadd.f32 0.0, %v808
        %810 = vmatmul.f32.gmra.mxu0 %v415
        %v811 = vpop.f32.mrf.mxu0
        %v812 = vadd.f32 0.0, %v811
        %813 = vmatmul.f32.gmra.mxu0 %v416
        %v814 = vpop.f32.mrf.mxu0
        %v815 = vadd.f32 0.0, %v814
        %816 = vmatmul.f32.gmra.mxu0 %v417
        %v817 = vpop.f32.mrf.mxu0
        %v818 = vadd.f32 0.0, %v817
        %819 = vmatmul.f32.gmra.mxu0 %v418
        %v820 = vpop.f32.mrf.mxu0
        %v821 = vadd.f32 0.0, %v820
        %822 = vmatmul.f32.gmra.mxu0 %v419
        %v823 = vpop.f32.mrf.mxu0
        %v824 = vadd.f32 0.0, %v823
        %825 = vmatmul.f32.gmra.mxu0 %v420
        %v826 = vpop.f32.mrf.mxu0
        %v827 = vadd.f32 0.0, %v826
        %828 = vmatmul.f32.gmra.mxu0 %v421
        %v829 = vpop.f32.mrf.mxu0
        %v830 = vadd.f32 0.0, %v829
        %831 = vmatmul.f32.gmra.mxu0 %v422
        %v832 = vpop.f32.mrf.mxu0
        %v833 = vadd.f32 0.0, %v832
        %834 = vmatmul.f32.gmra.mxu0 %v423
        %v835 = vpop.f32.mrf.mxu0
        %v836 = vadd.f32 0.0, %v835
        %837 = vmatmul.f32.gmra.mxu0 %v424
        %v838 = vpop.f32.mrf.mxu0
        %v839 = vadd.f32 0.0, %v838
        %840 = vmatmul.f32.gmra.mxu0 %v425
        %v841 = vpop.f32.mrf.mxu0
        %v842 = vadd.f32 0.0, %v841
        %843 = vmatmul.f32.gmra.mxu0 %v426
        %v844 = vpop.f32.mrf.mxu0
        %v845 = vadd.f32 0.0, %v844
        %846 = vmatmul.f32.gmra.mxu0 %v427
        %v847 = vpop.f32.mrf.mxu0
        %v848 = vadd.f32 0.0, %v847
        %849 = vmatmul.f32.gmra.mxu0 %v428
        %v850 = vpop.f32.mrf.mxu0
        %v851 = vadd.f32 0.0, %v850
        %852 = vmatmul.f32.gmra.mxu0 %v429
        %v853 = vpop.f32.mrf.mxu0
        %v854 = vadd.f32 0.0, %v853
        %855 = vmatmul.f32.gmra.mxu0 %v430
        %v856 = vpop.f32.mrf.mxu0
        %v857 = vadd.f32 0.0, %v856
        %858 = vmatmul.f32.gmra.mxu0 %v431
        %v859 = vpop.f32.mrf.mxu0
        %v860 = vadd.f32 0.0, %v859
        %861 = vmatmul.f32.gmra.mxu0 %v432
        %v862 = vpop.f32.mrf.mxu0
        %v863 = vadd.f32 0.0, %v862
        %864 = vmatmul.f32.gmra.mxu0 %v433
        %v865 = vpop.f32.mrf.mxu0
        %v866 = vadd.f32 0.0, %v865
        %867 = vmatmul.f32.gmra.mxu0 %v434
        %v868 = vpop.f32.mrf.mxu0
        %v869 = vadd.f32 0.0, %v868
        %870 = vmatmul.f32.gmra.mxu0 %v435
        %v871 = vpop.f32.mrf.mxu0
        %v872 = vadd.f32 0.0, %v871
        %873 = vmatmul.f32.gmra.mxu0 %v436
        %v874 = vpop.f32.mrf.mxu0
        %v875 = vadd.f32 0.0, %v874
        %876 = vmatmul.f32.gmra.mxu0 %v437
        %v877 = vpop.f32.mrf.mxu0
        %v878 = vadd.f32 0.0, %v877
        %879 = vmatmul.f32.gmra.mxu0 %v438
        %v880 = vpop.f32.mrf.mxu0
        %v881 = vadd.f32 0.0, %v880
        %882 = vmatmul.f32.gmra.mxu0 %v439
        %v883 = vpop.f32.mrf.mxu0
        %v884 = vadd.f32 0.0, %v883
        %885 = vmatmul.f32.gmra.mxu0 %v440
        %v886 = vpop.f32.mrf.mxu0
        %v887 = vadd.f32 0.0, %v886
        %888 = vmatmul.f32.gmra.mxu0 %v441
        %v889 = vpop.f32.mrf.mxu0
        %v890 = vadd.f32 0.0, %v889
        %891 = vmatmul.f32.gmra.mxu0 %v442
        %v892 = vpop.f32.mrf.mxu0
        %v893 = vadd.f32 0.0, %v892
        %894 = vmatmul.f32.gmra.mxu0 %v443
        %v895 = vpop.f32.mrf.mxu0
        %v896 = vadd.f32 0.0, %v895
        %897 = vmatmul.f32.gmra.mxu0 %v444
        %v898 = vpop.f32.mrf.mxu0
        %v899 = vadd.f32 0.0, %v898
        %900 = vmatmul.f32.gmra.mxu0 %v445
        %v901 = vpop.f32.mrf.mxu0
        %v902 = vadd.f32 0.0, %v901
        %903 = vmatmul.f32.gmra.mxu0 %v446
        %v904 = vpop.f32.mrf.mxu0
        %v905 = vadd.f32 0.0, %v904
        %906 = vmatmul.f32.gmra.mxu0 %v447
        %v907 = vpop.f32.mrf.mxu0
        %v908 = vadd.f32 0.0, %v907
        %909 = vmatmul.f32.gmra.mxu0 %v448
        %v910 = vpop.f32.mrf.mxu0
        %v911 = vadd.f32 0.0, %v910
        %912 = vmatmul.f32.gmra.mxu0 %v449
        %v913 = vpop.f32.mrf.mxu0
        %v914 = vadd.f32 0.0, %v913
        %915 = vmatmul.f32.gmra.mxu0 %v450
        %v916 = vpop.f32.mrf.mxu0
        %v917 = vadd.f32 0.0, %v916
        %918 = vmatmul.f32.gmra.mxu0 %v451
        %v919 = vpop.f32.mrf.mxu0
        %v920 = vadd.f32 0.0, %v919
        %921 = vmatmul.f32.gmra.mxu0 %v452
        %v922 = vpop.f32.mrf.mxu0
        %v923 = vadd.f32 0.0, %v922
        %924 = vmatmul.f32.gmra.mxu0 %v453
        %v925 = vpop.f32.mrf.mxu0
        %v926 = vadd.f32 0.0, %v925
        %927 = vmatmul.f32.gmra.mxu0 %v454
        %v928 = vpop.f32.mrf.mxu0
        %v929 = vadd.f32 0.0, %v928
        %930 = vmatmul.f32.gmra.mxu0 %v455
        %v931 = vpop.f32.mrf.mxu0
        %v932 = vadd.f32 0.0, %v931
        %933 = vmatmul.f32.gmra.mxu0 %v456
        %v934 = vpop.f32.mrf.mxu0
        %v935 = vadd.f32 0.0, %v934
        %936 = vmatmul.f32.gmra.mxu0 %v457
        %v937 = vpop.f32.mrf.mxu0
        %v938 = vadd.f32 0.0, %v937
        %939 = vmatmul.f32.gmra.mxu0 %v458
        %v940 = vpop.f32.mrf.mxu0
        %v941 = vadd.f32 0.0, %v940
        %942 = vmatmul.f32.gmra.mxu0 %v459
        %v943 = vpop.f32.mrf.mxu0
        %v944 = vadd.f32 0.0, %v943
        %945 = vmatmul.f32.gmra.mxu0 %v460
        %v946 = vpop.f32.mrf.mxu0
        %v947 = vadd.f32 0.0, %v946
        %948 = vmatmul.f32.gmra.mxu0 %v461
        %v949 = vpop.f32.mrf.mxu0
        %v950 = vadd.f32 0.0, %v949
        %951 = vmatmul.f32.gmra.mxu0 %v462
        %v952 = vpop.f32.mrf.mxu0
        %v953 = vadd.f32 0.0, %v952
        %954 = vmatmul.f32.gmra.mxu0 %v463
        %v955 = vpop.f32.mrf.mxu0
        %v956 = vadd.f32 0.0, %v955
        %957 = vmatmul.f32.gmra.mxu0 %v464
        %v958 = vpop.f32.mrf.mxu0
        %v959 = vadd.f32 0.0, %v958
        %960 = vmatmul.f32.gmra.mxu0 %v465
        %v961 = vpop.f32.mrf.mxu0
        %v962 = vadd.f32 0.0, %v961
        %963 = vmatmul.f32.gmra.mxu0 %v466
        %v964 = vpop.f32.mrf.mxu0
        %v965 = vadd.f32 0.0, %v964
        %966 = vmatmul.f32.gmra.mxu0 %v467
        %v967 = vpop.f32.mrf.mxu0
        %v968 = vadd.f32 0.0, %v967
        %969 = vmatmul.f32.gmra.mxu0 %v468
        %v970 = vpop.f32.mrf.mxu0
        %v971 = vadd.f32 0.0, %v970
        %972 = vmatmul.f32.gmra.mxu0 %v469
        %v973 = vpop.f32.mrf.mxu0
        %v974 = vadd.f32 0.0, %v973
        %975 = vmatmul.f32.gmra.mxu0 %v470
        %v976 = vpop.f32.mrf.mxu0
        %v977 = vadd.f32 0.0, %v976
        %978 = vmatmul.f32.gmra.mxu0 %v471
        %v979 = vpop.f32.mrf.mxu0
        %v980 = vadd.f32 0.0, %v979
        %981 = vmatmul.f32.gmra.mxu0 %v472
        %v982 = vpop.f32.mrf.mxu0
        %v983 = vadd.f32 0.0, %v982
        %984 = vmatmul.f32.gmra.mxu0 %v473
        %v985 = vpop.f32.mrf.mxu0
        %v986 = vadd.f32 0.0, %v985
        %987 = vmatmul.f32.gmra.mxu0 %v474
        %v988 = vpop.f32.mrf.mxu0
        %v989 = vadd.f32 0.0, %v988
        %990 = vmatmul.f32.gmra.mxu0 %v475
        %v991 = vpop.f32.mrf.mxu0
        %v992 = vadd.f32 0.0, %v991
        %993 = vmatmul.f32.gmra.mxu0 %v476
        %v994 = vpop.f32.mrf.mxu0
        %v995 = vadd.f32 0.0, %v994
        %996 = vmatmul.f32.gmra.mxu0 %v477
        %v997 = vpop.f32.mrf.mxu0
        %v998 = vadd.f32 0.0, %v997
        %999 = vmatmul.f32.gmra.mxu0 %v478
        %v1000 = vpop.f32.mrf.mxu0
        %v1001 = vadd.f32 0.0, %v1000
        %1002 = vmatmul.f32.gmra.mxu0 %v479
        %v1003 = vpop.f32.mrf.mxu0
        %v1004 = vadd.f32 0.0, %v1003
        %1005 = vmatmul.f32.gmra.mxu0 %v480
        %v1006 = vpop.f32.mrf.mxu0
        %v1007 = vadd.f32 0.0, %v1006
        %1008 = vmatmul.f32.gmra.mxu0 %v481
        %v1009 = vpop.f32.mrf.mxu0
        %v1010 = vadd.f32 0.0, %v1009
        %1011 = vmatmul.f32.gmra.mxu0 %v482
        %v1012 = vpop.f32.mrf.mxu0
        %v1013 = vadd.f32 0.0, %v1012
        %1014 = vmatmul.f32.gmra.mxu0 %v483
        %v1015 = vpop.f32.mrf.mxu0
        %v1016 = vadd.f32 0.0, %v1015
        %1017 = vmatmul.f32.gmra.mxu0 %v484
        %v1018 = vpop.f32.mrf.mxu0
        %v1019 = vadd.f32 0.0, %v1018
        %1020 = vmatmul.f32.gmra.mxu0 %v485
        %v1021 = vpop.f32.mrf.mxu0
        %v1022 = vadd.f32 0.0, %v1021
        %1023 = vmatmul.f32.gmra.mxu0 %v486
        %v1024 = vpop.f32.mrf.mxu0
        %v1025 = vadd.f32 0.0, %v1024
        %1026 = vmatmul.f32.gmra.mxu0 %v487
        %v1027 = vpop.f32.mrf.mxu0
        %v1028 = vadd.f32 0.0, %v1027
        %1029 = vmatmul.f32.gmra.mxu0 %v488
        %v1030 = vpop.f32.mrf.mxu0
        %v1031 = vadd.f32 0.0, %v1030
        %1032 = vmatmul.f32.gmra.mxu0 %v489
        %v1033 = vpop.f32.mrf.mxu0
        %v1034 = vadd.f32 0.0, %v1033
        %1035 = vmatmul.f32.gmra.mxu0 %v490
        %v1036 = vpop.f32.mrf.mxu0
        %v1037 = vadd.f32 0.0, %v1036
        %1038 = vmatmul.f32.gmra.mxu0 %v491
        %v1039 = vpop.f32.mrf.mxu0
        %v1040 = vadd.f32 0.0, %v1039
        %1041 = vmatmul.f32.gmra.mxu0 %v492
        %v1042 = vpop.f32.mrf.mxu0
        %v1043 = vadd.f32 0.0, %v1042
        %1044 = vmatmul.f32.gmra.mxu0 %v493
        %v1045 = vpop.f32.mrf.mxu0
        %v1046 = vadd.f32 0.0, %v1045
        %1047 = vmatmul.f32.gmra.mxu0 %v494
        %v1048 = vpop.f32.mrf.mxu0
        %v1049 = vadd.f32 0.0, %v1048
        %1050 = vmatmul.f32.gmra.mxu0 %v495
        %v1051 = vpop.f32.mrf.mxu0
        %v1052 = vadd.f32 0.0, %v1051
        %1053 = vmatmul.f32.gmra.mxu0 %v496
        %v1054 = vpop.f32.mrf.mxu0
        %v1055 = vadd.f32 0.0, %v1054
        %1056 = vmatmul.f32.gmra.mxu0 %v497
        %v1057 = vpop.f32.mrf.mxu0
        %v1058 = vadd.f32 0.0, %v1057
        %1059 = vmatmul.f32.gmra.mxu0 %v498
        %v1060 = vpop.f32.mrf.mxu0
        %v1061 = vadd.f32 0.0, %v1060
        %1062 = vmatmul.f32.gmra.mxu0 %v499
        %v1063 = vpop.f32.mrf.mxu0
        %v1064 = vadd.f32 0.0, %v1063
        %1065 = vmatmul.f32.gmra.mxu0 %v500
        %v1066 = vpop.f32.mrf.mxu0
        %v1067 = vadd.f32 0.0, %v1066
        %1068 = vmatmul.f32.gmra.mxu0 %v501
        %v1069 = vpop.f32.mrf.mxu0
        %v1070 = vadd.f32 0.0, %v1069
        %1071 = vmatmul.f32.gmra.mxu0 %v502
        %v1072 = vpop.f32.mrf.mxu0
        %v1073 = vadd.f32 0.0, %v1072
        %1074 = vmatmul.f32.gmra.mxu0 %v503
        %v1075 = vpop.f32.mrf.mxu0
        %v1076 = vadd.f32 0.0, %v1075
        %1077 = vmatmul.f32.gmra.mxu0 %v504
        %v1078 = vpop.f32.mrf.mxu0
        %v1079 = vadd.f32 0.0, %v1078
        %1080 = vmatmul.f32.gmra.mxu0 %v505
        %v1081 = vpop.f32.mrf.mxu0
        %v1082 = vadd.f32 0.0, %v1081
        %1083 = vmatmul.f32.gmra.mxu0 %v506
        %v1084 = vpop.f32.mrf.mxu0
        %v1085 = vadd.f32 0.0, %v1084
        %1086 = vmatmul.f32.gmra.mxu0 %v507
        %v1087 = vpop.f32.mrf.mxu0
        %v1088 = vadd.f32 0.0, %v1087
        %1089 = vmatmul.f32.gmra.mxu0 %v508
        %v1090 = vpop.f32.mrf.mxu0
        %v1091 = vadd.f32 0.0, %v1090
        %1092 = vmatmul.f32.gmra.mxu0 %v509
        %v1093 = vpop.f32.mrf.mxu0
        %v1094 = vadd.f32 0.0, %v1093
        %1095 = vmatmul.f32.gmra.mxu0 %v510
        %v1096 = vpop.f32.mrf.mxu0
        %v1097 = vadd.f32 0.0, %v1096
        %1098 = vmatmul.f32.gmra.mxu0 %v511
        %v1099 = vpop.f32.mrf.mxu0
        %v1100 = vadd.f32 0.0, %v1099
        %1101 = vmatmul.f32.gmra.mxu0 %v512
        %v1102 = vpop.f32.mrf.mxu0
        %v1103 = vadd.f32 0.0, %v1102
        %1104 = vmatmul.f32.gmra.mxu0 %v513
        %v1105 = vpop.f32.mrf.mxu0
        %v1106 = vadd.f32 0.0, %v1105
        %1107 = vmatmul.f32.gmra.mxu0 %v514
        %v1108 = vpop.f32.mrf.mxu0
        %v1109 = vadd.f32 0.0, %v1108
        %1110 = vmatmul.f32.gmra.mxu0 %v515
        %v1111 = vpop.f32.mrf.mxu0
        %v1112 = vadd.f32 0.0, %v1111
        %1113 = vmatmul.f32.gmra.mxu0 %v516
        %v1114 = vpop.f32.mrf.mxu0
        %v1115 = vadd.f32 0.0, %v1114
        %1116 = vmatmul.f32.gmra.mxu0 %v517
        %v1117 = vpop.f32.mrf.mxu0
        %v1118 = vadd.f32 0.0, %v1117
        %1119 = vmatmul.f32.gmra.mxu0 %v518
        %v1120 = vpop.f32.mrf.mxu0
        %v1121 = vadd.f32 0.0, %v1120
        %1122 = vmatmul.f32.gmra.mxu0 %v519
        %v1123 = vpop.f32.mrf.mxu0
        %v1124 = vadd.f32 0.0, %v1123
        %1125 = vmatmul.f32.gmra.mxu0 %v520
        %v1126 = vpop.f32.mrf.mxu0
        %v1127 = vadd.f32 0.0, %v1126
        %1128 = vmatmul.f32.gmra.mxu0 %v521
        %v1129 = vpop.f32.mrf.mxu0
        %v1130 = vadd.f32 0.0, %v1129
        %1131 = vmatmul.f32.gmra.mxu0 %v522
        %v1132 = vpop.f32.mrf.mxu0
        %v1133 = vadd.f32 0.0, %v1132
        %1134 = vmatmul.f32.gmra.mxu0 %v523
        %v1135 = vpop.f32.mrf.mxu0
        %v1136 = vadd.f32 0.0, %v1135
        %1137 = vmatmul.f32.gmra.mxu0 %v524
        %v1138 = vpop.f32.mrf.mxu0
        %v1139 = vadd.f32 0.0, %v1138
        %1140 = vmatmul.f32.gmra.mxu0 %v525
        %v1141 = vpop.f32.mrf.mxu0
        %v1142 = vadd.f32 0.0, %v1141
        %1143 = vmatmul.f32.gmra.mxu0 %v526
        %v1144 = vpop.f32.mrf.mxu0
        %v1145 = vadd.f32 0.0, %v1144
        %1146 = vmatmul.f32.gmra.mxu0 %v527
        %v1147 = vpop.f32.mrf.mxu0
        %v1148 = vadd.f32 0.0, %v1147
        %1149 = vmatmul.f32.gmra.mxu0 %v528
        %v1150 = vpop.f32.mrf.mxu0
        %v1151 = vadd.f32 0.0, %v1150
        %1152 = vmatmul.f32.gmra.mxu0 %v529
        %v1153 = vpop.f32.mrf.mxu0
        %v1154 = vadd.f32 0.0, %v1153
        %1155 = vmatmul.f32.gmra.mxu0 %v530
        %v1156 = vpop.f32.mrf.mxu0
        %v1157 = vadd.f32 0.0, %v1156
        %1158 = vmatmul.f32.gmra.mxu0 %v531
        %v1159 = vpop.f32.mrf.mxu0
        %v1160 = vadd.f32 0.0, %v1159
        %1161 = vmatmul.f32.gmra.mxu0 %v532
        %v1162 = vpop.f32.mrf.mxu0
        %v1163 = vadd.f32 0.0, %v1162
        %1164 = vmatmul.f32.gmra.mxu0 %v533
        %v1165 = vpop.f32.mrf.mxu0
        %v1166 = vadd.f32 0.0, %v1165
        %1167 = vmatmul.f32.gmra.mxu0 %v534
        %v1168 = vpop.f32.mrf.mxu0
        %v1169 = vadd.f32 0.0, %v1168
        %1170 = vmatmul.f32.gmra.mxu0 %v535
        %v1171 = vpop.f32.mrf.mxu0
        %v1172 = vadd.f32 0.0, %v1171
        %1173 = vmatmul.f32.gmra.mxu0 %v536
        %v1174 = vpop.f32.mrf.mxu0
        %v1175 = vadd.f32 0.0, %v1174
        %1176 = vmatmul.f32.gmra.mxu0 %v537
        %v1177 = vpop.f32.mrf.mxu0
        %v1178 = vadd.f32 0.0, %v1177
        %1179 = vdwg.mxu0
        %v1180 = vmul.f32 %v797, %v538
        %v1181 = vmul.f32 %v800, %v539
        %v1182 = vmul.f32 %v803, %v540
        %v1183 = vmul.f32 %v806, %v541
        %v1184 = vmul.f32 %v809, %v542
        %v1185 = vmul.f32 %v812, %v543
        %v1186 = vmul.f32 %v815, %v544
        %v1187 = vmul.f32 %v818, %v545
        %v1188 = vmul.f32 %v821, %v546
        %v1189 = vmul.f32 %v824, %v547
        %v1190 = vmul.f32 %v827, %v548
        %v1191 = vmul.f32 %v830, %v549
        %v1192 = vmul.f32 %v833, %v550
        %v1193 = vmul.f32 %v836, %v551
        %v1194 = vmul.f32 %v839, %v552
        %v1195 = vmul.f32 %v842, %v553
        %v1196 = vmul.f32 %v845, %v554
        %v1197 = vmul.f32 %v848, %v555
        %v1198 = vmul.f32 %v851, %v556
        %v1199 = vmul.f32 %v854, %v557
        %v1200 = vmul.f32 %v857, %v558
        %v1201 = vmul.f32 %v860, %v559
        %v1202 = vmul.f32 %v863, %v560
        %v1203 = vmul.f32 %v866, %v561
        %v1204 = vmul.f32 %v869, %v562
        %v1205 = vmul.f32 %v872, %v563
        %v1206 = vmul.f32 %v875, %v564
        %v1207 = vmul.f32 %v878, %v565
        %v1208 = vmul.f32 %v881, %v566
        %v1209 = vmul.f32 %v884, %v567
        %v1210 = vmul.f32 %v887, %v568
        %v1211 = vmul.f32 %v890, %v569
        %v1212 = vmul.f32 %v893, %v570
        %v1213 = vmul.f32 %v896, %v571
        %v1214 = vmul.f32 %v899, %v572
        %v1215 = vmul.f32 %v902, %v573
        %v1216 = vmul.f32 %v905, %v574
        %v1217 = vmul.f32 %v908, %v575
        %v1218 = vmul.f32 %v911, %v576
        %v1219 = vmul.f32 %v914, %v577
        %v1220 = vmul.f32 %v917, %v578
        %v1221 = vmul.f32 %v920, %v579
        %v1222 = vmul.f32 %v923, %v580
        %v1223 = vmul.f32 %v926, %v581
        %v1224 = vmul.f32 %v929, %v582
        %v1225 = vmul.f32 %v932, %v583
        %v1226 = vmul.f32 %v935, %v584
        %v1227 = vmul.f32 %v938, %v585
        %v1228 = vmul.f32 %v941, %v586
        %v1229 = vmul.f32 %v944, %v587
        %v1230 = vmul.f32 %v947, %v588
        %v1231 = vmul.f32 %v950, %v589
        %v1232 = vmul.f32 %v953, %v590
        %v1233 = vmul.f32 %v956, %v591
        %v1234 = vmul.f32 %v959, %v592
        %v1235 = vmul.f32 %v962, %v593
        %v1236 = vmul.f32 %v965, %v594
        %v1237 = vmul.f32 %v968, %v595
        %v1238 = vmul.f32 %v971, %v596
        %v1239 = vmul.f32 %v974, %v597
        %v1240 = vmul.f32 %v977, %v598
        %v1241 = vmul.f32 %v980, %v599
        %v1242 = vmul.f32 %v983, %v600
        %v1243 = vmul.f32 %v986, %v601
        %v1244 = vmul.f32 %v989, %v602
        %v1245 = vmul.f32 %v992, %v603
        %v1246 = vmul.f32 %v995, %v604
        %v1247 = vmul.f32 %v998, %v605
        %v1248 = vmul.f32 %v1001, %v606
        %v1249 = vmul.f32 %v1004, %v607
        %v1250 = vmul.f32 %v1007, %v608
        %v1251 = vmul.f32 %v1010, %v609
        %v1252 = vmul.f32 %v1013, %v610
        %v1253 = vmul.f32 %v1016, %v611
        %v1254 = vmul.f32 %v1019, %v612
        %v1255 = vmul.f32 %v1022, %v613
        %v1256 = vmul.f32 %v1025, %v614
        %v1257 = vmul.f32 %v1028, %v615
        %v1258 = vmul.f32 %v1031, %v616
        %v1259 = vmul.f32 %v1034, %v617
        %v1260 = vmul.f32 %v1037, %v618
        %v1261 = vmul.f32 %v1040, %v619
        %v1262 = vmul.f32 %v1043, %v620
        %v1263 = vmul.f32 %v1046, %v621
        %v1264 = vmul.f32 %v1049, %v622
        %v1265 = vmul.f32 %v1052, %v623
        %v1266 = vmul.f32 %v1055, %v624
        %v1267 = vmul.f32 %v1058, %v625
        %v1268 = vmul.f32 %v1061, %v626
        %v1269 = vmul.f32 %v1064, %v627
        %v1270 = vmul.f32 %v1067, %v628
        %v1271 = vmul.f32 %v1070, %v629
        %v1272 = vmul.f32 %v1073, %v630
        %v1273 = vmul.f32 %v1076, %v631
        %v1274 = vmul.f32 %v1079, %v632
        %v1275 = vmul.f32 %v1082, %v633
        %v1276 = vmul.f32 %v1085, %v634
        %v1277 = vmul.f32 %v1088, %v635
        %v1278 = vmul.f32 %v1091, %v636
        %v1279 = vmul.f32 %v1094, %v637
        %v1280 = vmul.f32 %v1097, %v638
        %v1281 = vmul.f32 %v1100, %v639
        %v1282 = vmul.f32 %v1103, %v640
        %v1283 = vmul.f32 %v1106, %v641
        %v1284 = vmul.f32 %v1109, %v642
        %v1285 = vmul.f32 %v1112, %v643
        %v1286 = vmul.f32 %v1115, %v644
        %v1287 = vmul.f32 %v1118, %v645
        %v1288 = vmul.f32 %v1121, %v646
        %v1289 = vmul.f32 %v1124, %v647
        %v1290 = vmul.f32 %v1127, %v648
        %v1291 = vmul.f32 %v1130, %v649
        %v1292 = vmul.f32 %v1133, %v650
        %v1293 = vmul.f32 %v1136, %v651
        %v1294 = vmul.f32 %v1139, %v652
        %v1295 = vmul.f32 %v1142, %v653
        %v1296 = vmul.f32 %v1145, %v654
        %v1297 = vmul.f32 %v1148, %v655
        %v1298 = vmul.f32 %v1151, %v656
        %v1299 = vmul.f32 %v1154, %v657
        %v1300 = vmul.f32 %v1157, %v658
        %v1301 = vmul.f32 %v1160, %v659
        %v1302 = vmul.f32 %v1163, %v660
        %v1303 = vmul.f32 %v1166, %v661
        %v1304 = vmul.f32 %v1169, %v662
        %v1305 = vmul.f32 %v1172, %v663
        %v1306 = vmul.f32 %v1175, %v664
        %v1307 = vmul.f32 %v1178, %v665
        %1308 = vadd.xlane.f32.xlu0 %v1180
        %v1309 = vpop.xlane.xlu0 %1308
        %1310 = vadd.xlane.f32.xlu0 %v1181
        %v1311 = vpop.xlane.xlu0 %1310
        %1312 = vadd.xlane.f32.xlu0 %v1182
        %v1313 = vpop.xlane.xlu0 %1312
        %1314 = vadd.xlane.f32.xlu0 %v1183
        %v1315 = vpop.xlane.xlu0 %1314
        %1316 = vadd.xlane.f32.xlu0 %v1184
        %v1317 = vpop.xlane.xlu0 %1316
        %1318 = vadd.xlane.f32.xlu0 %v1185
        %v1319 = vpop.xlane.xlu0 %1318
        %1320 = vadd.xlane.f32.xlu0 %v1186
        %v1321 = vpop.xlane.xlu0 %1320
        %1322 = vadd.xlane.f32.xlu0 %v1187
        %v1323 = vpop.xlane.xlu0 %1322
        %1324 = vadd.xlane.f32.xlu0 %v1188
        %v1325 = vpop.xlane.xlu0 %1324
        %1326 = vadd.xlane.f32.xlu0 %v1189
        %v1327 = vpop.xlane.xlu0 %1326
        %1328 = vadd.xlane.f32.xlu0 %v1190
        %v1329 = vpop.xlane.xlu0 %1328
        %1330 = vadd.xlane.f32.xlu0 %v1191
        %v1331 = vpop.xlane.xlu0 %1330
        %1332 = vadd.xlane.f32.xlu0 %v1192
        %v1333 = vpop.xlane.xlu0 %1332
        %1334 = vadd.xlane.f32.xlu0 %v1193
        %v1335 = vpop.xlane.xlu0 %1334
        %1336 = vadd.xlane.f32.xlu0 %v1194
        %v1337 = vpop.xlane.xlu0 %1336
        %1338 = vadd.xlane.f32.xlu0 %v1195
        %v1339 = vpop.xlane.xlu0 %1338
        %1340 = vadd.xlane.f32.xlu0 %v1196
        %v1341 = vpop.xlane.xlu0 %1340
        %1342 = vadd.xlane.f32.xlu0 %v1197
        %v1343 = vpop.xlane.xlu0 %1342
        %1344 = vadd.xlane.f32.xlu0 %v1198
        %v1345 = vpop.xlane.xlu0 %1344
        %1346 = vadd.xlane.f32.xlu0 %v1199
        %v1347 = vpop.xlane.xlu0 %1346
        %1348 = vadd.xlane.f32.xlu0 %v1200
        %v1349 = vpop.xlane.xlu0 %1348
        %1350 = vadd.xlane.f32.xlu0 %v1201
        %v1351 = vpop.xlane.xlu0 %1350
        %1352 = vadd.xlane.f32.xlu0 %v1202
        %v1353 = vpop.xlane.xlu0 %1352
        %1354 = vadd.xlane.f32.xlu0 %v1203
        %v1355 = vpop.xlane.xlu0 %1354
        %1356 = vadd.xlane.f32.xlu0 %v1204
        %v1357 = vpop.xlane.xlu0 %1356
        %1358 = vadd.xlane.f32.xlu0 %v1205
        %v1359 = vpop.xlane.xlu0 %1358
        %1360 = vadd.xlane.f32.xlu0 %v1206
        %v1361 = vpop.xlane.xlu0 %1360
        %1362 = vadd.xlane.f32.xlu0 %v1207
        %v1363 = vpop.xlane.xlu0 %1362
        %1364 = vadd.xlane.f32.xlu0 %v1208
        %v1365 = vpop.xlane.xlu0 %1364
        %1366 = vadd.xlane.f32.xlu0 %v1209
        %v1367 = vpop.xlane.xlu0 %1366
        %1368 = vadd.xlane.f32.xlu0 %v1210
        %v1369 = vpop.xlane.xlu0 %1368
        %1370 = vadd.xlane.f32.xlu0 %v1211
        %v1371 = vpop.xlane.xlu0 %1370
        %1372 = vadd.xlane.f32.xlu0 %v1212
        %v1373 = vpop.xlane.xlu0 %1372
        %1374 = vadd.xlane.f32.xlu0 %v1213
        %v1375 = vpop.xlane.xlu0 %1374
        %1376 = vadd.xlane.f32.xlu0 %v1214
        %v1377 = vpop.xlane.xlu0 %1376
        %1378 = vadd.xlane.f32.xlu0 %v1215
        %v1379 = vpop.xlane.xlu0 %1378
        %1380 = vadd.xlane.f32.xlu0 %v1216
        %v1381 = vpop.xlane.xlu0 %1380
        %1382 = vadd.xlane.f32.xlu0 %v1217
        %v1383 = vpop.xlane.xlu0 %1382
        %1384 = vadd.xlane.f32.xlu0 %v1218
        %v1385 = vpop.xlane.xlu0 %1384
        %1386 = vadd.xlane.f32.xlu0 %v1219
        %v1387 = vpop.xlane.xlu0 %1386
        %1388 = vadd.xlane.f32.xlu0 %v1220
        %v1389 = vpop.xlane.xlu0 %1388
        %1390 = vadd.xlane.f32.xlu0 %v1221
        %v1391 = vpop.xlane.xlu0 %1390
        %1392 = vadd.xlane.f32.xlu0 %v1222
        %v1393 = vpop.xlane.xlu0 %1392
        %1394 = vadd.xlane.f32.xlu0 %v1223
        %v1395 = vpop.xlane.xlu0 %1394
        %1396 = vadd.xlane.f32.xlu0 %v1224
        %v1397 = vpop.xlane.xlu0 %1396
        %1398 = vadd.xlane.f32.xlu0 %v1225
        %v1399 = vpop.xlane.xlu0 %1398
        %1400 = vadd.xlane.f32.xlu0 %v1226
        %v1401 = vpop.xlane.xlu0 %1400
        %1402 = vadd.xlane.f32.xlu0 %v1227
        %v1403 = vpop.xlane.xlu0 %1402
        %1404 = vadd.xlane.f32.xlu0 %v1228
        %v1405 = vpop.xlane.xlu0 %1404
        %1406 = vadd.xlane.f32.xlu0 %v1229
        %v1407 = vpop.xlane.xlu0 %1406
        %1408 = vadd.xlane.f32.xlu0 %v1230
        %v1409 = vpop.xlane.xlu0 %1408
        %1410 = vadd.xlane.f32.xlu0 %v1231
        %v1411 = vpop.xlane.xlu0 %1410
        %1412 = vadd.xlane.f32.xlu0 %v1232
        %v1413 = vpop.xlane.xlu0 %1412
        %1414 = vadd.xlane.f32.xlu0 %v1233
        %v1415 = vpop.xlane.xlu0 %1414
        %1416 = vadd.xlane.f32.xlu0 %v1234
        %v1417 = vpop.xlane.xlu0 %1416
        %1418 = vadd.xlane.f32.xlu0 %v1235
        %v1419 = vpop.xlane.xlu0 %1418
        %1420 = vadd.xlane.f32.xlu0 %v1236
        %v1421 = vpop.xlane.xlu0 %1420
        %1422 = vadd.xlane.f32.xlu0 %v1237
        %v1423 = vpop.xlane.xlu0 %1422
        %1424 = vadd.xlane.f32.xlu0 %v1238
        %v1425 = vpop.xlane.xlu0 %1424
        %1426 = vadd.xlane.f32.xlu0 %v1239
        %v1427 = vpop.xlane.xlu0 %1426
        %1428 = vadd.xlane.f32.xlu0 %v1240
        %v1429 = vpop.xlane.xlu0 %1428
        %1430 = vadd.xlane.f32.xlu0 %v1241
        %v1431 = vpop.xlane.xlu0 %1430
        %1432 = vadd.xlane.f32.xlu0 %v1242
        %v1433 = vpop.xlane.xlu0 %1432
        %1434 = vadd.xlane.f32.xlu0 %v1243
        %v1435 = vpop.xlane.xlu0 %1434
        %1436 = vadd.xlane.f32.xlu0 %v1244
        %v1437 = vpop.xlane.xlu0 %1436
        %1438 = vadd.xlane.f32.xlu0 %v1245
        %v1439 = vpop.xlane.xlu0 %1438
        %1440 = vadd.xlane.f32.xlu0 %v1246
        %v1441 = vpop.xlane.xlu0 %1440
        %1442 = vadd.xlane.f32.xlu0 %v1247
        %v1443 = vpop.xlane.xlu0 %1442
        %1444 = vadd.xlane.f32.xlu0 %v1248
        %v1445 = vpop.xlane.xlu0 %1444
        %1446 = vadd.xlane.f32.xlu0 %v1249
        %v1447 = vpop.xlane.xlu0 %1446
        %1448 = vadd.xlane.f32.xlu0 %v1250
        %v1449 = vpop.xlane.xlu0 %1448
        %1450 = vadd.xlane.f32.xlu0 %v1251
        %v1451 = vpop.xlane.xlu0 %1450
        %1452 = vadd.xlane.f32.xlu0 %v1252
        %v1453 = vpop.xlane.xlu0 %1452
        %1454 = vadd.xlane.f32.xlu0 %v1253
        %v1455 = vpop.xlane.xlu0 %1454
        %1456 = vadd.xlane.f32.xlu0 %v1254
        %v1457 = vpop.xlane.xlu0 %1456
        %1458 = vadd.xlane.f32.xlu0 %v1255
        %v1459 = vpop.xlane.xlu0 %1458
        %1460 = vadd.xlane.f32.xlu0 %v1256
        %v1461 = vpop.xlane.xlu0 %1460
        %1462 = vadd.xlane.f32.xlu0 %v1257
        %v1463 = vpop.xlane.xlu0 %1462
        %1464 = vadd.xlane.f32.xlu0 %v1258
        %v1465 = vpop.xlane.xlu0 %1464
        %1466 = vadd.xlane.f32.xlu0 %v1259
        %v1467 = vpop.xlane.xlu0 %1466
        %1468 = vadd.xlane.f32.xlu0 %v1260
        %v1469 = vpop.xlane.xlu0 %1468
        %1470 = vadd.xlane.f32.xlu0 %v1261
        %v1471 = vpop.xlane.xlu0 %1470
        %1472 = vadd.xlane.f32.xlu0 %v1262
        %v1473 = vpop.xlane.xlu0 %1472
        %1474 = vadd.xlane.f32.xlu0 %v1263
        %v1475 = vpop.xlane.xlu0 %1474
        %1476 = vadd.xlane.f32.xlu0 %v1264
        %v1477 = vpop.xlane.xlu0 %1476
        %1478 = vadd.xlane.f32.xlu0 %v1265
        %v1479 = vpop.xlane.xlu0 %1478
        %1480 = vadd.xlane.f32.xlu0 %v1266
        %v1481 = vpop.xlane.xlu0 %1480
        %1482 = vadd.xlane.f32.xlu0 %v1267
        %v1483 = vpop.xlane.xlu0 %1482
        %1484 = vadd.xlane.f32.xlu0 %v1268
        %v1485 = vpop.xlane.xlu0 %1484
        %1486 = vadd.xlane.f32.xlu0 %v1269
        %v1487 = vpop.xlane.xlu0 %1486
        %1488 = vadd.xlane.f32.xlu0 %v1270
        %v1489 = vpop.xlane.xlu0 %1488
        %1490 = vadd.xlane.f32.xlu0 %v1271
        %v1491 = vpop.xlane.xlu0 %1490
        %1492 = vadd.xlane.f32.xlu0 %v1272
        %v1493 = vpop.xlane.xlu0 %1492
        %1494 = vadd.xlane.f32.xlu0 %v1273
        %v1495 = vpop.xlane.xlu0 %1494
        %1496 = vadd.xlane.f32.xlu0 %v1274
        %v1497 = vpop.xlane.xlu0 %1496
        %1498 = vadd.xlane.f32.xlu0 %v1275
        %v1499 = vpop.xlane.xlu0 %1498
        %1500 = vadd.xlane.f32.xlu0 %v1276
        %v1501 = vpop.xlane.xlu0 %1500
        %1502 = vadd.xlane.f32.xlu0 %v1277
        %v1503 = vpop.xlane.xlu0 %1502
        %1504 = vadd.xlane.f32.xlu0 %v1278
        %v1505 = vpop.xlane.xlu0 %1504
        %1506 = vadd.xlane.f32.xlu0 %v1279
        %v1507 = vpop.xlane.xlu0 %1506
        %1508 = vadd.xlane.f32.xlu0 %v1280
        %v1509 = vpop.xlane.xlu0 %1508
        %1510 = vadd.xlane.f32.xlu0 %v1281
        %v1511 = vpop.xlane.xlu0 %1510
        %1512 = vadd.xlane.f32.xlu0 %v1282
        %v1513 = vpop.xlane.xlu0 %1512
        %1514 = vadd.xlane.f32.xlu0 %v1283
        %v1515 = vpop.xlane.xlu0 %1514
        %1516 = vadd.xlane.f32.xlu0 %v1284
        %v1517 = vpop.xlane.xlu0 %1516
        %1518 = vadd.xlane.f32.xlu0 %v1285
        %v1519 = vpop.xlane.xlu0 %1518
        %1520 = vadd.xlane.f32.xlu0 %v1286
        %v1521 = vpop.xlane.xlu0 %1520
        %1522 = vadd.xlane.f32.xlu0 %v1287
        %v1523 = vpop.xlane.xlu0 %1522
        %1524 = vadd.xlane.f32.xlu0 %v1288
        %v1525 = vpop.xlane.xlu0 %1524
        %1526 = vadd.xlane.f32.xlu0 %v1289
        %v1527 = vpop.xlane.xlu0 %1526
        %1528 = vadd.xlane.f32.xlu0 %v1290
        %v1529 = vpop.xlane.xlu0 %1528
        %1530 = vadd.xlane.f32.xlu0 %v1291
        %v1531 = vpop.xlane.xlu0 %1530
        %1532 = vadd.xlane.f32.xlu0 %v1292
        %v1533 = vpop.xlane.xlu0 %1532
        %1534 = vadd.xlane.f32.xlu0 %v1293
        %v1535 = vpop.xlane.xlu0 %1534
        %1536 = vadd.xlane.f32.xlu0 %v1294
        %v1537 = vpop.xlane.xlu0 %1536
        %1538 = vadd.xlane.f32.xlu0 %v1295
        %v1539 = vpop.xlane.xlu0 %1538
        %1540 = vadd.xlane.f32.xlu0 %v1296
        %v1541 = vpop.xlane.xlu0 %1540
        %1542 = vadd.xlane.f32.xlu0 %v1297
        %v1543 = vpop.xlane.xlu0 %1542
        %1544 = vadd.xlane.f32.xlu0 %v1298
        %v1545 = vpop.xlane.xlu0 %1544
        %1546 = vadd.xlane.f32.xlu0 %v1299
        %v1547 = vpop.xlane.xlu0 %1546
        %1548 = vadd.xlane.f32.xlu0 %v1300
        %v1549 = vpop.xlane.xlu0 %1548
        %1550 = vadd.xlane.f32.xlu0 %v1301
        %v1551 = vpop.xlane.xlu0 %1550
        %1552 = vadd.xlane.f32.xlu0 %v1302
        %v1553 = vpop.xlane.xlu0 %1552
        %1554 = vadd.xlane.f32.xlu0 %v1303
        %v1555 = vpop.xlane.xlu0 %1554
        %1556 = vadd.xlane.f32.xlu0 %v1304
        %v1557 = vpop.xlane.xlu0 %1556
        %1558 = vadd.xlane.f32.xlu0 %v1305
        %v1559 = vpop.xlane.xlu0 %1558
        %1560 = vadd.xlane.f32.xlu0 %v1306
        %v1561 = vpop.xlane.xlu0 %1560
        %1562 = vadd.xlane.f32.xlu0 %v1307
        %v1563 = vpop.xlane.xlu0 %1562
        %v1580 = vrot.slane %v716, 1
        %v1581 = vrot.slane %v716, 2
        %v1582 = vrot.slane %v716, 3
        %v1583 = vrot.slane %v716, 4
        %v1584 = vrot.slane %v716, 5
        %v1585 = vrot.slane %v716, 6
        %v1586 = vrot.slane %v716, 7
        %v1587 = vrot.slane %v719, 1
        %v1588 = vrot.slane %v719, 2
        %v1589 = vrot.slane %v719, 3
        %v1590 = vrot.slane %v719, 4
        %v1591 = vrot.slane %v719, 5
        %v1592 = vrot.slane %v719, 6
        %v1593 = vrot.slane %v719, 7
        %v1594 = vrot.slane %v722, 1
        %v1595 = vrot.slane %v722, 2
        %v1596 = vrot.slane %v722, 3
        %v1597 = vrot.slane %v722, 4
        %v1598 = vrot.slane %v722, 5
        %v1599 = vrot.slane %v722, 6
        %v1600 = vrot.slane %v722, 7
        %v1601 = vrot.slane %v725, 1
        %v1602 = vrot.slane %v725, 2
        %v1603 = vrot.slane %v725, 3
        %v1604 = vrot.slane %v725, 4
        %v1605 = vrot.slane %v725, 5
        %v1606 = vrot.slane %v725, 6
        %v1607 = vrot.slane %v725, 7
        %v1608 = vrot.slane %v728, 1
        %v1609 = vrot.slane %v728, 2
        %v1610 = vrot.slane %v728, 3
        %v1611 = vrot.slane %v728, 4
        %v1612 = vrot.slane %v728, 5
        %v1613 = vrot.slane %v728, 6
        %v1614 = vrot.slane %v728, 7
        %v1615 = vrot.slane %v731, 1
        %v1616 = vrot.slane %v731, 2
        %v1617 = vrot.slane %v731, 3
        %v1618 = vrot.slane %v731, 4
        %v1619 = vrot.slane %v731, 5
        %v1620 = vrot.slane %v731, 6
        %v1621 = vrot.slane %v731, 7
        %v1622 = vrot.slane %v734, 1
        %v1623 = vrot.slane %v734, 2
        %v1624 = vrot.slane %v734, 3
        %v1625 = vrot.slane %v734, 4
        %v1626 = vrot.slane %v734, 5
        %v1627 = vrot.slane %v734, 6
        %v1628 = vrot.slane %v734, 7
        %v1629 = vrot.slane %v737, 1
        %v1630 = vrot.slane %v737, 2
        %v1631 = vrot.slane %v737, 3
        %v1632 = vrot.slane %v737, 4
        %v1633 = vrot.slane %v737, 5
        %v1634 = vrot.slane %v737, 6
        %v1635 = vrot.slane %v737, 7
        %v1636 = vrot.slane %v740, 1
        %v1637 = vrot.slane %v740, 2
        %v1638 = vrot.slane %v740, 3
        %v1639 = vrot.slane %v740, 4
        %v1640 = vrot.slane %v740, 5
        %v1641 = vrot.slane %v740, 6
        %v1642 = vrot.slane %v740, 7
        %v1643 = vrot.slane %v743, 1
        %v1644 = vrot.slane %v743, 2
        %v1645 = vrot.slane %v743, 3
        %v1646 = vrot.slane %v743, 4
        %v1647 = vrot.slane %v743, 5
        %v1648 = vrot.slane %v743, 6
        %v1649 = vrot.slane %v743, 7
        %v1650 = vrot.slane %v746, 1
        %v1651 = vrot.slane %v746, 2
        %v1652 = vrot.slane %v746, 3
        %v1653 = vrot.slane %v746, 4
        %v1654 = vrot.slane %v746, 5
        %v1655 = vrot.slane %v746, 6
        %v1656 = vrot.slane %v746, 7
        %v1657 = vrot.slane %v749, 1
        %v1658 = vrot.slane %v749, 2
        %v1659 = vrot.slane %v749, 3
        %v1660 = vrot.slane %v749, 4
        %v1661 = vrot.slane %v749, 5
        %v1662 = vrot.slane %v749, 6
        %v1663 = vrot.slane %v749, 7
        %v1664 = vrot.slane %v752, 1
        %v1665 = vrot.slane %v752, 2
        %v1666 = vrot.slane %v752, 3
        %v1667 = vrot.slane %v752, 4
        %v1668 = vrot.slane %v752, 5
        %v1669 = vrot.slane %v752, 6
        %v1670 = vrot.slane %v752, 7
        %v1671 = vrot.slane %v755, 1
        %v1672 = vrot.slane %v755, 2
        %v1673 = vrot.slane %v755, 3
        %v1674 = vrot.slane %v755, 4
        %v1675 = vrot.slane %v755, 5
        %v1676 = vrot.slane %v755, 6
        %v1677 = vrot.slane %v755, 7
        %v1678 = vrot.slane %v758, 1
        %v1679 = vrot.slane %v758, 2
        %v1680 = vrot.slane %v758, 3
        %v1681 = vrot.slane %v758, 4
        %v1682 = vrot.slane %v758, 5
        %v1683 = vrot.slane %v758, 6
        %v1684 = vrot.slane %v758, 7
        %v1685 = vrot.slane %v761, 1
        %v1686 = vrot.slane %v761, 2
        %v1687 = vrot.slane %v761, 3
        %v1688 = vrot.slane %v761, 4
        %v1689 = vrot.slane %v761, 5
        %v1690 = vrot.slane %v761, 6
        %v1691 = vrot.slane %v761, 7
        %v1692 = vperm.slane %v716, 0
        %v1693 = vperm.slane %v1580, 0
        %v1694 = vperm.slane %v1581, 0
        %v1695 = vperm.slane %v1582, 0
        %v1696 = vperm.slane %v1583, 0
        %v1697 = vperm.slane %v1584, 0
        %v1698 = vperm.slane %v1585, 0
        %v1699 = vperm.slane %v1586, 0
        %v1700 = vperm.slane %v719, 0
        %v1701 = vperm.slane %v1587, 0
        %v1702 = vperm.slane %v1588, 0
        %v1703 = vperm.slane %v1589, 0
        %v1704 = vperm.slane %v1590, 0
        %v1705 = vperm.slane %v1591, 0
        %v1706 = vperm.slane %v1592, 0
        %v1707 = vperm.slane %v1593, 0
        %v1708 = vperm.slane %v722, 0
        %v1709 = vperm.slane %v1594, 0
        %v1710 = vperm.slane %v1595, 0
        %v1711 = vperm.slane %v1596, 0
        %v1712 = vperm.slane %v1597, 0
        %v1713 = vperm.slane %v1598, 0
        %v1714 = vperm.slane %v1599, 0
        %v1715 = vperm.slane %v1600, 0
        %v1716 = vperm.slane %v725, 0
        %v1717 = vperm.slane %v1601, 0
        %v1718 = vperm.slane %v1602, 0
        %v1719 = vperm.slane %v1603, 0
        %v1720 = vperm.slane %v1604, 0
        %v1721 = vperm.slane %v1605, 0
        %v1722 = vperm.slane %v1606, 0
        %v1723 = vperm.slane %v1607, 0
        %v1724 = vperm.slane %v728, 0
        %v1725 = vperm.slane %v1608, 0
        %v1726 = vperm.slane %v1609, 0
        %v1727 = vperm.slane %v1610, 0
        %v1728 = vperm.slane %v1611, 0
        %v1729 = vperm.slane %v1612, 0
        %v1730 = vperm.slane %v1613, 0
        %v1731 = vperm.slane %v1614, 0
        %v1732 = vperm.slane %v731, 0
        %v1733 = vperm.slane %v1615, 0
        %v1734 = vperm.slane %v1616, 0
        %v1735 = vperm.slane %v1617, 0
        %v1736 = vperm.slane %v1618, 0
        %v1737 = vperm.slane %v1619, 0
        %v1738 = vperm.slane %v1620, 0
        %v1739 = vperm.slane %v1621, 0
        %v1740 = vperm.slane %v734, 0
        %v1741 = vperm.slane %v1622, 0
        %v1742 = vperm.slane %v1623, 0
        %v1743 = vperm.slane %v1624, 0
        %v1744 = vperm.slane %v1625, 0
        %v1745 = vperm.slane %v1626, 0
        %v1746 = vperm.slane %v1627, 0
        %v1747 = vperm.slane %v1628, 0
        %v1748 = vperm.slane %v737, 0
        %v1749 = vperm.slane %v1629, 0
        %v1750 = vperm.slane %v1630, 0
        %v1751 = vperm.slane %v1631, 0
        %v1752 = vperm.slane %v1632, 0
        %v1753 = vperm.slane %v1633, 0
        %v1754 = vperm.slane %v1634, 0
        %v1755 = vperm.slane %v1635, 0
        %v1756 = vperm.slane %v740, 0
        %v1757 = vperm.slane %v1636, 0
        %v1758 = vperm.slane %v1637, 0
        %v1759 = vperm.slane %v1638, 0
        %v1760 = vperm.slane %v1639, 0
        %v1761 = vperm.slane %v1640, 0
        %v1762 = vperm.slane %v1641, 0
        %v1763 = vperm.slane %v1642, 0
        %v1764 = vperm.slane %v743, 0
        %v1765 = vperm.slane %v1643, 0
        %v1766 = vperm.slane %v1644, 0
        %v1767 = vperm.slane %v1645, 0
        %v1768 = vperm.slane %v1646, 0
        %v1769 = vperm.slane %v1647, 0
        %v1770 = vperm.slane %v1648, 0
        %v1771 = vperm.slane %v1649, 0
        %v1772 = vperm.slane %v746, 0
        %v1773 = vperm.slane %v1650, 0
        %v1774 = vperm.slane %v1651, 0
        %v1775 = vperm.slane %v1652, 0
        %v1776 = vperm.slane %v1653, 0
        %v1777 = vperm.slane %v1654, 0
        %v1778 = vperm.slane %v1655, 0
        %v1779 = vperm.slane %v1656, 0
        %v1780 = vperm.slane %v749, 0
        %v1781 = vperm.slane %v1657, 0
        %v1782 = vperm.slane %v1658, 0
        %v1783 = vperm.slane %v1659, 0
        %v1784 = vperm.slane %v1660, 0
        %v1785 = vperm.slane %v1661, 0
        %v1786 = vperm.slane %v1662, 0
        %v1787 = vperm.slane %v1663, 0
        %v1788 = vperm.slane %v752, 0
        %v1789 = vperm.slane %v1664, 0
        %v1790 = vperm.slane %v1665, 0
        %v1791 = vperm.slane %v1666, 0
        %v1792 = vperm.slane %v1667, 0
        %v1793 = vperm.slane %v1668, 0
        %v1794 = vperm.slane %v1669, 0
        %v1795 = vperm.slane %v1670, 0
        %v1796 = vperm.slane %v755, 0
        %v1797 = vperm.slane %v1671, 0
        %v1798 = vperm.slane %v1672, 0
        %v1799 = vperm.slane %v1673, 0
        %v1800 = vperm.slane %v1674, 0
        %v1801 = vperm.slane %v1675, 0
        %v1802 = vperm.slane %v1676, 0
        %v1803 = vperm.slane %v1677, 0
        %v1804 = vperm.slane %v758, 0
        %v1805 = vperm.slane %v1678, 0
        %v1806 = vperm.slane %v1679, 0
        %v1807 = vperm.slane %v1680, 0
        %v1808 = vperm.slane %v1681, 0
        %v1809 = vperm.slane %v1682, 0
        %v1810 = vperm.slane %v1683, 0
        %v1811 = vperm.slane %v1684, 0
        %v1812 = vperm.slane %v761, 0
        %v1813 = vperm.slane %v1685, 0
        %v1814 = vperm.slane %v1686, 0
        %v1815 = vperm.slane %v1687, 0
        %v1816 = vperm.slane %v1688, 0
        %v1817 = vperm.slane %v1689, 0
        %v1818 = vperm.slane %v1690, 0
        %v1819 = vperm.slane %v1691, 0
        %v1948 = vmul.f32 %v1692, %v538
        %v1949 = vmul.f32 %v1693, %v539
        %v1950 = vmul.f32 %v1694, %v540
        %v1951 = vmul.f32 %v1695, %v541
        %v1952 = vmul.f32 %v1696, %v542
        %v1953 = vmul.f32 %v1697, %v543
        %v1954 = vmul.f32 %v1698, %v544
        %v1955 = vmul.f32 %v1699, %v545
        %v1956 = vmul.f32 %v1700, %v546
        %v1957 = vmul.f32 %v1701, %v547
        %v1958 = vmul.f32 %v1702, %v548
        %v1959 = vmul.f32 %v1703, %v549
        %v1960 = vmul.f32 %v1704, %v550
        %v1961 = vmul.f32 %v1705, %v551
        %v1962 = vmul.f32 %v1706, %v552
        %v1963 = vmul.f32 %v1707, %v553
        %v1964 = vmul.f32 %v1708, %v554
        %v1965 = vmul.f32 %v1709, %v555
        %v1966 = vmul.f32 %v1710, %v556
        %v1967 = vmul.f32 %v1711, %v557
        %v1968 = vmul.f32 %v1712, %v558
        %v1969 = vmul.f32 %v1713, %v559
        %v1970 = vmul.f32 %v1714, %v560
        %v1971 = vmul.f32 %v1715, %v561
        %v1972 = vmul.f32 %v1716, %v562
        %v1973 = vmul.f32 %v1717, %v563
        %v1974 = vmul.f32 %v1718, %v564
        %v1975 = vmul.f32 %v1719, %v565
        %v1976 = vmul.f32 %v1720, %v566
        %v1977 = vmul.f32 %v1721, %v567
        %v1978 = vmul.f32 %v1722, %v568
        %v1979 = vmul.f32 %v1723, %v569
        %v1980 = vmul.f32 %v1724, %v570
        %v1981 = vmul.f32 %v1725, %v571
        %v1982 = vmul.f32 %v1726, %v572
        %v1983 = vmul.f32 %v1727, %v573
        %v1984 = vmul.f32 %v1728, %v574
        %v1985 = vmul.f32 %v1729, %v575
        %v1986 = vmul.f32 %v1730, %v576
        %v1987 = vmul.f32 %v1731, %v577
        %v1988 = vmul.f32 %v1732, %v578
        %v1989 = vmul.f32 %v1733, %v579
        %v1990 = vmul.f32 %v1734, %v580
        %v1991 = vmul.f32 %v1735, %v581
        %v1992 = vmul.f32 %v1736, %v582
        %v1993 = vmul.f32 %v1737, %v583
        %v1994 = vmul.f32 %v1738, %v584
        %v1995 = vmul.f32 %v1739, %v585
        %v1996 = vmul.f32 %v1740, %v586
        %v1997 = vmul.f32 %v1741, %v587
        %v1998 = vmul.f32 %v1742, %v588
        %v1999 = vmul.f32 %v1743, %v589
        %v2000 = vmul.f32 %v1744, %v590
        %v2001 = vmul.f32 %v1745, %v591
        %v2002 = vmul.f32 %v1746, %v592
        %v2003 = vmul.f32 %v1747, %v593
        %v2004 = vmul.f32 %v1748, %v594
        %v2005 = vmul.f32 %v1749, %v595
        %v2006 = vmul.f32 %v1750, %v596
        %v2007 = vmul.f32 %v1751, %v597
        %v2008 = vmul.f32 %v1752, %v598
        %v2009 = vmul.f32 %v1753, %v599
        %v2010 = vmul.f32 %v1754, %v600
        %v2011 = vmul.f32 %v1755, %v601
        %v2012 = vmul.f32 %v1756, %v602
        %v2013 = vmul.f32 %v1757, %v603
        %v2014 = vmul.f32 %v1758, %v604
        %v2015 = vmul.f32 %v1759, %v605
        %v2016 = vmul.f32 %v1760, %v606
        %v2017 = vmul.f32 %v1761, %v607
        %v2018 = vmul.f32 %v1762, %v608
        %v2019 = vmul.f32 %v1763, %v609
        %v2020 = vmul.f32 %v1764, %v610
        %v2021 = vmul.f32 %v1765, %v611
        %v2022 = vmul.f32 %v1766, %v612
        %v2023 = vmul.f32 %v1767, %v613
        %v2024 = vmul.f32 %v1768, %v614
        %v2025 = vmul.f32 %v1769, %v615
        %v2026 = vmul.f32 %v1770, %v616
        %v2027 = vmul.f32 %v1771, %v617
        %v2028 = vmul.f32 %v1772, %v618
        %v2029 = vmul.f32 %v1773, %v619
        %v2030 = vmul.f32 %v1774, %v620
        %v2031 = vmul.f32 %v1775, %v621
        %v2032 = vmul.f32 %v1776, %v622
        %v2033 = vmul.f32 %v1777, %v623
        %v2034 = vmul.f32 %v1778, %v624
        %v2035 = vmul.f32 %v1779, %v625
        %v2036 = vmul.f32 %v1780, %v626
        %v2037 = vmul.f32 %v1781, %v627
        %v2038 = vmul.f32 %v1782, %v628
        %v2039 = vmul.f32 %v1783, %v629
        %v2040 = vmul.f32 %v1784, %v630
        %v2041 = vmul.f32 %v1785, %v631
        %v2042 = vmul.f32 %v1786, %v632
        %v2043 = vmul.f32 %v1787, %v633
        %v2044 = vmul.f32 %v1788, %v634
        %v2045 = vmul.f32 %v1789, %v635
        %v2046 = vmul.f32 %v1790, %v636
        %v2047 = vmul.f32 %v1791, %v637
        %v2048 = vmul.f32 %v1792, %v638
        %v2049 = vmul.f32 %v1793, %v639
        %v2050 = vmul.f32 %v1794, %v640
        %v2051 = vmul.f32 %v1795, %v641
        %v2052 = vmul.f32 %v1796, %v642
        %v2053 = vmul.f32 %v1797, %v643
        %v2054 = vmul.f32 %v1798, %v644
        %v2055 = vmul.f32 %v1799, %v645
        %v2056 = vmul.f32 %v1800, %v646
        %v2057 = vmul.f32 %v1801, %v647
        %v2058 = vmul.f32 %v1802, %v648
        %v2059 = vmul.f32 %v1803, %v649
        %v2060 = vmul.f32 %v1804, %v650
        %v2061 = vmul.f32 %v1805, %v651
        %v2062 = vmul.f32 %v1806, %v652
        %v2063 = vmul.f32 %v1807, %v653
        %v2064 = vmul.f32 %v1808, %v654
        %v2065 = vmul.f32 %v1809, %v655
        %v2066 = vmul.f32 %v1810, %v656
        %v2067 = vmul.f32 %v1811, %v657
        %v2068 = vmul.f32 %v1812, %v658
        %v2069 = vmul.f32 %v1813, %v659
        %v2070 = vmul.f32 %v1814, %v660
        %v2071 = vmul.f32 %v1815, %v661
        %v2072 = vmul.f32 %v1816, %v662
        %v2073 = vmul.f32 %v1817, %v663
        %v2074 = vmul.f32 %v1818, %v664
        %v2075 = vmul.f32 %v1819, %v665
        %2076 = vadd.xlane.f32.xlu0 %v1948
        %v2077 = vpop.xlane.xlu0 %2076
        %2078 = vadd.xlane.f32.xlu0 %v1949
        %v2079 = vpop.xlane.xlu0 %2078
        %2080 = vadd.xlane.f32.xlu0 %v1950
        %v2081 = vpop.xlane.xlu0 %2080
        %2082 = vadd.xlane.f32.xlu0 %v1951
        %v2083 = vpop.xlane.xlu0 %2082
        %2084 = vadd.xlane.f32.xlu0 %v1952
        %v2085 = vpop.xlane.xlu0 %2084
        %2086 = vadd.xlane.f32.xlu0 %v1953
        %v2087 = vpop.xlane.xlu0 %2086
        %2088 = vadd.xlane.f32.xlu0 %v1954
        %v2089 = vpop.xlane.xlu0 %2088
        %2090 = vadd.xlane.f32.xlu0 %v1955
        %v2091 = vpop.xlane.xlu0 %2090
        %2092 = vadd.xlane.f32.xlu0 %v1956
        %v2093 = vpop.xlane.xlu0 %2092
        %2094 = vadd.xlane.f32.xlu0 %v1957
        %v2095 = vpop.xlane.xlu0 %2094
        %2096 = vadd.xlane.f32.xlu0 %v1958
        %v2097 = vpop.xlane.xlu0 %2096
        %2098 = vadd.xlane.f32.xlu0 %v1959
        %v2099 = vpop.xlane.xlu0 %2098
        %2100 = vadd.xlane.f32.xlu0 %v1960
        %v2101 = vpop.xlane.xlu0 %2100
        %2102 = vadd.xlane.f32.xlu0 %v1961
        %v2103 = vpop.xlane.xlu0 %2102
        %2104 = vadd.xlane.f32.xlu0 %v1962
        %v2105 = vpop.xlane.xlu0 %2104
        %2106 = vadd.xlane.f32.xlu0 %v1963
        %v2107 = vpop.xlane.xlu0 %2106
        %2108 = vadd.xlane.f32.xlu0 %v1964
        %v2109 = vpop.xlane.xlu0 %2108
        %2110 = vadd.xlane.f32.xlu0 %v1965
        %v2111 = vpop.xlane.xlu0 %2110
        %2112 = vadd.xlane.f32.xlu0 %v1966
        %v2113 = vpop.xlane.xlu0 %2112
        %2114 = vadd.xlane.f32.xlu0 %v1967
        %v2115 = vpop.xlane.xlu0 %2114
        %2116 = vadd.xlane.f32.xlu0 %v1968
        %v2117 = vpop.xlane.xlu0 %2116
        %2118 = vadd.xlane.f32.xlu0 %v1969
        %v2119 = vpop.xlane.xlu0 %2118
        %2120 = vadd.xlane.f32.xlu0 %v1970
        %v2121 = vpop.xlane.xlu0 %2120
        %2122 = vadd.xlane.f32.xlu0 %v1971
        %v2123 = vpop.xlane.xlu0 %2122
        %2124 = vadd.xlane.f32.xlu0 %v1972
        %v2125 = vpop.xlane.xlu0 %2124
        %2126 = vadd.xlane.f32.xlu0 %v1973
        %v2127 = vpop.xlane.xlu0 %2126
        %2128 = vadd.xlane.f32.xlu0 %v1974
        %v2129 = vpop.xlane.xlu0 %2128
        %2130 = vadd.xlane.f32.xlu0 %v1975
        %v2131 = vpop.xlane.xlu0 %2130
        %2132 = vadd.xlane.f32.xlu0 %v1976
        %v2133 = vpop.xlane.xlu0 %2132
        %2134 = vadd.xlane.f32.xlu0 %v1977
        %v2135 = vpop.xlane.xlu0 %2134
        %2136 = vadd.xlane.f32.xlu0 %v1978
        %v2137 = vpop.xlane.xlu0 %2136
        %2138 = vadd.xlane.f32.xlu0 %v1979
        %v2139 = vpop.xlane.xlu0 %2138
        %2140 = vadd.xlane.f32.xlu0 %v1980
        %v2141 = vpop.xlane.xlu0 %2140
        %2142 = vadd.xlane.f32.xlu0 %v1981
        %v2143 = vpop.xlane.xlu0 %2142
        %2144 = vadd.xlane.f32.xlu0 %v1982
        %v2145 = vpop.xlane.xlu0 %2144
        %2146 = vadd.xlane.f32.xlu0 %v1983
        %v2147 = vpop.xlane.xlu0 %2146
        %2148 = vadd.xlane.f32.xlu0 %v1984
        %v2149 = vpop.xlane.xlu0 %2148
        %2150 = vadd.xlane.f32.xlu0 %v1985
        %v2151 = vpop.xlane.xlu0 %2150
        %2152 = vadd.xlane.f32.xlu0 %v1986
        %v2153 = vpop.xlane.xlu0 %2152
        %2154 = vadd.xlane.f32.xlu0 %v1987
        %v2155 = vpop.xlane.xlu0 %2154
        %2156 = vadd.xlane.f32.xlu0 %v1988
        %v2157 = vpop.xlane.xlu0 %2156
        %2158 = vadd.xlane.f32.xlu0 %v1989
        %v2159 = vpop.xlane.xlu0 %2158
        %2160 = vadd.xlane.f32.xlu0 %v1990
        %v2161 = vpop.xlane.xlu0 %2160
        %2162 = vadd.xlane.f32.xlu0 %v1991
        %v2163 = vpop.xlane.xlu0 %2162
        %2164 = vadd.xlane.f32.xlu0 %v1992
        %v2165 = vpop.xlane.xlu0 %2164
        %2166 = vadd.xlane.f32.xlu0 %v1993
        %v2167 = vpop.xlane.xlu0 %2166
        %2168 = vadd.xlane.f32.xlu0 %v1994
        %v2169 = vpop.xlane.xlu0 %2168
        %2170 = vadd.xlane.f32.xlu0 %v1995
        %v2171 = vpop.xlane.xlu0 %2170
        %2172 = vadd.xlane.f32.xlu0 %v1996
        %v2173 = vpop.xlane.xlu0 %2172
        %2174 = vadd.xlane.f32.xlu0 %v1997
        %v2175 = vpop.xlane.xlu0 %2174
        %2176 = vadd.xlane.f32.xlu0 %v1998
        %v2177 = vpop.xlane.xlu0 %2176
        %2178 = vadd.xlane.f32.xlu0 %v1999
        %v2179 = vpop.xlane.xlu0 %2178
        %2180 = vadd.xlane.f32.xlu0 %v2000
        %v2181 = vpop.xlane.xlu0 %2180
        %2182 = vadd.xlane.f32.xlu0 %v2001
        %v2183 = vpop.xlane.xlu0 %2182
        %2184 = vadd.xlane.f32.xlu0 %v2002
        %v2185 = vpop.xlane.xlu0 %2184
        %2186 = vadd.xlane.f32.xlu0 %v2003
        %v2187 = vpop.xlane.xlu0 %2186
        %2188 = vadd.xlane.f32.xlu0 %v2004
        %v2189 = vpop.xlane.xlu0 %2188
        %2190 = vadd.xlane.f32.xlu0 %v2005
        %v2191 = vpop.xlane.xlu0 %2190
        %2192 = vadd.xlane.f32.xlu0 %v2006
        %v2193 = vpop.xlane.xlu0 %2192
        %2194 = vadd.xlane.f32.xlu0 %v2007
        %v2195 = vpop.xlane.xlu0 %2194
        %2196 = vadd.xlane.f32.xlu0 %v2008
        %v2197 = vpop.xlane.xlu0 %2196
        %2198 = vadd.xlane.f32.xlu0 %v2009
        %v2199 = vpop.xlane.xlu0 %2198
        %2200 = vadd.xlane.f32.xlu0 %v2010
        %v2201 = vpop.xlane.xlu0 %2200
        %2202 = vadd.xlane.f32.xlu0 %v2011
        %v2203 = vpop.xlane.xlu0 %2202
        %2204 = vadd.xlane.f32.xlu0 %v2012
        %v2205 = vpop.xlane.xlu0 %2204
        %2206 = vadd.xlane.f32.xlu0 %v2013
        %v2207 = vpop.xlane.xlu0 %2206
        %2208 = vadd.xlane.f32.xlu0 %v2014
        %v2209 = vpop.xlane.xlu0 %2208
        %2210 = vadd.xlane.f32.xlu0 %v2015
        %v2211 = vpop.xlane.xlu0 %2210
        %2212 = vadd.xlane.f32.xlu0 %v2016
        %v2213 = vpop.xlane.xlu0 %2212
        %2214 = vadd.xlane.f32.xlu0 %v2017
        %v2215 = vpop.xlane.xlu0 %2214
        %2216 = vadd.xlane.f32.xlu0 %v2018
        %v2217 = vpop.xlane.xlu0 %2216
        %2218 = vadd.xlane.f32.xlu0 %v2019
        %v2219 = vpop.xlane.xlu0 %2218
        %2220 = vadd.xlane.f32.xlu0 %v2020
        %v2221 = vpop.xlane.xlu0 %2220
        %2222 = vadd.xlane.f32.xlu0 %v2021
        %v2223 = vpop.xlane.xlu0 %2222
        %2224 = vadd.xlane.f32.xlu0 %v2022
        %v2225 = vpop.xlane.xlu0 %2224
        %2226 = vadd.xlane.f32.xlu0 %v2023
        %v2227 = vpop.xlane.xlu0 %2226
        %2228 = vadd.xlane.f32.xlu0 %v2024
        %v2229 = vpop.xlane.xlu0 %2228
        %2230 = vadd.xlane.f32.xlu0 %v2025
        %v2231 = vpop.xlane.xlu0 %2230
        %2232 = vadd.xlane.f32.xlu0 %v2026
        %v2233 = vpop.xlane.xlu0 %2232
        %2234 = vadd.xlane.f32.xlu0 %v2027
        %v2235 = vpop.xlane.xlu0 %2234
        %2236 = vadd.xlane.f32.xlu0 %v2028
        %v2237 = vpop.xlane.xlu0 %2236
        %2238 = vadd.xlane.f32.xlu0 %v2029
        %v2239 = vpop.xlane.xlu0 %2238
        %2240 = vadd.xlane.f32.xlu0 %v2030
        %v2241 = vpop.xlane.xlu0 %2240
        %2242 = vadd.xlane.f32.xlu0 %v2031
        %v2243 = vpop.xlane.xlu0 %2242
        %2244 = vadd.xlane.f32.xlu0 %v2032
        %v2245 = vpop.xlane.xlu0 %2244
        %2246 = vadd.xlane.f32.xlu0 %v2033
        %v2247 = vpop.xlane.xlu0 %2246
        %2248 = vadd.xlane.f32.xlu0 %v2034
        %v2249 = vpop.xlane.xlu0 %2248
        %2250 = vadd.xlane.f32.xlu0 %v2035
        %v2251 = vpop.xlane.xlu0 %2250
        %2252 = vadd.xlane.f32.xlu0 %v2036
        %v2253 = vpop.xlane.xlu0 %2252
        %2254 = vadd.xlane.f32.xlu0 %v2037
        %v2255 = vpop.xlane.xlu0 %2254
        %2256 = vadd.xlane.f32.xlu0 %v2038
        %v2257 = vpop.xlane.xlu0 %2256
        %2258 = vadd.xlane.f32.xlu0 %v2039
        %v2259 = vpop.xlane.xlu0 %2258
        %2260 = vadd.xlane.f32.xlu0 %v2040
        %v2261 = vpop.xlane.xlu0 %2260
        %2262 = vadd.xlane.f32.xlu0 %v2041
        %v2263 = vpop.xlane.xlu0 %2262
        %2264 = vadd.xlane.f32.xlu0 %v2042
        %v2265 = vpop.xlane.xlu0 %2264
        %2266 = vadd.xlane.f32.xlu0 %v2043
        %v2267 = vpop.xlane.xlu0 %2266
        %2268 = vadd.xlane.f32.xlu0 %v2044
        %v2269 = vpop.xlane.xlu0 %2268
        %2270 = vadd.xlane.f32.xlu0 %v2045
        %v2271 = vpop.xlane.xlu0 %2270
        %2272 = vadd.xlane.f32.xlu0 %v2046
        %v2273 = vpop.xlane.xlu0 %2272
        %2274 = vadd.xlane.f32.xlu0 %v2047
        %v2275 = vpop.xlane.xlu0 %2274
        %2276 = vadd.xlane.f32.xlu0 %v2048
        %v2277 = vpop.xlane.xlu0 %2276
        %2278 = vadd.xlane.f32.xlu0 %v2049
        %v2279 = vpop.xlane.xlu0 %2278
        %2280 = vadd.xlane.f32.xlu0 %v2050
        %v2281 = vpop.xlane.xlu0 %2280
        %2282 = vadd.xlane.f32.xlu0 %v2051
        %v2283 = vpop.xlane.xlu0 %2282
        %2284 = vadd.xlane.f32.xlu0 %v2052
        %v2285 = vpop.xlane.xlu0 %2284
        %2286 = vadd.xlane.f32.xlu0 %v2053
        %v2287 = vpop.xlane.xlu0 %2286
        %2288 = vadd.xlane.f32.xlu0 %v2054
        %v2289 = vpop.xlane.xlu0 %2288
        %2290 = vadd.xlane.f32.xlu0 %v2055
        %v2291 = vpop.xlane.xlu0 %2290
        %2292 = vadd.xlane.f32.xlu0 %v2056
        %v2293 = vpop.xlane.xlu0 %2292
        %2294 = vadd.xlane.f32.xlu0 %v2057
        %v2295 = vpop.xlane.xlu0 %2294
        %2296 = vadd.xlane.f32.xlu0 %v2058
        %v2297 = vpop.xlane.xlu0 %2296
        %2298 = vadd.xlane.f32.xlu0 %v2059
        %v2299 = vpop.xlane.xlu0 %2298
        %2300 = vadd.xlane.f32.xlu0 %v2060
        %v2301 = vpop.xlane.xlu0 %2300
        %2302 = vadd.xlane.f32.xlu0 %v2061
        %v2303 = vpop.xlane.xlu0 %2302
        %2304 = vadd.xlane.f32.xlu0 %v2062
        %v2305 = vpop.xlane.xlu0 %2304
        %2306 = vadd.xlane.f32.xlu0 %v2063
        %v2307 = vpop.xlane.xlu0 %2306
        %2308 = vadd.xlane.f32.xlu0 %v2064
        %v2309 = vpop.xlane.xlu0 %2308
        %2310 = vadd.xlane.f32.xlu0 %v2065
        %v2311 = vpop.xlane.xlu0 %2310
        %2312 = vadd.xlane.f32.xlu0 %v2066
        %v2313 = vpop.xlane.xlu0 %2312
        %2314 = vadd.xlane.f32.xlu0 %v2067
        %v2315 = vpop.xlane.xlu0 %2314
        %2316 = vadd.xlane.f32.xlu0 %v2068
        %v2317 = vpop.xlane.xlu0 %2316
        %2318 = vadd.xlane.f32.xlu0 %v2069
        %v2319 = vpop.xlane.xlu0 %2318
        %2320 = vadd.xlane.f32.xlu0 %v2070
        %v2321 = vpop.xlane.xlu0 %2320
        %2322 = vadd.xlane.f32.xlu0 %v2071
        %v2323 = vpop.xlane.xlu0 %2322
        %2324 = vadd.xlane.f32.xlu0 %v2072
        %v2325 = vpop.xlane.xlu0 %2324
        %2326 = vadd.xlane.f32.xlu0 %v2073
        %v2327 = vpop.xlane.xlu0 %2326
        %2328 = vadd.xlane.f32.xlu0 %v2074
        %v2329 = vpop.xlane.xlu0 %2328
        %2330 = vadd.xlane.f32.xlu0 %v2075
        %v2331 = vpop.xlane.xlu0 %2330
        %v2332 = vadd.f32 %v1309, %v2077
        %v2333 = vadd.f32 %v1311, %v2079
        %v2334 = vadd.f32 %v1313, %v2081
        %v2335 = vadd.f32 %v1315, %v2083
        %v2336 = vadd.f32 %v1317, %v2085
        %v2337 = vadd.f32 %v1319, %v2087
        %v2338 = vadd.f32 %v1321, %v2089
        %v2339 = vadd.f32 %v1323, %v2091
        %v2340 = vadd.f32 %v1325, %v2093
        %v2341 = vadd.f32 %v1327, %v2095
        %v2342 = vadd.f32 %v1329, %v2097
        %v2343 = vadd.f32 %v1331, %v2099
        %v2344 = vadd.f32 %v1333, %v2101
        %v2345 = vadd.f32 %v1335, %v2103
        %v2346 = vadd.f32 %v1337, %v2105
        %v2347 = vadd.f32 %v1339, %v2107
        %v2348 = vadd.f32 %v1341, %v2109
        %v2349 = vadd.f32 %v1343, %v2111
        %v2350 = vadd.f32 %v1345, %v2113
        %v2351 = vadd.f32 %v1347, %v2115
        %v2352 = vadd.f32 %v1349, %v2117
        %v2353 = vadd.f32 %v1351, %v2119
        %v2354 = vadd.f32 %v1353, %v2121
        %v2355 = vadd.f32 %v1355, %v2123
        %v2356 = vadd.f32 %v1357, %v2125
        %v2357 = vadd.f32 %v1359, %v2127
        %v2358 = vadd.f32 %v1361, %v2129
        %v2359 = vadd.f32 %v1363, %v2131
        %v2360 = vadd.f32 %v1365, %v2133
        %v2361 = vadd.f32 %v1367, %v2135
        %v2362 = vadd.f32 %v1369, %v2137
        %v2363 = vadd.f32 %v1371, %v2139
        %v2364 = vadd.f32 %v1373, %v2141
        %v2365 = vadd.f32 %v1375, %v2143
        %v2366 = vadd.f32 %v1377, %v2145
        %v2367 = vadd.f32 %v1379, %v2147
        %v2368 = vadd.f32 %v1381, %v2149
        %v2369 = vadd.f32 %v1383, %v2151
        %v2370 = vadd.f32 %v1385, %v2153
        %v2371 = vadd.f32 %v1387, %v2155
        %v2372 = vadd.f32 %v1389, %v2157
        %v2373 = vadd.f32 %v1391, %v2159
        %v2374 = vadd.f32 %v1393, %v2161
        %v2375 = vadd.f32 %v1395, %v2163
        %v2376 = vadd.f32 %v1397, %v2165
        %v2377 = vadd.f32 %v1399, %v2167
        %v2378 = vadd.f32 %v1401, %v2169
        %v2379 = vadd.f32 %v1403, %v2171
        %v2380 = vadd.f32 %v1405, %v2173
        %v2381 = vadd.f32 %v1407, %v2175
        %v2382 = vadd.f32 %v1409, %v2177
        %v2383 = vadd.f32 %v1411, %v2179
        %v2384 = vadd.f32 %v1413, %v2181
        %v2385 = vadd.f32 %v1415, %v2183
        %v2386 = vadd.f32 %v1417, %v2185
        %v2387 = vadd.f32 %v1419, %v2187
        %v2388 = vadd.f32 %v1421, %v2189
        %v2389 = vadd.f32 %v1423, %v2191
        %v2390 = vadd.f32 %v1425, %v2193
        %v2391 = vadd.f32 %v1427, %v2195
        %v2392 = vadd.f32 %v1429, %v2197
        %v2393 = vadd.f32 %v1431, %v2199
        %v2394 = vadd.f32 %v1433, %v2201
        %v2395 = vadd.f32 %v1435, %v2203
        %v2396 = vadd.f32 %v1437, %v2205
        %v2397 = vadd.f32 %v1439, %v2207
        %v2398 = vadd.f32 %v1441, %v2209
        %v2399 = vadd.f32 %v1443, %v2211
        %v2400 = vadd.f32 %v1445, %v2213
        %v2401 = vadd.f32 %v1447, %v2215
        %v2402 = vadd.f32 %v1449, %v2217
        %v2403 = vadd.f32 %v1451, %v2219
        %v2404 = vadd.f32 %v1453, %v2221
        %v2405 = vadd.f32 %v1455, %v2223
        %v2406 = vadd.f32 %v1457, %v2225
        %v2407 = vadd.f32 %v1459, %v2227
        %v2408 = vadd.f32 %v1461, %v2229
        %v2409 = vadd.f32 %v1463, %v2231
        %v2410 = vadd.f32 %v1465, %v2233
        %v2411 = vadd.f32 %v1467, %v2235
        %v2412 = vadd.f32 %v1469, %v2237
        %v2413 = vadd.f32 %v1471, %v2239
        %v2414 = vadd.f32 %v1473, %v2241
        %v2415 = vadd.f32 %v1475, %v2243
        %v2416 = vadd.f32 %v1477, %v2245
        %v2417 = vadd.f32 %v1479, %v2247
        %v2418 = vadd.f32 %v1481, %v2249
        %v2419 = vadd.f32 %v1483, %v2251
        %v2420 = vadd.f32 %v1485, %v2253
        %v2421 = vadd.f32 %v1487, %v2255
        %v2422 = vadd.f32 %v1489, %v2257
        %v2423 = vadd.f32 %v1491, %v2259
        %v2424 = vadd.f32 %v1493, %v2261
        %v2425 = vadd.f32 %v1495, %v2263
        %v2426 = vadd.f32 %v1497, %v2265
        %v2427 = vadd.f32 %v1499, %v2267
        %v2428 = vadd.f32 %v1501, %v2269
        %v2429 = vadd.f32 %v1503, %v2271
        %v2430 = vadd.f32 %v1505, %v2273
        %v2431 = vadd.f32 %v1507, %v2275
        %v2432 = vadd.f32 %v1509, %v2277
        %v2433 = vadd.f32 %v1511, %v2279
        %v2434 = vadd.f32 %v1513, %v2281
        %v2435 = vadd.f32 %v1515, %v2283
        %v2436 = vadd.f32 %v1517, %v2285
        %v2437 = vadd.f32 %v1519, %v2287
        %v2438 = vadd.f32 %v1521, %v2289
        %v2439 = vadd.f32 %v1523, %v2291
        %v2440 = vadd.f32 %v1525, %v2293
        %v2441 = vadd.f32 %v1527, %v2295
        %v2442 = vadd.f32 %v1529, %v2297
        %v2443 = vadd.f32 %v1531, %v2299
        %v2444 = vadd.f32 %v1533, %v2301
        %v2445 = vadd.f32 %v1535, %v2303
        %v2446 = vadd.f32 %v1537, %v2305
        %v2447 = vadd.f32 %v1539, %v2307
        %v2448 = vadd.f32 %v1541, %v2309
        %v2449 = vadd.f32 %v1543, %v2311
        %v2450 = vadd.f32 %v1545, %v2313
        %v2451 = vadd.f32 %v1547, %v2315
        %v2452 = vadd.f32 %v1549, %v2317
        %v2453 = vadd.f32 %v1551, %v2319
        %v2454 = vadd.f32 %v1553, %v2321
        %v2455 = vadd.f32 %v1555, %v2323
        %v2456 = vadd.f32 %v1557, %v2325
        %v2457 = vadd.f32 %v1559, %v2327
        %v2458 = vadd.f32 %v1561, %v2329
        %v2459 = vadd.f32 %v1563, %v2331
        %vm2460 = vcmp.gt.f32.partialorder %v2332, 0.0
        %vm2461 = vcmp.gt.f32.partialorder %v2333, 0.0
        %vm2462 = vcmp.gt.f32.partialorder %v2334, 0.0
        %vm2463 = vcmp.gt.f32.partialorder %v2335, 0.0
        %vm2464 = vcmp.gt.f32.partialorder %v2336, 0.0
        %vm2465 = vcmp.gt.f32.partialorder %v2337, 0.0
        %vm2466 = vcmp.gt.f32.partialorder %v2338, 0.0
        %vm2467 = vcmp.gt.f32.partialorder %v2339, 0.0
        %vm2468 = vcmp.gt.f32.partialorder %v2340, 0.0
        %vm2469 = vcmp.gt.f32.partialorder %v2341, 0.0
        %vm2470 = vcmp.gt.f32.partialorder %v2342, 0.0
        %vm2471 = vcmp.gt.f32.partialorder %v2343, 0.0
        %vm2472 = vcmp.gt.f32.partialorder %v2344, 0.0
        %vm2473 = vcmp.gt.f32.partialorder %v2345, 0.0
        %vm2474 = vcmp.gt.f32.partialorder %v2346, 0.0
        %vm2475 = vcmp.gt.f32.partialorder %v2347, 0.0
        %vm2476 = vcmp.gt.f32.partialorder %v2348, 0.0
        %vm2477 = vcmp.gt.f32.partialorder %v2349, 0.0
        %vm2478 = vcmp.gt.f32.partialorder %v2350, 0.0
        %vm2479 = vcmp.gt.f32.partialorder %v2351, 0.0
        %vm2480 = vcmp.gt.f32.partialorder %v2352, 0.0
        %vm2481 = vcmp.gt.f32.partialorder %v2353, 0.0
        %vm2482 = vcmp.gt.f32.partialorder %v2354, 0.0
        %vm2483 = vcmp.gt.f32.partialorder %v2355, 0.0
        %vm2484 = vcmp.gt.f32.partialorder %v2356, 0.0
        %vm2485 = vcmp.gt.f32.partialorder %v2357, 0.0
        %vm2486 = vcmp.gt.f32.partialorder %v2358, 0.0
        %vm2487 = vcmp.gt.f32.partialorder %v2359, 0.0
        %vm2488 = vcmp.gt.f32.partialorder %v2360, 0.0
        %vm2489 = vcmp.gt.f32.partialorder %v2361, 0.0
        %vm2490 = vcmp.gt.f32.partialorder %v2362, 0.0
        %vm2491 = vcmp.gt.f32.partialorder %v2363, 0.0
        %vm2492 = vcmp.gt.f32.partialorder %v2364, 0.0
        %vm2493 = vcmp.gt.f32.partialorder %v2365, 0.0
        %vm2494 = vcmp.gt.f32.partialorder %v2366, 0.0
        %vm2495 = vcmp.gt.f32.partialorder %v2367, 0.0
        %vm2496 = vcmp.gt.f32.partialorder %v2368, 0.0
        %vm2497 = vcmp.gt.f32.partialorder %v2369, 0.0
        %vm2498 = vcmp.gt.f32.partialorder %v2370, 0.0
        %vm2499 = vcmp.gt.f32.partialorder %v2371, 0.0
        %vm2500 = vcmp.gt.f32.partialorder %v2372, 0.0
        %vm2501 = vcmp.gt.f32.partialorder %v2373, 0.0
        %vm2502 = vcmp.gt.f32.partialorder %v2374, 0.0
        %vm2503 = vcmp.gt.f32.partialorder %v2375, 0.0
        %vm2504 = vcmp.gt.f32.partialorder %v2376, 0.0
        %vm2505 = vcmp.gt.f32.partialorder %v2377, 0.0
        %vm2506 = vcmp.gt.f32.partialorder %v2378, 0.0
        %vm2507 = vcmp.gt.f32.partialorder %v2379, 0.0
        %vm2508 = vcmp.gt.f32.partialorder %v2380, 0.0
        %vm2509 = vcmp.gt.f32.partialorder %v2381, 0.0
        %vm2510 = vcmp.gt.f32.partialorder %v2382, 0.0
        %vm2511 = vcmp.gt.f32.partialorder %v2383, 0.0
        %vm2512 = vcmp.gt.f32.partialorder %v2384, 0.0
        %vm2513 = vcmp.gt.f32.partialorder %v2385, 0.0
        %vm2514 = vcmp.gt.f32.partialorder %v2386, 0.0
        %vm2515 = vcmp.gt.f32.partialorder %v2387, 0.0
        %vm2516 = vcmp.gt.f32.partialorder %v2388, 0.0
        %vm2517 = vcmp.gt.f32.partialorder %v2389, 0.0
        %vm2518 = vcmp.gt.f32.partialorder %v2390, 0.0
        %vm2519 = vcmp.gt.f32.partialorder %v2391, 0.0
        %vm2520 = vcmp.gt.f32.partialorder %v2392, 0.0
        %vm2521 = vcmp.gt.f32.partialorder %v2393, 0.0
        %vm2522 = vcmp.gt.f32.partialorder %v2394, 0.0
        %vm2523 = vcmp.gt.f32.partialorder %v2395, 0.0
        %vm2524 = vcmp.gt.f32.partialorder %v2396, 0.0
        %vm2525 = vcmp.gt.f32.partialorder %v2397, 0.0
        %vm2526 = vcmp.gt.f32.partialorder %v2398, 0.0
        %vm2527 = vcmp.gt.f32.partialorder %v2399, 0.0
        %vm2528 = vcmp.gt.f32.partialorder %v2400, 0.0
        %vm2529 = vcmp.gt.f32.partialorder %v2401, 0.0
        %vm2530 = vcmp.gt.f32.partialorder %v2402, 0.0
        %vm2531 = vcmp.gt.f32.partialorder %v2403, 0.0
        %vm2532 = vcmp.gt.f32.partialorder %v2404, 0.0
        %vm2533 = vcmp.gt.f32.partialorder %v2405, 0.0
        %vm2534 = vcmp.gt.f32.partialorder %v2406, 0.0
        %vm2535 = vcmp.gt.f32.partialorder %v2407, 0.0
        %vm2536 = vcmp.gt.f32.partialorder %v2408, 0.0
        %vm2537 = vcmp.gt.f32.partialorder %v2409, 0.0
        %vm2538 = vcmp.gt.f32.partialorder %v2410, 0.0
        %vm2539 = vcmp.gt.f32.partialorder %v2411, 0.0
        %vm2540 = vcmp.gt.f32.partialorder %v2412, 0.0
        %vm2541 = vcmp.gt.f32.partialorder %v2413, 0.0
        %vm2542 = vcmp.gt.f32.partialorder %v2414, 0.0
        %vm2543 = vcmp.gt.f32.partialorder %v2415, 0.0
        %vm2544 = vcmp.gt.f32.partialorder %v2416, 0.0
        %vm2545 = vcmp.gt.f32.partialorder %v2417, 0.0
        %vm2546 = vcmp.gt.f32.partialorder %v2418, 0.0
        %vm2547 = vcmp.gt.f32.partialorder %v2419, 0.0
        %vm2548 = vcmp.gt.f32.partialorder %v2420, 0.0
        %vm2549 = vcmp.gt.f32.partialorder %v2421, 0.0
        %vm2550 = vcmp.gt.f32.partialorder %v2422, 0.0
        %vm2551 = vcmp.gt.f32.partialorder %v2423, 0.0
        %vm2552 = vcmp.gt.f32.partialorder %v2424, 0.0
        %vm2553 = vcmp.gt.f32.partialorder %v2425, 0.0
        %vm2554 = vcmp.gt.f32.partialorder %v2426, 0.0
        %vm2555 = vcmp.gt.f32.partialorder %v2427, 0.0
        %vm2556 = vcmp.gt.f32.partialorder %v2428, 0.0
        %vm2557 = vcmp.gt.f32.partialorder %v2429, 0.0
        %vm2558 = vcmp.gt.f32.partialorder %v2430, 0.0
        %vm2559 = vcmp.gt.f32.partialorder %v2431, 0.0
        %vm2560 = vcmp.gt.f32.partialorder %v2432, 0.0
        %vm2561 = vcmp.gt.f32.partialorder %v2433, 0.0
        %vm2562 = vcmp.gt.f32.partialorder %v2434, 0.0
        %vm2563 = vcmp.gt.f32.partialorder %v2435, 0.0
        %vm2564 = vcmp.gt.f32.partialorder %v2436, 0.0
        %vm2565 = vcmp.gt.f32.partialorder %v2437, 0.0
        %vm2566 = vcmp.gt.f32.partialorder %v2438, 0.0
        %vm2567 = vcmp.gt.f32.partialorder %v2439, 0.0
        %vm2568 = vcmp.gt.f32.partialorder %v2440, 0.0
        %vm2569 = vcmp.gt.f32.partialorder %v2441, 0.0
        %vm2570 = vcmp.gt.f32.partialorder %v2442, 0.0
        %vm2571 = vcmp.gt.f32.partialorder %v2443, 0.0
        %vm2572 = vcmp.gt.f32.partialorder %v2444, 0.0
        %vm2573 = vcmp.gt.f32.partialorder %v2445, 0.0
        %vm2574 = vcmp.gt.f32.partialorder %v2446, 0.0
        %vm2575 = vcmp.gt.f32.partialorder %v2447, 0.0
        %vm2576 = vcmp.gt.f32.partialorder %v2448, 0.0
        %vm2577 = vcmp.gt.f32.partialorder %v2449, 0.0
        %vm2578 = vcmp.gt.f32.partialorder %v2450, 0.0
        %vm2579 = vcmp.gt.f32.partialorder %v2451, 0.0
        %vm2580 = vcmp.gt.f32.partialorder %v2452, 0.0
        %vm2581 = vcmp.gt.f32.partialorder %v2453, 0.0
        %vm2582 = vcmp.gt.f32.partialorder %v2454, 0.0
        %vm2583 = vcmp.gt.f32.partialorder %v2455, 0.0
        %vm2584 = vcmp.gt.f32.partialorder %v2456, 0.0
        %vm2585 = vcmp.gt.f32.partialorder %v2457, 0.0
        %vm2586 = vcmp.gt.f32.partialorder %v2458, 0.0
        %vm2587 = vcmp.gt.f32.partialorder %v2459, 0.0
        %v2588 = vmul.f32 %v2332, 0.2
        %v2589 = vmul.f32 %v2333, 0.2
        %v2590 = vmul.f32 %v2334, 0.2
        %v2591 = vmul.f32 %v2335, 0.2
        %v2592 = vmul.f32 %v2336, 0.2
        %v2593 = vmul.f32 %v2337, 0.2
        %v2594 = vmul.f32 %v2338, 0.2
        %v2595 = vmul.f32 %v2339, 0.2
        %v2596 = vmul.f32 %v2340, 0.2
        %v2597 = vmul.f32 %v2341, 0.2
        %v2598 = vmul.f32 %v2342, 0.2
        %v2599 = vmul.f32 %v2343, 0.2
        %v2600 = vmul.f32 %v2344, 0.2
        %v2601 = vmul.f32 %v2345, 0.2
        %v2602 = vmul.f32 %v2346, 0.2
        %v2603 = vmul.f32 %v2347, 0.2
        %v2604 = vmul.f32 %v2348, 0.2
        %v2605 = vmul.f32 %v2349, 0.2
        %v2606 = vmul.f32 %v2350, 0.2
        %v2607 = vmul.f32 %v2351, 0.2
        %v2608 = vmul.f32 %v2352, 0.2
        %v2609 = vmul.f32 %v2353, 0.2
        %v2610 = vmul.f32 %v2354, 0.2
        %v2611 = vmul.f32 %v2355, 0.2
        %v2612 = vmul.f32 %v2356, 0.2
        %v2613 = vmul.f32 %v2357, 0.2
        %v2614 = vmul.f32 %v2358, 0.2
        %v2615 = vmul.f32 %v2359, 0.2
        %v2616 = vmul.f32 %v2360, 0.2
        %v2617 = vmul.f32 %v2361, 0.2
        %v2618 = vmul.f32 %v2362, 0.2
        %v2619 = vmul.f32 %v2363, 0.2
        %v2620 = vmul.f32 %v2364, 0.2
        %v2621 = vmul.f32 %v2365, 0.2
        %v2622 = vmul.f32 %v2366, 0.2
        %v2623 = vmul.f32 %v2367, 0.2
        %v2624 = vmul.f32 %v2368, 0.2
        %v2625 = vmul.f32 %v2369, 0.2
        %v2626 = vmul.f32 %v2370, 0.2
        %v2627 = vmul.f32 %v2371, 0.2
        %v2628 = vmul.f32 %v2372, 0.2
        %v2629 = vmul.f32 %v2373, 0.2
        %v2630 = vmul.f32 %v2374, 0.2
        %v2631 = vmul.f32 %v2375, 0.2
        %v2632 = vmul.f32 %v2376, 0.2
        %v2633 = vmul.f32 %v2377, 0.2
        %v2634 = vmul.f32 %v2378, 0.2
        %v2635 = vmul.f32 %v2379, 0.2
        %v2636 = vmul.f32 %v2380, 0.2
        %v2637 = vmul.f32 %v2381, 0.2
        %v2638 = vmul.f32 %v2382, 0.2
        %v2639 = vmul.f32 %v2383, 0.2
        %v2640 = vmul.f32 %v2384, 0.2
        %v2641 = vmul.f32 %v2385, 0.2
        %v2642 = vmul.f32 %v2386, 0.2
        %v2643 = vmul.f32 %v2387, 0.2
        %v2644 = vmul.f32 %v2388, 0.2
        %v2645 = vmul.f32 %v2389, 0.2
        %v2646 = vmul.f32 %v2390, 0.2
        %v2647 = vmul.f32 %v2391, 0.2
        %v2648 = vmul.f32 %v2392, 0.2
        %v2649 = vmul.f32 %v2393, 0.2
        %v2650 = vmul.f32 %v2394, 0.2
        %v2651 = vmul.f32 %v2395, 0.2
        %v2652 = vmul.f32 %v2396, 0.2
        %v2653 = vmul.f32 %v2397, 0.2
        %v2654 = vmul.f32 %v2398, 0.2
        %v2655 = vmul.f32 %v2399, 0.2
        %v2656 = vmul.f32 %v2400, 0.2
        %v2657 = vmul.f32 %v2401, 0.2
        %v2658 = vmul.f32 %v2402, 0.2
        %v2659 = vmul.f32 %v2403, 0.2
        %v2660 = vmul.f32 %v2404, 0.2
        %v2661 = vmul.f32 %v2405, 0.2
        %v2662 = vmul.f32 %v2406, 0.2
        %v2663 = vmul.f32 %v2407, 0.2
        %v2664 = vmul.f32 %v2408, 0.2
        %v2665 = vmul.f32 %v2409, 0.2
        %v2666 = vmul.f32 %v2410, 0.2
        %v2667 = vmul.f32 %v2411, 0.2
        %v2668 = vmul.f32 %v2412, 0.2
        %v2669 = vmul.f32 %v2413, 0.2
        %v2670 = vmul.f32 %v2414, 0.2
        %v2671 = vmul.f32 %v2415, 0.2
        %v2672 = vmul.f32 %v2416, 0.2
        %v2673 = vmul.f32 %v2417, 0.2
        %v2674 = vmul.f32 %v2418, 0.2
        %v2675 = vmul.f32 %v2419, 0.2
        %v2676 = vmul.f32 %v2420, 0.2
        %v2677 = vmul.f32 %v2421, 0.2
        %v2678 = vmul.f32 %v2422, 0.2
        %v2679 = vmul.f32 %v2423, 0.2
        %v2680 = vmul.f32 %v2424, 0.2
        %v2681 = vmul.f32 %v2425, 0.2
        %v2682 = vmul.f32 %v2426, 0.2
        %v2683 = vmul.f32 %v2427, 0.2
        %v2684 = vmul.f32 %v2428, 0.2
        %v2685 = vmul.f32 %v2429, 0.2
        %v2686 = vmul.f32 %v2430, 0.2
        %v2687 = vmul.f32 %v2431, 0.2
        %v2688 = vmul.f32 %v2432, 0.2
        %v2689 = vmul.f32 %v2433, 0.2
        %v2690 = vmul.f32 %v2434, 0.2
        %v2691 = vmul.f32 %v2435, 0.2
        %v2692 = vmul.f32 %v2436, 0.2
        %v2693 = vmul.f32 %v2437, 0.2
        %v2694 = vmul.f32 %v2438, 0.2
        %v2695 = vmul.f32 %v2439, 0.2
        %v2696 = vmul.f32 %v2440, 0.2
        %v2697 = vmul.f32 %v2441, 0.2
        %v2698 = vmul.f32 %v2442, 0.2
        %v2699 = vmul.f32 %v2443, 0.2
        %v2700 = vmul.f32 %v2444, 0.2
        %v2701 = vmul.f32 %v2445, 0.2
        %v2702 = vmul.f32 %v2446, 0.2
        %v2703 = vmul.f32 %v2447, 0.2
        %v2704 = vmul.f32 %v2448, 0.2
        %v2705 = vmul.f32 %v2449, 0.2
        %v2706 = vmul.f32 %v2450, 0.2
        %v2707 = vmul.f32 %v2451, 0.2
        %v2708 = vmul.f32 %v2452, 0.2
        %v2709 = vmul.f32 %v2453, 0.2
        %v2710 = vmul.f32 %v2454, 0.2
        %v2711 = vmul.f32 %v2455, 0.2
        %v2712 = vmul.f32 %v2456, 0.2
        %v2713 = vmul.f32 %v2457, 0.2
        %v2714 = vmul.f32 %v2458, 0.2
        %v2715 = vmul.f32 %v2459, 0.2
        %v2716 = vsel %vm2460, %v2332, %v2588
        %v2717 = vsel %vm2461, %v2333, %v2589
        %v2718 = vsel %vm2462, %v2334, %v2590
        %v2719 = vsel %vm2463, %v2335, %v2591
        %v2720 = vsel %vm2464, %v2336, %v2592
        %v2721 = vsel %vm2465, %v2337, %v2593
        %v2722 = vsel %vm2466, %v2338, %v2594
        %v2723 = vsel %vm2467, %v2339, %v2595
        %v2724 = vsel %vm2468, %v2340, %v2596
        %v2725 = vsel %vm2469, %v2341, %v2597
        %v2726 = vsel %vm2470, %v2342, %v2598
        %v2727 = vsel %vm2471, %v2343, %v2599
        %v2728 = vsel %vm2472, %v2344, %v2600
        %v2729 = vsel %vm2473, %v2345, %v2601
        %v2730 = vsel %vm2474, %v2346, %v2602
        %v2731 = vsel %vm2475, %v2347, %v2603
        %v2732 = vsel %vm2476, %v2348, %v2604
        %v2733 = vsel %vm2477, %v2349, %v2605
        %v2734 = vsel %vm2478, %v2350, %v2606
        %v2735 = vsel %vm2479, %v2351, %v2607
        %v2736 = vsel %vm2480, %v2352, %v2608
        %v2737 = vsel %vm2481, %v2353, %v2609
        %v2738 = vsel %vm2482, %v2354, %v2610
        %v2739 = vsel %vm2483, %v2355, %v2611
        %v2740 = vsel %vm2484, %v2356, %v2612
        %v2741 = vsel %vm2485, %v2357, %v2613
        %v2742 = vsel %vm2486, %v2358, %v2614
        %v2743 = vsel %vm2487, %v2359, %v2615
        %v2744 = vsel %vm2488, %v2360, %v2616
        %v2745 = vsel %vm2489, %v2361, %v2617
        %v2746 = vsel %vm2490, %v2362, %v2618
        %v2747 = vsel %vm2491, %v2363, %v2619
        %v2748 = vsel %vm2492, %v2364, %v2620
        %v2749 = vsel %vm2493, %v2365, %v2621
        %v2750 = vsel %vm2494, %v2366, %v2622
        %v2751 = vsel %vm2495, %v2367, %v2623
        %v2752 = vsel %vm2496, %v2368, %v2624
        %v2753 = vsel %vm2497, %v2369, %v2625
        %v2754 = vsel %vm2498, %v2370, %v2626
        %v2755 = vsel %vm2499, %v2371, %v2627
        %v2756 = vsel %vm2500, %v2372, %v2628
        %v2757 = vsel %vm2501, %v2373, %v2629
        %v2758 = vsel %vm2502, %v2374, %v2630
        %v2759 = vsel %vm2503, %v2375, %v2631
        %v2760 = vsel %vm2504, %v2376, %v2632
        %v2761 = vsel %vm2505, %v2377, %v2633
        %v2762 = vsel %vm2506, %v2378, %v2634
        %v2763 = vsel %vm2507, %v2379, %v2635
        %v2764 = vsel %vm2508, %v2380, %v2636
        %v2765 = vsel %vm2509, %v2381, %v2637
        %v2766 = vsel %vm2510, %v2382, %v2638
        %v2767 = vsel %vm2511, %v2383, %v2639
        %v2768 = vsel %vm2512, %v2384, %v2640
        %v2769 = vsel %vm2513, %v2385, %v2641
        %v2770 = vsel %vm2514, %v2386, %v2642
        %v2771 = vsel %vm2515, %v2387, %v2643
        %v2772 = vsel %vm2516, %v2388, %v2644
        %v2773 = vsel %vm2517, %v2389, %v2645
        %v2774 = vsel %vm2518, %v2390, %v2646
        %v2775 = vsel %vm2519, %v2391, %v2647
        %v2776 = vsel %vm2520, %v2392, %v2648
        %v2777 = vsel %vm2521, %v2393, %v2649
        %v2778 = vsel %vm2522, %v2394, %v2650
        %v2779 = vsel %vm2523, %v2395, %v2651
        %v2780 = vsel %vm2524, %v2396, %v2652
        %v2781 = vsel %vm2525, %v2397, %v2653
        %v2782 = vsel %vm2526, %v2398, %v2654
        %v2783 = vsel %vm2527, %v2399, %v2655
        %v2784 = vsel %vm2528, %v2400, %v2656
        %v2785 = vsel %vm2529, %v2401, %v2657
        %v2786 = vsel %vm2530, %v2402, %v2658
        %v2787 = vsel %vm2531, %v2403, %v2659
        %v2788 = vsel %vm2532, %v2404, %v2660
        %v2789 = vsel %vm2533, %v2405, %v2661
        %v2790 = vsel %vm2534, %v2406, %v2662
        %v2791 = vsel %vm2535, %v2407, %v2663
        %v2792 = vsel %vm2536, %v2408, %v2664
        %v2793 = vsel %vm2537, %v2409, %v2665
        %v2794 = vsel %vm2538, %v2410, %v2666
        %v2795 = vsel %vm2539, %v2411, %v2667
        %v2796 = vsel %vm2540, %v2412, %v2668
        %v2797 = vsel %vm2541, %v2413, %v2669
        %v2798 = vsel %vm2542, %v2414, %v2670
        %v2799 = vsel %vm2543, %v2415, %v2671
        %v2800 = vsel %vm2544, %v2416, %v2672
        %v2801 = vsel %vm2545, %v2417, %v2673
        %v2802 = vsel %vm2546, %v2418, %v2674
        %v2803 = vsel %vm2547, %v2419, %v2675
        %v2804 = vsel %vm2548, %v2420, %v2676
        %v2805 = vsel %vm2549, %v2421, %v2677
        %v2806 = vsel %vm2550, %v2422, %v2678
        %v2807 = vsel %vm2551, %v2423, %v2679
        %v2808 = vsel %vm2552, %v2424, %v2680
        %v2809 = vsel %vm2553, %v2425, %v2681
        %v2810 = vsel %vm2554, %v2426, %v2682
        %v2811 = vsel %vm2555, %v2427, %v2683
        %v2812 = vsel %vm2556, %v2428, %v2684
        %v2813 = vsel %vm2557, %v2429, %v2685
        %v2814 = vsel %vm2558, %v2430, %v2686
        %v2815 = vsel %vm2559, %v2431, %v2687
        %v2816 = vsel %vm2560, %v2432, %v2688
        %v2817 = vsel %vm2561, %v2433, %v2689
        %v2818 = vsel %vm2562, %v2434, %v2690
        %v2819 = vsel %vm2563, %v2435, %v2691
        %v2820 = vsel %vm2564, %v2436, %v2692
        %v2821 = vsel %vm2565, %v2437, %v2693
        %v2822 = vsel %vm2566, %v2438, %v2694
        %v2823 = vsel %vm2567, %v2439, %v2695
        %v2824 = vsel %vm2568, %v2440, %v2696
        %v2825 = vsel %vm2569, %v2441, %v2697
        %v2826 = vsel %vm2570, %v2442, %v2698
        %v2827 = vsel %vm2571, %v2443, %v2699
        %v2828 = vsel %vm2572, %v2444, %v2700
        %v2829 = vsel %vm2573, %v2445, %v2701
        %v2830 = vsel %vm2574, %v2446, %v2702
        %v2831 = vsel %vm2575, %v2447, %v2703
        %v2832 = vsel %vm2576, %v2448, %v2704
        %v2833 = vsel %vm2577, %v2449, %v2705
        %v2834 = vsel %vm2578, %v2450, %v2706
        %v2835 = vsel %vm2579, %v2451, %v2707
        %v2836 = vsel %vm2580, %v2452, %v2708
        %v2837 = vsel %vm2581, %v2453, %v2709
        %v2838 = vsel %vm2582, %v2454, %v2710
        %v2839 = vsel %vm2583, %v2455, %v2711
        %v2840 = vsel %vm2584, %v2456, %v2712
        %v2841 = vsel %vm2585, %v2457, %v2713
        %v2842 = vsel %vm2586, %v2458, %v2714
        %v2843 = vsel %vm2587, %v2459, %v2715
        %vm2844 = vcmp.gt.f32.partialorder %v666, 0.0
        %vm2845 = vcmp.gt.f32.partialorder %v667, 0.0
        %vm2846 = vcmp.gt.f32.partialorder %v668, 0.0
        %vm2847 = vcmp.gt.f32.partialorder %v669, 0.0
        %vm2848 = vcmp.gt.f32.partialorder %v670, 0.0
        %vm2849 = vcmp.gt.f32.partialorder %v671, 0.0
        %vm2850 = vcmp.gt.f32.partialorder %v672, 0.0
        %vm2851 = vcmp.gt.f32.partialorder %v673, 0.0
        %vm2852 = vcmp.gt.f32.partialorder %v674, 0.0
        %vm2853 = vcmp.gt.f32.partialorder %v675, 0.0
        %vm2854 = vcmp.gt.f32.partialorder %v676, 0.0
        %vm2855 = vcmp.gt.f32.partialorder %v677, 0.0
        %vm2856 = vcmp.gt.f32.partialorder %v678, 0.0
        %vm2857 = vcmp.gt.f32.partialorder %v679, 0.0
        %vm2858 = vcmp.gt.f32.partialorder %v680, 0.0
        %vm2859 = vcmp.gt.f32.partialorder %v681, 0.0
        %v2988 = vlaneseq
        %v2989 = vand.u32 %v2988, 127
        %v2990 = vperm.slane %v2716, %v2989
        %v2991 = vperm.slane %v2717, %v2989
        %v2992 = vperm.slane %v2718, %v2989
        %v2993 = vperm.slane %v2719, %v2989
        %v2994 = vperm.slane %v2720, %v2989
        %v2995 = vperm.slane %v2721, %v2989
        %v2996 = vperm.slane %v2722, %v2989
        %v2997 = vperm.slane %v2723, %v2989
        %v2998 = vperm.slane %v2724, %v2989
        %v2999 = vperm.slane %v2725, %v2989
        %v3000 = vperm.slane %v2726, %v2989
        %v3001 = vperm.slane %v2727, %v2989
        %v3002 = vperm.slane %v2728, %v2989
        %v3003 = vperm.slane %v2729, %v2989
        %v3004 = vperm.slane %v2730, %v2989
        %v3005 = vperm.slane %v2731, %v2989
        %v3006 = vperm.slane %v2732, %v2989
        %v3007 = vperm.slane %v2733, %v2989
        %v3008 = vperm.slane %v2734, %v2989
        %v3009 = vperm.slane %v2735, %v2989
        %v3010 = vperm.slane %v2736, %v2989
        %v3011 = vperm.slane %v2737, %v2989
        %v3012 = vperm.slane %v2738, %v2989
        %v3013 = vperm.slane %v2739, %v2989
        %v3014 = vperm.slane %v2740, %v2989
        %v3015 = vperm.slane %v2741, %v2989
        %v3016 = vperm.slane %v2742, %v2989
        %v3017 = vperm.slane %v2743, %v2989
        %v3018 = vperm.slane %v2744, %v2989
        %v3019 = vperm.slane %v2745, %v2989
        %v3020 = vperm.slane %v2746, %v2989
        %v3021 = vperm.slane %v2747, %v2989
        %v3022 = vperm.slane %v2748, %v2989
        %v3023 = vperm.slane %v2749, %v2989
        %v3024 = vperm.slane %v2750, %v2989
        %v3025 = vperm.slane %v2751, %v2989
        %v3026 = vperm.slane %v2752, %v2989
        %v3027 = vperm.slane %v2753, %v2989
        %v3028 = vperm.slane %v2754, %v2989
        %v3029 = vperm.slane %v2755, %v2989
        %v3030 = vperm.slane %v2756, %v2989
        %v3031 = vperm.slane %v2757, %v2989
        %v3032 = vperm.slane %v2758, %v2989
        %v3033 = vperm.slane %v2759, %v2989
        %v3034 = vperm.slane %v2760, %v2989
        %v3035 = vperm.slane %v2761, %v2989
        %v3036 = vperm.slane %v2762, %v2989
        %v3037 = vperm.slane %v2763, %v2989
        %v3038 = vperm.slane %v2764, %v2989
        %v3039 = vperm.slane %v2765, %v2989
        %v3040 = vperm.slane %v2766, %v2989
        %v3041 = vperm.slane %v2767, %v2989
        %v3042 = vperm.slane %v2768, %v2989
        %v3043 = vperm.slane %v2769, %v2989
        %v3044 = vperm.slane %v2770, %v2989
        %v3045 = vperm.slane %v2771, %v2989
        %v3046 = vperm.slane %v2772, %v2989
        %v3047 = vperm.slane %v2773, %v2989
        %v3048 = vperm.slane %v2774, %v2989
        %v3049 = vperm.slane %v2775, %v2989
        %v3050 = vperm.slane %v2776, %v2989
        %v3051 = vperm.slane %v2777, %v2989
        %v3052 = vperm.slane %v2778, %v2989
        %v3053 = vperm.slane %v2779, %v2989
        %v3054 = vperm.slane %v2780, %v2989
        %v3055 = vperm.slane %v2781, %v2989
        %v3056 = vperm.slane %v2782, %v2989
        %v3057 = vperm.slane %v2783, %v2989
        %v3058 = vperm.slane %v2784, %v2989
        %v3059 = vperm.slane %v2785, %v2989
        %v3060 = vperm.slane %v2786, %v2989
        %v3061 = vperm.slane %v2787, %v2989
        %v3062 = vperm.slane %v2788, %v2989
        %v3063 = vperm.slane %v2789, %v2989
        %v3064 = vperm.slane %v2790, %v2989
        %v3065 = vperm.slane %v2791, %v2989
        %v3066 = vperm.slane %v2792, %v2989
        %v3067 = vperm.slane %v2793, %v2989
        %v3068 = vperm.slane %v2794, %v2989
        %v3069 = vperm.slane %v2795, %v2989
        %v3070 = vperm.slane %v2796, %v2989
        %v3071 = vperm.slane %v2797, %v2989
        %v3072 = vperm.slane %v2798, %v2989
        %v3073 = vperm.slane %v2799, %v2989
        %v3074 = vperm.slane %v2800, %v2989
        %v3075 = vperm.slane %v2801, %v2989
        %v3076 = vperm.slane %v2802, %v2989
        %v3077 = vperm.slane %v2803, %v2989
        %v3078 = vperm.slane %v2804, %v2989
        %v3079 = vperm.slane %v2805, %v2989
        %v3080 = vperm.slane %v2806, %v2989
        %v3081 = vperm.slane %v2807, %v2989
        %v3082 = vperm.slane %v2808, %v2989
        %v3083 = vperm.slane %v2809, %v2989
        %v3084 = vperm.slane %v2810, %v2989
        %v3085 = vperm.slane %v2811, %v2989
        %v3086 = vperm.slane %v2812, %v2989
        %v3087 = vperm.slane %v2813, %v2989
        %v3088 = vperm.slane %v2814, %v2989
        %v3089 = vperm.slane %v2815, %v2989
        %v3090 = vperm.slane %v2816, %v2989
        %v3091 = vperm.slane %v2817, %v2989
        %v3092 = vperm.slane %v2818, %v2989
        %v3093 = vperm.slane %v2819, %v2989
        %v3094 = vperm.slane %v2820, %v2989
        %v3095 = vperm.slane %v2821, %v2989
        %v3096 = vperm.slane %v2822, %v2989
        %v3097 = vperm.slane %v2823, %v2989
        %v3098 = vperm.slane %v2824, %v2989
        %v3099 = vperm.slane %v2825, %v2989
        %v3100 = vperm.slane %v2826, %v2989
        %v3101 = vperm.slane %v2827, %v2989
        %v3102 = vperm.slane %v2828, %v2989
        %v3103 = vperm.slane %v2829, %v2989
        %v3104 = vperm.slane %v2830, %v2989
        %v3105 = vperm.slane %v2831, %v2989
        %v3106 = vperm.slane %v2832, %v2989
        %v3107 = vperm.slane %v2833, %v2989
        %v3108 = vperm.slane %v2834, %v2989
        %v3109 = vperm.slane %v2835, %v2989
        %v3110 = vperm.slane %v2836, %v2989
        %v3111 = vperm.slane %v2837, %v2989
        %v3112 = vperm.slane %v2838, %v2989
        %v3113 = vperm.slane %v2839, %v2989
        %v3114 = vperm.slane %v2840, %v2989
        %v3115 = vperm.slane %v2841, %v2989
        %v3116 = vperm.slane %v2842, %v2989
        %v3117 = vperm.slane %v2843, %v2989
        %vm3118 = vcmask 1041409
        %v3119 = vsel %vm3118, %v2991, %v2990
        %vm3120 = vcmask 1042434
        %v3121 = vsel %vm3120, %v2992, %v3119
        %vm3122 = vcmask 1043459
        %v3123 = vsel %vm3122, %v2993, %v3121
        %vm3124 = vcmask 1044484
        %v3125 = vsel %vm3124, %v2994, %v3123
        %vm3126 = vcmask 1045509
        %v3127 = vsel %vm3126, %v2995, %v3125
        %vm3128 = vcmask 1046534
        %v3129 = vsel %vm3128, %v2996, %v3127
        %vm3130 = vcmask 1047559
        %v3131 = vsel %vm3130, %v2997, %v3129
        %v3132 = vsel %vm3118, %v2999, %v2998
        %v3133 = vsel %vm3120, %v3000, %v3132
        %v3134 = vsel %vm3122, %v3001, %v3133
        %v3135 = vsel %vm3124, %v3002, %v3134
        %v3136 = vsel %vm3126, %v3003, %v3135
        %v3137 = vsel %vm3128, %v3004, %v3136
        %v3138 = vsel %vm3130, %v3005, %v3137
        %v3139 = vsel %vm3118, %v3007, %v3006
        %v3140 = vsel %vm3120, %v3008, %v3139
        %v3141 = vsel %vm3122, %v3009, %v3140
        %v3142 = vsel %vm3124, %v3010, %v3141
        %v3143 = vsel %vm3126, %v3011, %v3142
        %v3144 = vsel %vm3128, %v3012, %v3143
        %v3145 = vsel %vm3130, %v3013, %v3144
        %v3146 = vsel %vm3118, %v3015, %v3014
        %v3147 = vsel %vm3120, %v3016, %v3146
        %v3148 = vsel %vm3122, %v3017, %v3147
        %v3149 = vsel %vm3124, %v3018, %v3148
        %v3150 = vsel %vm3126, %v3019, %v3149
        %v3151 = vsel %vm3128, %v3020, %v3150
        %v3152 = vsel %vm3130, %v3021, %v3151
        %v3153 = vsel %vm3118, %v3023, %v3022
        %v3154 = vsel %vm3120, %v3024, %v3153
        %v3155 = vsel %vm3122, %v3025, %v3154
        %v3156 = vsel %vm3124, %v3026, %v3155
        %v3157 = vsel %vm3126, %v3027, %v3156
        %v3158 = vsel %vm3128, %v3028, %v3157
        %v3159 = vsel %vm3130, %v3029, %v3158
        %v3160 = vsel %vm3118, %v3031, %v3030
        %v3161 = vsel %vm3120, %v3032, %v3160
        %v3162 = vsel %vm3122, %v3033, %v3161
        %v3163 = vsel %vm3124, %v3034, %v3162
        %v3164 = vsel %vm3126, %v3035, %v3163
        %v3165 = vsel %vm3128, %v3036, %v3164
        %v3166 = vsel %vm3130, %v3037, %v3165
        %v3167 = vsel %vm3118, %v3039, %v3038
        %v3168 = vsel %vm3120, %v3040, %v3167
        %v3169 = vsel %vm3122, %v3041, %v3168
        %v3170 = vsel %vm3124, %v3042, %v3169
        %v3171 = vsel %vm3126, %v3043, %v3170
        %v3172 = vsel %vm3128, %v3044, %v3171
        %v3173 = vsel %vm3130, %v3045, %v3172
        %v3174 = vsel %vm3118, %v3047, %v3046
        %v3175 = vsel %vm3120, %v3048, %v3174
        %v3176 = vsel %vm3122, %v3049, %v3175
        %v3177 = vsel %vm3124, %v3050, %v3176
        %v3178 = vsel %vm3126, %v3051, %v3177
        %v3179 = vsel %vm3128, %v3052, %v3178
        %v3180 = vsel %vm3130, %v3053, %v3179
        %v3181 = vsel %vm3118, %v3055, %v3054
        %v3182 = vsel %vm3120, %v3056, %v3181
        %v3183 = vsel %vm3122, %v3057, %v3182
        %v3184 = vsel %vm3124, %v3058, %v3183
        %v3185 = vsel %vm3126, %v3059, %v3184
        %v3186 = vsel %vm3128, %v3060, %v3185
        %v3187 = vsel %vm3130, %v3061, %v3186
        %v3188 = vsel %vm3118, %v3063, %v3062
        %v3189 = vsel %vm3120, %v3064, %v3188
        %v3190 = vsel %vm3122, %v3065, %v3189
        %v3191 = vsel %vm3124, %v3066, %v3190
        %v3192 = vsel %vm3126, %v3067, %v3191
        %v3193 = vsel %vm3128, %v3068, %v3192
        %v3194 = vsel %vm3130, %v3069, %v3193
        %v3195 = vsel %vm3118, %v3071, %v3070
        %v3196 = vsel %vm3120, %v3072, %v3195
        %v3197 = vsel %vm3122, %v3073, %v3196
        %v3198 = vsel %vm3124, %v3074, %v3197
        %v3199 = vsel %vm3126, %v3075, %v3198
        %v3200 = vsel %vm3128, %v3076, %v3199
        %v3201 = vsel %vm3130, %v3077, %v3200
        %v3202 = vsel %vm3118, %v3079, %v3078
        %v3203 = vsel %vm3120, %v3080, %v3202
        %v3204 = vsel %vm3122, %v3081, %v3203
        %v3205 = vsel %vm3124, %v3082, %v3204
        %v3206 = vsel %vm3126, %v3083, %v3205
        %v3207 = vsel %vm3128, %v3084, %v3206
        %v3208 = vsel %vm3130, %v3085, %v3207
        %v3209 = vsel %vm3118, %v3087, %v3086
        %v3210 = vsel %vm3120, %v3088, %v3209
        %v3211 = vsel %vm3122, %v3089, %v3210
        %v3212 = vsel %vm3124, %v3090, %v3211
        %v3213 = vsel %vm3126, %v3091, %v3212
        %v3214 = vsel %vm3128, %v3092, %v3213
        %v3215 = vsel %vm3130, %v3093, %v3214
        %v3216 = vsel %vm3118, %v3095, %v3094
        %v3217 = vsel %vm3120, %v3096, %v3216
        %v3218 = vsel %vm3122, %v3097, %v3217
        %v3219 = vsel %vm3124, %v3098, %v3218
        %v3220 = vsel %vm3126, %v3099, %v3219
        %v3221 = vsel %vm3128, %v3100, %v3220
        %v3222 = vsel %vm3130, %v3101, %v3221
        %v3223 = vsel %vm3118, %v3103, %v3102
        %v3224 = vsel %vm3120, %v3104, %v3223
        %v3225 = vsel %vm3122, %v3105, %v3224
        %v3226 = vsel %vm3124, %v3106, %v3225
        %v3227 = vsel %vm3126, %v3107, %v3226
        %v3228 = vsel %vm3128, %v3108, %v3227
        %v3229 = vsel %vm3130, %v3109, %v3228
        %v3230 = vsel %vm3118, %v3111, %v3110
        %v3231 = vsel %vm3120, %v3112, %v3230
        %v3232 = vsel %vm3122, %v3113, %v3231
        %v3233 = vsel %vm3124, %v3114, %v3232
        %v3234 = vsel %vm3126, %v3115, %v3233
        %v3235 = vsel %vm3128, %v3116, %v3234
        %v3236 = vsel %vm3130, %v3117, %v3235
        %v3253 = vsel %vm2844, %v3131, -9e+15
        %v3254 = vsel %vm2845, %v3138, -9e+15
        %v3255 = vsel %vm2846, %v3145, -9e+15
        %v3256 = vsel %vm2847, %v3152, -9e+15
        %v3257 = vsel %vm2848, %v3159, -9e+15
        %v3258 = vsel %vm2849, %v3166, -9e+15
        %v3259 = vsel %vm2850, %v3173, -9e+15
        %v3260 = vsel %vm2851, %v3180, -9e+15
        %v3261 = vsel %vm2852, %v3187, -9e+15
        %v3262 = vsel %vm2853, %v3194, -9e+15
        %v3263 = vsel %vm2854, %v3201, -9e+15
        %v3264 = vsel %vm2855, %v3208, -9e+15
        %v3265 = vsel %vm2856, %v3215, -9e+15
        %v3266 = vsel %vm2857, %v3222, -9e+15
        %v3267 = vsel %vm2858, %v3229, -9e+15
        %v3268 = vsel %vm2859, %v3236, -9e+15
        %vm3269 = vcmask 64512
        %v3270 = vsel %vm3269, %v3253, -inf
        %3271 = vmax.xlane.f32.xlu0 %v3270
        %v3272 = vpop.xlane.xlu0 %3271
        %v3273 = vsel %vm3269, %v3254, -inf
        %3274 = vmax.xlane.f32.xlu0 %v3273
        %v3275 = vpop.xlane.xlu0 %3274
        %v3276 = vsel %vm3269, %v3255, -inf
        %3277 = vmax.xlane.f32.xlu0 %v3276
        %v3278 = vpop.xlane.xlu0 %3277
        %v3279 = vsel %vm3269, %v3256, -inf
        %3280 = vmax.xlane.f32.xlu0 %v3279
        %v3281 = vpop.xlane.xlu0 %3280
        %v3282 = vsel %vm3269, %v3257, -inf
        %3283 = vmax.xlane.f32.xlu0 %v3282
        %v3284 = vpop.xlane.xlu0 %3283
        %v3285 = vsel %vm3269, %v3258, -inf
        %3286 = vmax.xlane.f32.xlu0 %v3285
        %v3287 = vpop.xlane.xlu0 %3286
        %v3288 = vsel %vm3269, %v3259, -inf
        %3289 = vmax.xlane.f32.xlu0 %v3288
        %v3290 = vpop.xlane.xlu0 %3289
        %v3291 = vsel %vm3269, %v3260, -inf
        %3292 = vmax.xlane.f32.xlu0 %v3291
        %v3293 = vpop.xlane.xlu0 %3292
        %v3294 = vsel %vm3269, %v3261, -inf
        %3295 = vmax.xlane.f32.xlu0 %v3294
        %v3296 = vpop.xlane.xlu0 %3295
        %v3297 = vsel %vm3269, %v3262, -inf
        %3298 = vmax.xlane.f32.xlu0 %v3297
        %v3299 = vpop.xlane.xlu0 %3298
        %v3300 = vsel %vm3269, %v3263, -inf
        %3301 = vmax.xlane.f32.xlu0 %v3300
        %v3302 = vpop.xlane.xlu0 %3301
        %v3303 = vsel %vm3269, %v3264, -inf
        %3304 = vmax.xlane.f32.xlu0 %v3303
        %v3305 = vpop.xlane.xlu0 %3304
        %v3306 = vsel %vm3269, %v3265, -inf
        %3307 = vmax.xlane.f32.xlu0 %v3306
        %v3308 = vpop.xlane.xlu0 %3307
        %v3309 = vsel %vm3269, %v3266, -inf
        %3310 = vmax.xlane.f32.xlu0 %v3309
        %v3311 = vpop.xlane.xlu0 %3310
        %v3312 = vsel %vm3269, %v3267, -inf
        %3313 = vmax.xlane.f32.xlu0 %v3312
        %v3314 = vpop.xlane.xlu0 %3313
        %v3315 = vsel %vm3269, %v3268, -inf
        %3316 = vmax.xlane.f32.xlu0 %v3315
        %v3317 = vpop.xlane.xlu0 %3316
        %v3318 = vsub.f32 %v3253, %v3272
        %v3319 = vsub.f32 %v3254, %v3275
        %v3320 = vsub.f32 %v3255, %v3278
        %v3321 = vsub.f32 %v3256, %v3281
        %v3322 = vsub.f32 %v3257, %v3284
        %v3323 = vsub.f32 %v3258, %v3287
        %v3324 = vsub.f32 %v3259, %v3290
        %v3325 = vsub.f32 %v3260, %v3293
        %v3326 = vsub.f32 %v3261, %v3296
        %v3327 = vsub.f32 %v3262, %v3299
        %v3328 = vsub.f32 %v3263, %v3302
        %v3329 = vsub.f32 %v3264, %v3305
        %v3330 = vsub.f32 %v3265, %v3308
        %v3331 = vsub.f32 %v3266, %v3311
        %v3332 = vsub.f32 %v3267, %v3314
        %v3333 = vsub.f32 %v3268, %v3317
        %v3334 = vmul.f32 %v3318, 1.442695
        %v3335 = vpow.pop %v3334
        %v3336 = vmul.f32 %v3319, 1.442695
        %v3337 = vpow.pop %v3336
        %v3338 = vmul.f32 %v3320, 1.442695
        %v3339 = vpow.pop %v3338
        %v3340 = vmul.f32 %v3321, 1.442695
        %v3341 = vpow.pop %v3340
        %v3342 = vmul.f32 %v3322, 1.442695
        %v3343 = vpow.pop %v3342
        %v3344 = vmul.f32 %v3323, 1.442695
        %v3345 = vpow.pop %v3344
        %v3346 = vmul.f32 %v3324, 1.442695
        %v3347 = vpow.pop %v3346
        %v3348 = vmul.f32 %v3325, 1.442695
        %v3349 = vpow.pop %v3348
        %v3350 = vmul.f32 %v3326, 1.442695
        %v3351 = vpow.pop %v3350
        %v3352 = vmul.f32 %v3327, 1.442695
        %v3353 = vpow.pop %v3352
        %v3354 = vmul.f32 %v3328, 1.442695
        %v3355 = vpow.pop %v3354
        %v3356 = vmul.f32 %v3329, 1.442695
        %v3357 = vpow.pop %v3356
        %v3358 = vmul.f32 %v3330, 1.442695
        %v3359 = vpow.pop %v3358
        %v3360 = vmul.f32 %v3331, 1.442695
        %v3361 = vpow.pop %v3360
        %v3362 = vmul.f32 %v3332, 1.442695
        %v3363 = vpow.pop %v3362
        %v3364 = vmul.f32 %v3333, 1.442695
        %v3365 = vpow.pop %v3364
        %v3366 = vsel %vm3269, %v3335, 0.0
        %3367 = vadd.xlane.f32.xlu0 %v3366
        %v3368 = vpop.xlane.xlu0 %3367
        %v3369 = vsel %vm3269, %v3337, 0.0
        %3370 = vadd.xlane.f32.xlu0 %v3369
        %v3371 = vpop.xlane.xlu0 %3370
        %v3372 = vsel %vm3269, %v3339, 0.0
        %3373 = vadd.xlane.f32.xlu0 %v3372
        %v3374 = vpop.xlane.xlu0 %3373
        %v3375 = vsel %vm3269, %v3341, 0.0
        %3376 = vadd.xlane.f32.xlu0 %v3375
        %v3377 = vpop.xlane.xlu0 %3376
        %v3378 = vsel %vm3269, %v3343, 0.0
        %3379 = vadd.xlane.f32.xlu0 %v3378
        %v3380 = vpop.xlane.xlu0 %3379
        %v3381 = vsel %vm3269, %v3345, 0.0
        %3382 = vadd.xlane.f32.xlu0 %v3381
        %v3383 = vpop.xlane.xlu0 %3382
        %v3384 = vsel %vm3269, %v3347, 0.0
        %3385 = vadd.xlane.f32.xlu0 %v3384
        %v3386 = vpop.xlane.xlu0 %3385
        %v3387 = vsel %vm3269, %v3349, 0.0
        %3388 = vadd.xlane.f32.xlu0 %v3387
        %v3389 = vpop.xlane.xlu0 %3388
        %v3390 = vsel %vm3269, %v3351, 0.0
        %3391 = vadd.xlane.f32.xlu0 %v3390
        %v3392 = vpop.xlane.xlu0 %3391
        %v3393 = vsel %vm3269, %v3353, 0.0
        %3394 = vadd.xlane.f32.xlu0 %v3393
        %v3395 = vpop.xlane.xlu0 %3394
        %v3396 = vsel %vm3269, %v3355, 0.0
        %3397 = vadd.xlane.f32.xlu0 %v3396
        %v3398 = vpop.xlane.xlu0 %3397
        %v3399 = vsel %vm3269, %v3357, 0.0
        %3400 = vadd.xlane.f32.xlu0 %v3399
        %v3401 = vpop.xlane.xlu0 %3400
        %v3402 = vsel %vm3269, %v3359, 0.0
        %3403 = vadd.xlane.f32.xlu0 %v3402
        %v3404 = vpop.xlane.xlu0 %3403
        %v3405 = vsel %vm3269, %v3361, 0.0
        %3406 = vadd.xlane.f32.xlu0 %v3405
        %v3407 = vpop.xlane.xlu0 %3406
        %v3408 = vsel %vm3269, %v3363, 0.0
        %3409 = vadd.xlane.f32.xlu0 %v3408
        %v3410 = vpop.xlane.xlu0 %3409
        %v3411 = vsel %vm3269, %v3365, 0.0
        %3412 = vadd.xlane.f32.xlu0 %v3411
        %v3413 = vpop.xlane.xlu0 %3412
        %v3414 = vrcp.pop %v3368
        %v3415 = vrcp.pop %v3371
        %v3416 = vrcp.pop %v3374
        %v3417 = vrcp.pop %v3377
        %v3418 = vrcp.pop %v3380
        %v3419 = vrcp.pop %v3383
        %v3420 = vrcp.pop %v3386
        %v3421 = vrcp.pop %v3389
        %v3422 = vrcp.pop %v3392
        %v3423 = vrcp.pop %v3395
        %v3424 = vrcp.pop %v3398
        %v3425 = vrcp.pop %v3401
        %v3426 = vrcp.pop %v3404
        %v3427 = vrcp.pop %v3407
        %v3428 = vrcp.pop %v3410
        %v3429 = vrcp.pop %v3413
        %v3430 = vmul.f32 %v3335, %v3414
        %v3431 = vmul.f32 %v3337, %v3415
        %v3432 = vmul.f32 %v3339, %v3416
        %v3433 = vmul.f32 %v3341, %v3417
        %v3434 = vmul.f32 %v3343, %v3418
        %v3435 = vmul.f32 %v3345, %v3419
        %v3436 = vmul.f32 %v3347, %v3420
        %v3437 = vmul.f32 %v3349, %v3421
        %v3438 = vmul.f32 %v3351, %v3422
        %v3439 = vmul.f32 %v3353, %v3423
        %v3440 = vmul.f32 %v3355, %v3424
        %v3441 = vmul.f32 %v3357, %v3425
        %v3442 = vmul.f32 %v3359, %v3426
        %v3443 = vmul.f32 %v3361, %v3427
        %v3444 = vmul.f32 %v3363, %v3428
        %v3445 = vmul.f32 %v3365, %v3429
        %v3446 = vperm.slane %v3430, 0
        %v3447 = vlaneseq
        %v3448 = vshrl.u32 %v3447, 7
        %3450 = vset.pattern.permute.xlu0 %v3448
        %3451 = vperm.xlu0 %3450, %v3446
        %v3452 = vpop.permute.xlu0 %3451
        %v3453 = vperm.slane %v3430, 1
        %v3454 = vlaneseq
        %v3455 = vshrl.u32 %v3454, 7
        %3457 = vset.pattern.permute.xlu0 %v3455
        %3458 = vperm.xlu0 %3457, %v3453
        %v3459 = vpop.permute.xlu0 %3458
        %v3460 = vperm.slane %v3430, 2
        %v3461 = vlaneseq
        %v3462 = vshrl.u32 %v3461, 7
        %3464 = vset.pattern.permute.xlu0 %v3462
        %3465 = vperm.xlu0 %3464, %v3460
        %v3466 = vpop.permute.xlu0 %3465
        %v3467 = vperm.slane %v3430, 3
        %v3468 = vlaneseq
        %v3469 = vshrl.u32 %v3468, 7
        %3471 = vset.pattern.permute.xlu0 %v3469
        %3472 = vperm.xlu0 %3471, %v3467
        %v3473 = vpop.permute.xlu0 %3472
        %v3474 = vperm.slane %v3430, 4
        %v3475 = vlaneseq
        %v3476 = vshrl.u32 %v3475, 7
        %3478 = vset.pattern.permute.xlu0 %v3476
        %3479 = vperm.xlu0 %3478, %v3474
        %v3480 = vpop.permute.xlu0 %3479
        %v3481 = vperm.slane %v3430, 5
        %v3482 = vlaneseq
        %v3483 = vshrl.u32 %v3482, 7
        %3485 = vset.pattern.permute.xlu0 %v3483
        %3486 = vperm.xlu0 %3485, %v3481
        %v3487 = vpop.permute.xlu0 %3486
        %v3488 = vperm.slane %v3430, 6
        %v3489 = vlaneseq
        %v3490 = vshrl.u32 %v3489, 7
        %3492 = vset.pattern.permute.xlu0 %v3490
        %3493 = vperm.xlu0 %3492, %v3488
        %v3494 = vpop.permute.xlu0 %3493
        %v3495 = vperm.slane %v3430, 7
        %v3496 = vlaneseq
        %v3497 = vshrl.u32 %v3496, 7
        %3499 = vset.pattern.permute.xlu0 %v3497
        %3500 = vperm.xlu0 %3499, %v3495
        %v3501 = vpop.permute.xlu0 %3500
        %v3502 = vperm.slane %v3431, 0
        %v3503 = vlaneseq
        %v3504 = vshrl.u32 %v3503, 7
        %3506 = vset.pattern.permute.xlu0 %v3504
        %3507 = vperm.xlu0 %3506, %v3502
        %v3508 = vpop.permute.xlu0 %3507
        %v3509 = vperm.slane %v3431, 1
        %v3510 = vlaneseq
        %v3511 = vshrl.u32 %v3510, 7
        %3513 = vset.pattern.permute.xlu0 %v3511
        %3514 = vperm.xlu0 %3513, %v3509
        %v3515 = vpop.permute.xlu0 %3514
        %v3516 = vperm.slane %v3431, 2
        %v3517 = vlaneseq
        %v3518 = vshrl.u32 %v3517, 7
        %3520 = vset.pattern.permute.xlu0 %v3518
        %3521 = vperm.xlu0 %3520, %v3516
        %v3522 = vpop.permute.xlu0 %3521
        %v3523 = vperm.slane %v3431, 3
        %v3524 = vlaneseq
        %v3525 = vshrl.u32 %v3524, 7
        %3527 = vset.pattern.permute.xlu0 %v3525
        %3528 = vperm.xlu0 %3527, %v3523
        %v3529 = vpop.permute.xlu0 %3528
        %v3530 = vperm.slane %v3431, 4
        %v3531 = vlaneseq
        %v3532 = vshrl.u32 %v3531, 7
        %3534 = vset.pattern.permute.xlu0 %v3532
        %3535 = vperm.xlu0 %3534, %v3530
        %v3536 = vpop.permute.xlu0 %3535
        %v3537 = vperm.slane %v3431, 5
        %v3538 = vlaneseq
        %v3539 = vshrl.u32 %v3538, 7
        %3541 = vset.pattern.permute.xlu0 %v3539
        %3542 = vperm.xlu0 %3541, %v3537
        %v3543 = vpop.permute.xlu0 %3542
        %v3544 = vperm.slane %v3431, 6
        %v3545 = vlaneseq
        %v3546 = vshrl.u32 %v3545, 7
        %3548 = vset.pattern.permute.xlu0 %v3546
        %3549 = vperm.xlu0 %3548, %v3544
        %v3550 = vpop.permute.xlu0 %3549
        %v3551 = vperm.slane %v3431, 7
        %v3552 = vlaneseq
        %v3553 = vshrl.u32 %v3552, 7
        %3555 = vset.pattern.permute.xlu0 %v3553
        %3556 = vperm.xlu0 %3555, %v3551
        %v3557 = vpop.permute.xlu0 %3556
        %v3558 = vperm.slane %v3432, 0
        %v3559 = vlaneseq
        %v3560 = vshrl.u32 %v3559, 7
        %3562 = vset.pattern.permute.xlu0 %v3560
        %3563 = vperm.xlu0 %3562, %v3558
        %v3564 = vpop.permute.xlu0 %3563
        %v3565 = vperm.slane %v3432, 1
        %v3566 = vlaneseq
        %v3567 = vshrl.u32 %v3566, 7
        %3569 = vset.pattern.permute.xlu0 %v3567
        %3570 = vperm.xlu0 %3569, %v3565
        %v3571 = vpop.permute.xlu0 %3570
        %v3572 = vperm.slane %v3432, 2
        %v3573 = vlaneseq
        %v3574 = vshrl.u32 %v3573, 7
        %3576 = vset.pattern.permute.xlu0 %v3574
        %3577 = vperm.xlu0 %3576, %v3572
        %v3578 = vpop.permute.xlu0 %3577
        %v3579 = vperm.slane %v3432, 3
        %v3580 = vlaneseq
        %v3581 = vshrl.u32 %v3580, 7
        %3583 = vset.pattern.permute.xlu0 %v3581
        %3584 = vperm.xlu0 %3583, %v3579
        %v3585 = vpop.permute.xlu0 %3584
        %v3586 = vperm.slane %v3432, 4
        %v3587 = vlaneseq
        %v3588 = vshrl.u32 %v3587, 7
        %3590 = vset.pattern.permute.xlu0 %v3588
        %3591 = vperm.xlu0 %3590, %v3586
        %v3592 = vpop.permute.xlu0 %3591
        %v3593 = vperm.slane %v3432, 5
        %v3594 = vlaneseq
        %v3595 = vshrl.u32 %v3594, 7
        %3597 = vset.pattern.permute.xlu0 %v3595
        %3598 = vperm.xlu0 %3597, %v3593
        %v3599 = vpop.permute.xlu0 %3598
        %v3600 = vperm.slane %v3432, 6
        %v3601 = vlaneseq
        %v3602 = vshrl.u32 %v3601, 7
        %3604 = vset.pattern.permute.xlu0 %v3602
        %3605 = vperm.xlu0 %3604, %v3600
        %v3606 = vpop.permute.xlu0 %3605
        %v3607 = vperm.slane %v3432, 7
        %v3608 = vlaneseq
        %v3609 = vshrl.u32 %v3608, 7
        %3611 = vset.pattern.permute.xlu0 %v3609
        %3612 = vperm.xlu0 %3611, %v3607
        %v3613 = vpop.permute.xlu0 %3612
        %v3614 = vperm.slane %v3433, 0
        %v3615 = vlaneseq
        %v3616 = vshrl.u32 %v3615, 7
        %3618 = vset.pattern.permute.xlu0 %v3616
        %3619 = vperm.xlu0 %3618, %v3614
        %v3620 = vpop.permute.xlu0 %3619
        %v3621 = vperm.slane %v3433, 1
        %v3622 = vlaneseq
        %v3623 = vshrl.u32 %v3622, 7
        %3625 = vset.pattern.permute.xlu0 %v3623
        %3626 = vperm.xlu0 %3625, %v3621
        %v3627 = vpop.permute.xlu0 %3626
        %v3628 = vperm.slane %v3433, 2
        %v3629 = vlaneseq
        %v3630 = vshrl.u32 %v3629, 7
        %3632 = vset.pattern.permute.xlu0 %v3630
        %3633 = vperm.xlu0 %3632, %v3628
        %v3634 = vpop.permute.xlu0 %3633
        %v3635 = vperm.slane %v3433, 3
        %v3636 = vlaneseq
        %v3637 = vshrl.u32 %v3636, 7
        %3639 = vset.pattern.permute.xlu0 %v3637
        %3640 = vperm.xlu0 %3639, %v3635
        %v3641 = vpop.permute.xlu0 %3640
        %v3642 = vperm.slane %v3433, 4
        %v3643 = vlaneseq
        %v3644 = vshrl.u32 %v3643, 7
        %3646 = vset.pattern.permute.xlu0 %v3644
        %3647 = vperm.xlu0 %3646, %v3642
        %v3648 = vpop.permute.xlu0 %3647
        %v3649 = vperm.slane %v3433, 5
        %v3650 = vlaneseq
        %v3651 = vshrl.u32 %v3650, 7
        %3653 = vset.pattern.permute.xlu0 %v3651
        %3654 = vperm.xlu0 %3653, %v3649
        %v3655 = vpop.permute.xlu0 %3654
        %v3656 = vperm.slane %v3433, 6
        %v3657 = vlaneseq
        %v3658 = vshrl.u32 %v3657, 7
        %3660 = vset.pattern.permute.xlu0 %v3658
        %3661 = vperm.xlu0 %3660, %v3656
        %v3662 = vpop.permute.xlu0 %3661
        %v3663 = vperm.slane %v3433, 7
        %v3664 = vlaneseq
        %v3665 = vshrl.u32 %v3664, 7
        %3667 = vset.pattern.permute.xlu0 %v3665
        %3668 = vperm.xlu0 %3667, %v3663
        %v3669 = vpop.permute.xlu0 %3668
        %v3670 = vperm.slane %v3434, 0
        %v3671 = vlaneseq
        %v3672 = vshrl.u32 %v3671, 7
        %3674 = vset.pattern.permute.xlu0 %v3672
        %3675 = vperm.xlu0 %3674, %v3670
        %v3676 = vpop.permute.xlu0 %3675
        %v3677 = vperm.slane %v3434, 1
        %v3678 = vlaneseq
        %v3679 = vshrl.u32 %v3678, 7
        %3681 = vset.pattern.permute.xlu0 %v3679
        %3682 = vperm.xlu0 %3681, %v3677
        %v3683 = vpop.permute.xlu0 %3682
        %v3684 = vperm.slane %v3434, 2
        %v3685 = vlaneseq
        %v3686 = vshrl.u32 %v3685, 7
        %3688 = vset.pattern.permute.xlu0 %v3686
        %3689 = vperm.xlu0 %3688, %v3684
        %v3690 = vpop.permute.xlu0 %3689
        %v3691 = vperm.slane %v3434, 3
        %v3692 = vlaneseq
        %v3693 = vshrl.u32 %v3692, 7
        %3695 = vset.pattern.permute.xlu0 %v3693
        %3696 = vperm.xlu0 %3695, %v3691
        %v3697 = vpop.permute.xlu0 %3696
        %v3698 = vperm.slane %v3434, 4
        %v3699 = vlaneseq
        %v3700 = vshrl.u32 %v3699, 7
        %3702 = vset.pattern.permute.xlu0 %v3700
        %3703 = vperm.xlu0 %3702, %v3698
        %v3704 = vpop.permute.xlu0 %3703
        %v3705 = vperm.slane %v3434, 5
        %v3706 = vlaneseq
        %v3707 = vshrl.u32 %v3706, 7
        %3709 = vset.pattern.permute.xlu0 %v3707
        %3710 = vperm.xlu0 %3709, %v3705
        %v3711 = vpop.permute.xlu0 %3710
        %v3712 = vperm.slane %v3434, 6
        %v3713 = vlaneseq
        %v3714 = vshrl.u32 %v3713, 7
        %3716 = vset.pattern.permute.xlu0 %v3714
        %3717 = vperm.xlu0 %3716, %v3712
        %v3718 = vpop.permute.xlu0 %3717
        %v3719 = vperm.slane %v3434, 7
        %v3720 = vlaneseq
        %v3721 = vshrl.u32 %v3720, 7
        %3723 = vset.pattern.permute.xlu0 %v3721
        %3724 = vperm.xlu0 %3723, %v3719
        %v3725 = vpop.permute.xlu0 %3724
        %v3726 = vperm.slane %v3435, 0
        %v3727 = vlaneseq
        %v3728 = vshrl.u32 %v3727, 7
        %3730 = vset.pattern.permute.xlu0 %v3728
        %3731 = vperm.xlu0 %3730, %v3726
        %v3732 = vpop.permute.xlu0 %3731
        %v3733 = vperm.slane %v3435, 1
        %v3734 = vlaneseq
        %v3735 = vshrl.u32 %v3734, 7
        %3737 = vset.pattern.permute.xlu0 %v3735
        %3738 = vperm.xlu0 %3737, %v3733
        %v3739 = vpop.permute.xlu0 %3738
        %v3740 = vperm.slane %v3435, 2
        %v3741 = vlaneseq
        %v3742 = vshrl.u32 %v3741, 7
        %3744 = vset.pattern.permute.xlu0 %v3742
        %3745 = vperm.xlu0 %3744, %v3740
        %v3746 = vpop.permute.xlu0 %3745
        %v3747 = vperm.slane %v3435, 3
        %v3748 = vlaneseq
        %v3749 = vshrl.u32 %v3748, 7
        %3751 = vset.pattern.permute.xlu0 %v3749
        %3752 = vperm.xlu0 %3751, %v3747
        %v3753 = vpop.permute.xlu0 %3752
        %v3754 = vperm.slane %v3435, 4
        %v3755 = vlaneseq
        %v3756 = vshrl.u32 %v3755, 7
        %3758 = vset.pattern.permute.xlu0 %v3756
        %3759 = vperm.xlu0 %3758, %v3754
        %v3760 = vpop.permute.xlu0 %3759
        %v3761 = vperm.slane %v3435, 5
        %v3762 = vlaneseq
        %v3763 = vshrl.u32 %v3762, 7
        %3765 = vset.pattern.permute.xlu0 %v3763
        %3766 = vperm.xlu0 %3765, %v3761
        %v3767 = vpop.permute.xlu0 %3766
        %v3768 = vperm.slane %v3435, 6
        %v3769 = vlaneseq
        %v3770 = vshrl.u32 %v3769, 7
        %3772 = vset.pattern.permute.xlu0 %v3770
        %3773 = vperm.xlu0 %3772, %v3768
        %v3774 = vpop.permute.xlu0 %3773
        %v3775 = vperm.slane %v3435, 7
        %v3776 = vlaneseq
        %v3777 = vshrl.u32 %v3776, 7
        %3779 = vset.pattern.permute.xlu0 %v3777
        %3780 = vperm.xlu0 %3779, %v3775
        %v3781 = vpop.permute.xlu0 %3780
        %v3782 = vperm.slane %v3436, 0
        %v3783 = vlaneseq
        %v3784 = vshrl.u32 %v3783, 7
        %3786 = vset.pattern.permute.xlu0 %v3784
        %3787 = vperm.xlu0 %3786, %v3782
        %v3788 = vpop.permute.xlu0 %3787
        %v3789 = vperm.slane %v3436, 1
        %v3790 = vlaneseq
        %v3791 = vshrl.u32 %v3790, 7
        %3793 = vset.pattern.permute.xlu0 %v3791
        %3794 = vperm.xlu0 %3793, %v3789
        %v3795 = vpop.permute.xlu0 %3794
        %v3796 = vperm.slane %v3436, 2
        %v3797 = vlaneseq
        %v3798 = vshrl.u32 %v3797, 7
        %3800 = vset.pattern.permute.xlu0 %v3798
        %3801 = vperm.xlu0 %3800, %v3796
        %v3802 = vpop.permute.xlu0 %3801
        %v3803 = vperm.slane %v3436, 3
        %v3804 = vlaneseq
        %v3805 = vshrl.u32 %v3804, 7
        %3807 = vset.pattern.permute.xlu0 %v3805
        %3808 = vperm.xlu0 %3807, %v3803
        %v3809 = vpop.permute.xlu0 %3808
        %v3810 = vperm.slane %v3436, 4
        %v3811 = vlaneseq
        %v3812 = vshrl.u32 %v3811, 7
        %3814 = vset.pattern.permute.xlu0 %v3812
        %3815 = vperm.xlu0 %3814, %v3810
        %v3816 = vpop.permute.xlu0 %3815
        %v3817 = vperm.slane %v3436, 5
        %v3818 = vlaneseq
        %v3819 = vshrl.u32 %v3818, 7
        %3821 = vset.pattern.permute.xlu0 %v3819
        %3822 = vperm.xlu0 %3821, %v3817
        %v3823 = vpop.permute.xlu0 %3822
        %v3824 = vperm.slane %v3436, 6
        %v3825 = vlaneseq
        %v3826 = vshrl.u32 %v3825, 7
        %3828 = vset.pattern.permute.xlu0 %v3826
        %3829 = vperm.xlu0 %3828, %v3824
        %v3830 = vpop.permute.xlu0 %3829
        %v3831 = vperm.slane %v3436, 7
        %v3832 = vlaneseq
        %v3833 = vshrl.u32 %v3832, 7
        %3835 = vset.pattern.permute.xlu0 %v3833
        %3836 = vperm.xlu0 %3835, %v3831
        %v3837 = vpop.permute.xlu0 %3836
        %v3838 = vperm.slane %v3437, 0
        %v3839 = vlaneseq
        %v3840 = vshrl.u32 %v3839, 7
        %3842 = vset.pattern.permute.xlu0 %v3840
        %3843 = vperm.xlu0 %3842, %v3838
        %v3844 = vpop.permute.xlu0 %3843
        %v3845 = vperm.slane %v3437, 1
        %v3846 = vlaneseq
        %v3847 = vshrl.u32 %v3846, 7
        %3849 = vset.pattern.permute.xlu0 %v3847
        %3850 = vperm.xlu0 %3849, %v3845
        %v3851 = vpop.permute.xlu0 %3850
        %v3852 = vperm.slane %v3437, 2
        %v3853 = vlaneseq
        %v3854 = vshrl.u32 %v3853, 7
        %3856 = vset.pattern.permute.xlu0 %v3854
        %3857 = vperm.xlu0 %3856, %v3852
        %v3858 = vpop.permute.xlu0 %3857
        %v3859 = vperm.slane %v3437, 3
        %v3860 = vlaneseq
        %v3861 = vshrl.u32 %v3860, 7
        %3863 = vset.pattern.permute.xlu0 %v3861
        %3864 = vperm.xlu0 %3863, %v3859
        %v3865 = vpop.permute.xlu0 %3864
        %v3866 = vperm.slane %v3437, 4
        %v3867 = vlaneseq
        %v3868 = vshrl.u32 %v3867, 7
        %3870 = vset.pattern.permute.xlu0 %v3868
        %3871 = vperm.xlu0 %3870, %v3866
        %v3872 = vpop.permute.xlu0 %3871
        %v3873 = vperm.slane %v3437, 5
        %v3874 = vlaneseq
        %v3875 = vshrl.u32 %v3874, 7
        %3877 = vset.pattern.permute.xlu0 %v3875
        %3878 = vperm.xlu0 %3877, %v3873
        %v3879 = vpop.permute.xlu0 %3878
        %v3880 = vperm.slane %v3437, 6
        %v3881 = vlaneseq
        %v3882 = vshrl.u32 %v3881, 7
        %3884 = vset.pattern.permute.xlu0 %v3882
        %3885 = vperm.xlu0 %3884, %v3880
        %v3886 = vpop.permute.xlu0 %3885
        %v3887 = vperm.slane %v3437, 7
        %v3888 = vlaneseq
        %v3889 = vshrl.u32 %v3888, 7
        %3891 = vset.pattern.permute.xlu0 %v3889
        %3892 = vperm.xlu0 %3891, %v3887
        %v3893 = vpop.permute.xlu0 %3892
        %v3894 = vperm.slane %v3438, 0
        %v3895 = vlaneseq
        %v3896 = vshrl.u32 %v3895, 7
        %3898 = vset.pattern.permute.xlu0 %v3896
        %3899 = vperm.xlu0 %3898, %v3894
        %v3900 = vpop.permute.xlu0 %3899
        %v3901 = vperm.slane %v3438, 1
        %v3902 = vlaneseq
        %v3903 = vshrl.u32 %v3902, 7
        %3905 = vset.pattern.permute.xlu0 %v3903
        %3906 = vperm.xlu0 %3905, %v3901
        %v3907 = vpop.permute.xlu0 %3906
        %v3908 = vperm.slane %v3438, 2
        %v3909 = vlaneseq
        %v3910 = vshrl.u32 %v3909, 7
        %3912 = vset.pattern.permute.xlu0 %v3910
        %3913 = vperm.xlu0 %3912, %v3908
        %v3914 = vpop.permute.xlu0 %3913
        %v3915 = vperm.slane %v3438, 3
        %v3916 = vlaneseq
        %v3917 = vshrl.u32 %v3916, 7
        %3919 = vset.pattern.permute.xlu0 %v3917
        %3920 = vperm.xlu0 %3919, %v3915
        %v3921 = vpop.permute.xlu0 %3920
        %v3922 = vperm.slane %v3438, 4
        %v3923 = vlaneseq
        %v3924 = vshrl.u32 %v3923, 7
        %3926 = vset.pattern.permute.xlu0 %v3924
        %3927 = vperm.xlu0 %3926, %v3922
        %v3928 = vpop.permute.xlu0 %3927
        %v3929 = vperm.slane %v3438, 5
        %v3930 = vlaneseq
        %v3931 = vshrl.u32 %v3930, 7
        %3933 = vset.pattern.permute.xlu0 %v3931
        %3934 = vperm.xlu0 %3933, %v3929
        %v3935 = vpop.permute.xlu0 %3934
        %v3936 = vperm.slane %v3438, 6
        %v3937 = vlaneseq
        %v3938 = vshrl.u32 %v3937, 7
        %3940 = vset.pattern.permute.xlu0 %v3938
        %3941 = vperm.xlu0 %3940, %v3936
        %v3942 = vpop.permute.xlu0 %3941
        %v3943 = vperm.slane %v3438, 7
        %v3944 = vlaneseq
        %v3945 = vshrl.u32 %v3944, 7
        %3947 = vset.pattern.permute.xlu0 %v3945
        %3948 = vperm.xlu0 %3947, %v3943
        %v3949 = vpop.permute.xlu0 %3948
        %v3950 = vperm.slane %v3439, 0
        %v3951 = vlaneseq
        %v3952 = vshrl.u32 %v3951, 7
        %3954 = vset.pattern.permute.xlu0 %v3952
        %3955 = vperm.xlu0 %3954, %v3950
        %v3956 = vpop.permute.xlu0 %3955
        %v3957 = vperm.slane %v3439, 1
        %v3958 = vlaneseq
        %v3959 = vshrl.u32 %v3958, 7
        %3961 = vset.pattern.permute.xlu0 %v3959
        %3962 = vperm.xlu0 %3961, %v3957
        %v3963 = vpop.permute.xlu0 %3962
        %v3964 = vperm.slane %v3439, 2
        %v3965 = vlaneseq
        %v3966 = vshrl.u32 %v3965, 7
        %3968 = vset.pattern.permute.xlu0 %v3966
        %3969 = vperm.xlu0 %3968, %v3964
        %v3970 = vpop.permute.xlu0 %3969
        %v3971 = vperm.slane %v3439, 3
        %v3972 = vlaneseq
        %v3973 = vshrl.u32 %v3972, 7
        %3975 = vset.pattern.permute.xlu0 %v3973
        %3976 = vperm.xlu0 %3975, %v3971
        %v3977 = vpop.permute.xlu0 %3976
        %v3978 = vperm.slane %v3439, 4
        %v3979 = vlaneseq
        %v3980 = vshrl.u32 %v3979, 7
        %3982 = vset.pattern.permute.xlu0 %v3980
        %3983 = vperm.xlu0 %3982, %v3978
        %v3984 = vpop.permute.xlu0 %3983
        %v3985 = vperm.slane %v3439, 5
        %v3986 = vlaneseq
        %v3987 = vshrl.u32 %v3986, 7
        %3989 = vset.pattern.permute.xlu0 %v3987
        %3990 = vperm.xlu0 %3989, %v3985
        %v3991 = vpop.permute.xlu0 %3990
        %v3992 = vperm.slane %v3439, 6
        %v3993 = vlaneseq
        %v3994 = vshrl.u32 %v3993, 7
        %3996 = vset.pattern.permute.xlu0 %v3994
        %3997 = vperm.xlu0 %3996, %v3992
        %v3998 = vpop.permute.xlu0 %3997
        %v3999 = vperm.slane %v3439, 7
        %v4000 = vlaneseq
        %v4001 = vshrl.u32 %v4000, 7
        %4003 = vset.pattern.permute.xlu0 %v4001
        %4004 = vperm.xlu0 %4003, %v3999
        %v4005 = vpop.permute.xlu0 %4004
        %v4006 = vperm.slane %v3440, 0
        %v4007 = vlaneseq
        %v4008 = vshrl.u32 %v4007, 7
        %4010 = vset.pattern.permute.xlu0 %v4008
        %4011 = vperm.xlu0 %4010, %v4006
        %v4012 = vpop.permute.xlu0 %4011
        %v4013 = vperm.slane %v3440, 1
        %v4014 = vlaneseq
        %v4015 = vshrl.u32 %v4014, 7
        %4017 = vset.pattern.permute.xlu0 %v4015
        %4018 = vperm.xlu0 %4017, %v4013
        %v4019 = vpop.permute.xlu0 %4018
        %v4020 = vperm.slane %v3440, 2
        %v4021 = vlaneseq
        %v4022 = vshrl.u32 %v4021, 7
        %4024 = vset.pattern.permute.xlu0 %v4022
        %4025 = vperm.xlu0 %4024, %v4020
        %v4026 = vpop.permute.xlu0 %4025
        %v4027 = vperm.slane %v3440, 3
        %v4028 = vlaneseq
        %v4029 = vshrl.u32 %v4028, 7
        %4031 = vset.pattern.permute.xlu0 %v4029
        %4032 = vperm.xlu0 %4031, %v4027
        %v4033 = vpop.permute.xlu0 %4032
        %v4034 = vperm.slane %v3440, 4
        %v4035 = vlaneseq
        %v4036 = vshrl.u32 %v4035, 7
        %4038 = vset.pattern.permute.xlu0 %v4036
        %4039 = vperm.xlu0 %4038, %v4034
        %v4040 = vpop.permute.xlu0 %4039
        %v4041 = vperm.slane %v3440, 5
        %v4042 = vlaneseq
        %v4043 = vshrl.u32 %v4042, 7
        %4045 = vset.pattern.permute.xlu0 %v4043
        %4046 = vperm.xlu0 %4045, %v4041
        %v4047 = vpop.permute.xlu0 %4046
        %v4048 = vperm.slane %v3440, 6
        %v4049 = vlaneseq
        %v4050 = vshrl.u32 %v4049, 7
        %4052 = vset.pattern.permute.xlu0 %v4050
        %4053 = vperm.xlu0 %4052, %v4048
        %v4054 = vpop.permute.xlu0 %4053
        %v4055 = vperm.slane %v3440, 7
        %v4056 = vlaneseq
        %v4057 = vshrl.u32 %v4056, 7
        %4059 = vset.pattern.permute.xlu0 %v4057
        %4060 = vperm.xlu0 %4059, %v4055
        %v4061 = vpop.permute.xlu0 %4060
        %v4062 = vperm.slane %v3441, 0
        %v4063 = vlaneseq
        %v4064 = vshrl.u32 %v4063, 7
        %4066 = vset.pattern.permute.xlu0 %v4064
        %4067 = vperm.xlu0 %4066, %v4062
        %v4068 = vpop.permute.xlu0 %4067
        %v4069 = vperm.slane %v3441, 1
        %v4070 = vlaneseq
        %v4071 = vshrl.u32 %v4070, 7
        %4073 = vset.pattern.permute.xlu0 %v4071
        %4074 = vperm.xlu0 %4073, %v4069
        %v4075 = vpop.permute.xlu0 %4074
        %v4076 = vperm.slane %v3441, 2
        %v4077 = vlaneseq
        %v4078 = vshrl.u32 %v4077, 7
        %4080 = vset.pattern.permute.xlu0 %v4078
        %4081 = vperm.xlu0 %4080, %v4076
        %v4082 = vpop.permute.xlu0 %4081
        %v4083 = vperm.slane %v3441, 3
        %v4084 = vlaneseq
        %v4085 = vshrl.u32 %v4084, 7
        %4087 = vset.pattern.permute.xlu0 %v4085
        %4088 = vperm.xlu0 %4087, %v4083
        %v4089 = vpop.permute.xlu0 %4088
        %v4090 = vperm.slane %v3441, 4
        %v4091 = vlaneseq
        %v4092 = vshrl.u32 %v4091, 7
        %4094 = vset.pattern.permute.xlu0 %v4092
        %4095 = vperm.xlu0 %4094, %v4090
        %v4096 = vpop.permute.xlu0 %4095
        %v4097 = vperm.slane %v3441, 5
        %v4098 = vlaneseq
        %v4099 = vshrl.u32 %v4098, 7
        %4101 = vset.pattern.permute.xlu0 %v4099
        %4102 = vperm.xlu0 %4101, %v4097
        %v4103 = vpop.permute.xlu0 %4102
        %v4104 = vperm.slane %v3441, 6
        %v4105 = vlaneseq
        %v4106 = vshrl.u32 %v4105, 7
        %4108 = vset.pattern.permute.xlu0 %v4106
        %4109 = vperm.xlu0 %4108, %v4104
        %v4110 = vpop.permute.xlu0 %4109
        %v4111 = vperm.slane %v3441, 7
        %v4112 = vlaneseq
        %v4113 = vshrl.u32 %v4112, 7
        %4115 = vset.pattern.permute.xlu0 %v4113
        %4116 = vperm.xlu0 %4115, %v4111
        %v4117 = vpop.permute.xlu0 %4116
        %v4118 = vperm.slane %v3442, 0
        %v4119 = vlaneseq
        %v4120 = vshrl.u32 %v4119, 7
        %4122 = vset.pattern.permute.xlu0 %v4120
        %4123 = vperm.xlu0 %4122, %v4118
        %v4124 = vpop.permute.xlu0 %4123
        %v4125 = vperm.slane %v3442, 1
        %v4126 = vlaneseq
        %v4127 = vshrl.u32 %v4126, 7
        %4129 = vset.pattern.permute.xlu0 %v4127
        %4130 = vperm.xlu0 %4129, %v4125
        %v4131 = vpop.permute.xlu0 %4130
        %v4132 = vperm.slane %v3442, 2
        %v4133 = vlaneseq
        %v4134 = vshrl.u32 %v4133, 7
        %4136 = vset.pattern.permute.xlu0 %v4134
        %4137 = vperm.xlu0 %4136, %v4132
        %v4138 = vpop.permute.xlu0 %4137
        %v4139 = vperm.slane %v3442, 3
        %v4140 = vlaneseq
        %v4141 = vshrl.u32 %v4140, 7
        %4143 = vset.pattern.permute.xlu0 %v4141
        %4144 = vperm.xlu0 %4143, %v4139
        %v4145 = vpop.permute.xlu0 %4144
        %v4146 = vperm.slane %v3442, 4
        %v4147 = vlaneseq
        %v4148 = vshrl.u32 %v4147, 7
        %4150 = vset.pattern.permute.xlu0 %v4148
        %4151 = vperm.xlu0 %4150, %v4146
        %v4152 = vpop.permute.xlu0 %4151
        %v4153 = vperm.slane %v3442, 5
        %v4154 = vlaneseq
        %v4155 = vshrl.u32 %v4154, 7
        %4157 = vset.pattern.permute.xlu0 %v4155
        %4158 = vperm.xlu0 %4157, %v4153
        %v4159 = vpop.permute.xlu0 %4158
        %v4160 = vperm.slane %v3442, 6
        %v4161 = vlaneseq
        %v4162 = vshrl.u32 %v4161, 7
        %4164 = vset.pattern.permute.xlu0 %v4162
        %4165 = vperm.xlu0 %4164, %v4160
        %v4166 = vpop.permute.xlu0 %4165
        %v4167 = vperm.slane %v3442, 7
        %v4168 = vlaneseq
        %v4169 = vshrl.u32 %v4168, 7
        %4171 = vset.pattern.permute.xlu0 %v4169
        %4172 = vperm.xlu0 %4171, %v4167
        %v4173 = vpop.permute.xlu0 %4172
        %v4174 = vperm.slane %v3443, 0
        %v4175 = vlaneseq
        %v4176 = vshrl.u32 %v4175, 7
        %4178 = vset.pattern.permute.xlu0 %v4176
        %4179 = vperm.xlu0 %4178, %v4174
        %v4180 = vpop.permute.xlu0 %4179
        %v4181 = vperm.slane %v3443, 1
        %v4182 = vlaneseq
        %v4183 = vshrl.u32 %v4182, 7
        %4185 = vset.pattern.permute.xlu0 %v4183
        %4186 = vperm.xlu0 %4185, %v4181
        %v4187 = vpop.permute.xlu0 %4186
        %v4188 = vperm.slane %v3443, 2
        %v4189 = vlaneseq
        %v4190 = vshrl.u32 %v4189, 7
        %4192 = vset.pattern.permute.xlu0 %v4190
        %4193 = vperm.xlu0 %4192, %v4188
        %v4194 = vpop.permute.xlu0 %4193
        %v4195 = vperm.slane %v3443, 3
        %v4196 = vlaneseq
        %v4197 = vshrl.u32 %v4196, 7
        %4199 = vset.pattern.permute.xlu0 %v4197
        %4200 = vperm.xlu0 %4199, %v4195
        %v4201 = vpop.permute.xlu0 %4200
        %v4202 = vperm.slane %v3443, 4
        %v4203 = vlaneseq
        %v4204 = vshrl.u32 %v4203, 7
        %4206 = vset.pattern.permute.xlu0 %v4204
        %4207 = vperm.xlu0 %4206, %v4202
        %v4208 = vpop.permute.xlu0 %4207
        %v4209 = vperm.slane %v3443, 5
        %v4210 = vlaneseq
        %v4211 = vshrl.u32 %v4210, 7
        %4213 = vset.pattern.permute.xlu0 %v4211
        %4214 = vperm.xlu0 %4213, %v4209
        %v4215 = vpop.permute.xlu0 %4214
        %v4216 = vperm.slane %v3443, 6
        %v4217 = vlaneseq
        %v4218 = vshrl.u32 %v4217, 7
        %4220 = vset.pattern.permute.xlu0 %v4218
        %4221 = vperm.xlu0 %4220, %v4216
        %v4222 = vpop.permute.xlu0 %4221
        %v4223 = vperm.slane %v3443, 7
        %v4224 = vlaneseq
        %v4225 = vshrl.u32 %v4224, 7
        %4227 = vset.pattern.permute.xlu0 %v4225
        %4228 = vperm.xlu0 %4227, %v4223
        %v4229 = vpop.permute.xlu0 %4228
        %v4230 = vperm.slane %v3444, 0
        %v4231 = vlaneseq
        %v4232 = vshrl.u32 %v4231, 7
        %4234 = vset.pattern.permute.xlu0 %v4232
        %4235 = vperm.xlu0 %4234, %v4230
        %v4236 = vpop.permute.xlu0 %4235
        %v4237 = vperm.slane %v3444, 1
        %v4238 = vlaneseq
        %v4239 = vshrl.u32 %v4238, 7
        %4241 = vset.pattern.permute.xlu0 %v4239
        %4242 = vperm.xlu0 %4241, %v4237
        %v4243 = vpop.permute.xlu0 %4242
        %v4244 = vperm.slane %v3444, 2
        %v4245 = vlaneseq
        %v4246 = vshrl.u32 %v4245, 7
        %4248 = vset.pattern.permute.xlu0 %v4246
        %4249 = vperm.xlu0 %4248, %v4244
        %v4250 = vpop.permute.xlu0 %4249
        %v4251 = vperm.slane %v3444, 3
        %v4252 = vlaneseq
        %v4253 = vshrl.u32 %v4252, 7
        %4255 = vset.pattern.permute.xlu0 %v4253
        %4256 = vperm.xlu0 %4255, %v4251
        %v4257 = vpop.permute.xlu0 %4256
        %v4258 = vperm.slane %v3444, 4
        %v4259 = vlaneseq
        %v4260 = vshrl.u32 %v4259, 7
        %4262 = vset.pattern.permute.xlu0 %v4260
        %4263 = vperm.xlu0 %4262, %v4258
        %v4264 = vpop.permute.xlu0 %4263
        %v4265 = vperm.slane %v3444, 5
        %v4266 = vlaneseq
        %v4267 = vshrl.u32 %v4266, 7
        %4269 = vset.pattern.permute.xlu0 %v4267
        %4270 = vperm.xlu0 %4269, %v4265
        %v4271 = vpop.permute.xlu0 %4270
        %v4272 = vperm.slane %v3444, 6
        %v4273 = vlaneseq
        %v4274 = vshrl.u32 %v4273, 7
        %4276 = vset.pattern.permute.xlu0 %v4274
        %4277 = vperm.xlu0 %4276, %v4272
        %v4278 = vpop.permute.xlu0 %4277
        %v4279 = vperm.slane %v3444, 7
        %v4280 = vlaneseq
        %v4281 = vshrl.u32 %v4280, 7
        %4283 = vset.pattern.permute.xlu0 %v4281
        %4284 = vperm.xlu0 %4283, %v4279
        %v4285 = vpop.permute.xlu0 %4284
        %v4286 = vperm.slane %v3445, 0
        %v4287 = vlaneseq
        %v4288 = vshrl.u32 %v4287, 7
        %4290 = vset.pattern.permute.xlu0 %v4288
        %4291 = vperm.xlu0 %4290, %v4286
        %v4292 = vpop.permute.xlu0 %4291
        %v4293 = vperm.slane %v3445, 1
        %v4294 = vlaneseq
        %v4295 = vshrl.u32 %v4294, 7
        %4297 = vset.pattern.permute.xlu0 %v4295
        %4298 = vperm.xlu0 %4297, %v4293
        %v4299 = vpop.permute.xlu0 %4298
        %v4300 = vperm.slane %v3445, 2
        %v4301 = vlaneseq
        %v4302 = vshrl.u32 %v4301, 7
        %4304 = vset.pattern.permute.xlu0 %v4302
        %4305 = vperm.xlu0 %4304, %v4300
        %v4306 = vpop.permute.xlu0 %4305
        %v4307 = vperm.slane %v3445, 3
        %v4308 = vlaneseq
        %v4309 = vshrl.u32 %v4308, 7
        %4311 = vset.pattern.permute.xlu0 %v4309
        %4312 = vperm.xlu0 %4311, %v4307
        %v4313 = vpop.permute.xlu0 %4312
        %v4314 = vperm.slane %v3445, 4
        %v4315 = vlaneseq
        %v4316 = vshrl.u32 %v4315, 7
        %4318 = vset.pattern.permute.xlu0 %v4316
        %4319 = vperm.xlu0 %4318, %v4314
        %v4320 = vpop.permute.xlu0 %4319
        %v4321 = vperm.slane %v3445, 5
        %v4322 = vlaneseq
        %v4323 = vshrl.u32 %v4322, 7
        %4325 = vset.pattern.permute.xlu0 %v4323
        %4326 = vperm.xlu0 %4325, %v4321
        %v4327 = vpop.permute.xlu0 %4326
        %v4328 = vperm.slane %v3445, 6
        %v4329 = vlaneseq
        %v4330 = vshrl.u32 %v4329, 7
        %4332 = vset.pattern.permute.xlu0 %v4330
        %4333 = vperm.xlu0 %4332, %v4328
        %v4334 = vpop.permute.xlu0 %4333
        %v4335 = vperm.slane %v3445, 7
        %v4336 = vlaneseq
        %v4337 = vshrl.u32 %v4336, 7
        %4339 = vset.pattern.permute.xlu0 %v4337
        %4340 = vperm.xlu0 %4339, %v4335
        %v4341 = vpop.permute.xlu0 %4340
        %v4342 = vmul.f32 %v3452, %v410
        %v4343 = vmul.f32 %v3459, %v411
        %v4344 = vmul.f32 %v3466, %v412
        %v4345 = vmul.f32 %v3473, %v413
        %v4346 = vmul.f32 %v3480, %v414
        %v4347 = vmul.f32 %v3487, %v415
        %v4348 = vmul.f32 %v3494, %v416
        %v4349 = vmul.f32 %v3501, %v417
        %v4350 = vmul.f32 %v3508, %v418
        %v4351 = vmul.f32 %v3515, %v419
        %v4352 = vmul.f32 %v3522, %v420
        %v4353 = vmul.f32 %v3529, %v421
        %v4354 = vmul.f32 %v3536, %v422
        %v4355 = vmul.f32 %v3543, %v423
        %v4356 = vmul.f32 %v3550, %v424
        %v4357 = vmul.f32 %v3557, %v425
        %v4358 = vmul.f32 %v3564, %v426
        %v4359 = vmul.f32 %v3571, %v427
        %v4360 = vmul.f32 %v3578, %v428
        %v4361 = vmul.f32 %v3585, %v429
        %v4362 = vmul.f32 %v3592, %v430
        %v4363 = vmul.f32 %v3599, %v431
        %v4364 = vmul.f32 %v3606, %v432
        %v4365 = vmul.f32 %v3613, %v433
        %v4366 = vmul.f32 %v3620, %v434
        %v4367 = vmul.f32 %v3627, %v435
        %v4368 = vmul.f32 %v3634, %v436
        %v4369 = vmul.f32 %v3641, %v437
        %v4370 = vmul.f32 %v3648, %v438
        %v4371 = vmul.f32 %v3655, %v439
        %v4372 = vmul.f32 %v3662, %v440
        %v4373 = vmul.f32 %v3669, %v441
        %v4374 = vmul.f32 %v3676, %v442
        %v4375 = vmul.f32 %v3683, %v443
        %v4376 = vmul.f32 %v3690, %v444
        %v4377 = vmul.f32 %v3697, %v445
        %v4378 = vmul.f32 %v3704, %v446
        %v4379 = vmul.f32 %v3711, %v447
        %v4380 = vmul.f32 %v3718, %v448
        %v4381 = vmul.f32 %v3725, %v449
        %v4382 = vmul.f32 %v3732, %v450
        %v4383 = vmul.f32 %v3739, %v451
        %v4384 = vmul.f32 %v3746, %v452
        %v4385 = vmul.f32 %v3753, %v453
        %v4386 = vmul.f32 %v3760, %v454
        %v4387 = vmul.f32 %v3767, %v455
        %v4388 = vmul.f32 %v3774, %v456
        %v4389 = vmul.f32 %v3781, %v457
        %v4390 = vmul.f32 %v3788, %v458
        %v4391 = vmul.f32 %v3795, %v459
        %v4392 = vmul.f32 %v3802, %v460
        %v4393 = vmul.f32 %v3809, %v461
        %v4394 = vmul.f32 %v3816, %v462
        %v4395 = vmul.f32 %v3823, %v463
        %v4396 = vmul.f32 %v3830, %v464
        %v4397 = vmul.f32 %v3837, %v465
        %v4398 = vmul.f32 %v3844, %v466
        %v4399 = vmul.f32 %v3851, %v467
        %v4400 = vmul.f32 %v3858, %v468
        %v4401 = vmul.f32 %v3865, %v469
        %v4402 = vmul.f32 %v3872, %v470
        %v4403 = vmul.f32 %v3879, %v471
        %v4404 = vmul.f32 %v3886, %v472
        %v4405 = vmul.f32 %v3893, %v473
        %v4406 = vmul.f32 %v3900, %v474
        %v4407 = vmul.f32 %v3907, %v475
        %v4408 = vmul.f32 %v3914, %v476
        %v4409 = vmul.f32 %v3921, %v477
        %v4410 = vmul.f32 %v3928, %v478
        %v4411 = vmul.f32 %v3935, %v479
        %v4412 = vmul.f32 %v3942, %v480
        %v4413 = vmul.f32 %v3949, %v481
        %v4414 = vmul.f32 %v3956, %v482
        %v4415 = vmul.f32 %v3963, %v483
        %v4416 = vmul.f32 %v3970, %v484
        %v4417 = vmul.f32 %v3977, %v485
        %v4418 = vmul.f32 %v3984, %v486
        %v4419 = vmul.f32 %v3991, %v487
        %v4420 = vmul.f32 %v3998, %v488
        %v4421 = vmul.f32 %v4005, %v489
        %v4422 = vmul.f32 %v4012, %v490
        %v4423 = vmul.f32 %v4019, %v491
        %v4424 = vmul.f32 %v4026, %v492
        %v4425 = vmul.f32 %v4033, %v493
        %v4426 = vmul.f32 %v4040, %v494
        %v4427 = vmul.f32 %v4047, %v495
        %v4428 = vmul.f32 %v4054, %v496
        %v4429 = vmul.f32 %v4061, %v497
        %v4430 = vmul.f32 %v4068, %v498
        %v4431 = vmul.f32 %v4075, %v499
        %v4432 = vmul.f32 %v4082, %v500
        %v4433 = vmul.f32 %v4089, %v501
        %v4434 = vmul.f32 %v4096, %v502
        %v4435 = vmul.f32 %v4103, %v503
        %v4436 = vmul.f32 %v4110, %v504
        %v4437 = vmul.f32 %v4117, %v505
        %v4438 = vmul.f32 %v4124, %v506
        %v4439 = vmul.f32 %v4131, %v507
        %v4440 = vmul.f32 %v4138, %v508
        %v4441 = vmul.f32 %v4145, %v509
        %v4442 = vmul.f32 %v4152, %v510
        %v4443 = vmul.f32 %v4159, %v511
        %v4444 = vmul.f32 %v4166, %v512
        %v4445 = vmul.f32 %v4173, %v513
        %v4446 = vmul.f32 %v4180, %v514
        %v4447 = vmul.f32 %v4187, %v515
        %v4448 = vmul.f32 %v4194, %v516
        %v4449 = vmul.f32 %v4201, %v517
        %v4450 = vmul.f32 %v4208, %v518
        %v4451 = vmul.f32 %v4215, %v519
        %v4452 = vmul.f32 %v4222, %v520
        %v4453 = vmul.f32 %v4229, %v521
        %v4454 = vmul.f32 %v4236, %v522
        %v4455 = vmul.f32 %v4243, %v523
        %v4456 = vmul.f32 %v4250, %v524
        %v4457 = vmul.f32 %v4257, %v525
        %v4458 = vmul.f32 %v4264, %v526
        %v4459 = vmul.f32 %v4271, %v527
        %v4460 = vmul.f32 %v4278, %v528
        %v4461 = vmul.f32 %v4285, %v529
        %v4462 = vmul.f32 %v4292, %v530
        %v4463 = vmul.f32 %v4299, %v531
        %v4464 = vmul.f32 %v4306, %v532
        %v4465 = vmul.f32 %v4313, %v533
        %v4466 = vmul.f32 %v4320, %v534
        %v4467 = vmul.f32 %v4327, %v535
        %v4468 = vmul.f32 %v4334, %v536
        %v4469 = vmul.f32 %v4341, %v537
        %v4470 = vrot.slane %v4342, 4
        %v4471 = vadd.f32 %v4342, %v4470
        %v4472 = vrot.slane %v4471, 2
        %v4473 = vadd.f32 %v4471, %v4472
        %v4474 = vrot.slane %v4473, 1
        %v4475 = vadd.f32 %v4473, %v4474
        %v4476 = vrot.slane %v4343, 4
        %v4477 = vadd.f32 %v4343, %v4476
        %v4478 = vrot.slane %v4477, 2
        %v4479 = vadd.f32 %v4477, %v4478
        %v4480 = vrot.slane %v4479, 1
        %v4481 = vadd.f32 %v4479, %v4480
        %v4482 = vrot.slane %v4344, 4
        %v4483 = vadd.f32 %v4344, %v4482
        %v4484 = vrot.slane %v4483, 2
        %v4485 = vadd.f32 %v4483, %v4484
        %v4486 = vrot.slane %v4485, 1
        %v4487 = vadd.f32 %v4485, %v4486
        %v4488 = vrot.slane %v4345, 4
        %v4489 = vadd.f32 %v4345, %v4488
        %v4490 = vrot.slane %v4489, 2
        %v4491 = vadd.f32 %v4489, %v4490
        %v4492 = vrot.slane %v4491, 1
        %v4493 = vadd.f32 %v4491, %v4492
        %v4494 = vrot.slane %v4346, 4
        %v4495 = vadd.f32 %v4346, %v4494
        %v4496 = vrot.slane %v4495, 2
        %v4497 = vadd.f32 %v4495, %v4496
        %v4498 = vrot.slane %v4497, 1
        %v4499 = vadd.f32 %v4497, %v4498
        %v4500 = vrot.slane %v4347, 4
        %v4501 = vadd.f32 %v4347, %v4500
        %v4502 = vrot.slane %v4501, 2
        %v4503 = vadd.f32 %v4501, %v4502
        %v4504 = vrot.slane %v4503, 1
        %v4505 = vadd.f32 %v4503, %v4504
        %v4506 = vrot.slane %v4348, 4
        %v4507 = vadd.f32 %v4348, %v4506
        %v4508 = vrot.slane %v4507, 2
        %v4509 = vadd.f32 %v4507, %v4508
        %v4510 = vrot.slane %v4509, 1
        %v4511 = vadd.f32 %v4509, %v4510
        %v4512 = vrot.slane %v4349, 4
        %v4513 = vadd.f32 %v4349, %v4512
        %v4514 = vrot.slane %v4513, 2
        %v4515 = vadd.f32 %v4513, %v4514
        %v4516 = vrot.slane %v4515, 1
        %v4517 = vadd.f32 %v4515, %v4516
        %v4518 = vrot.slane %v4350, 4
        %v4519 = vadd.f32 %v4350, %v4518
        %v4520 = vrot.slane %v4519, 2
        %v4521 = vadd.f32 %v4519, %v4520
        %v4522 = vrot.slane %v4521, 1
        %v4523 = vadd.f32 %v4521, %v4522
        %v4524 = vrot.slane %v4351, 4
        %v4525 = vadd.f32 %v4351, %v4524
        %v4526 = vrot.slane %v4525, 2
        %v4527 = vadd.f32 %v4525, %v4526
        %v4528 = vrot.slane %v4527, 1
        %v4529 = vadd.f32 %v4527, %v4528
        %v4530 = vrot.slane %v4352, 4
        %v4531 = vadd.f32 %v4352, %v4530
        %v4532 = vrot.slane %v4531, 2
        %v4533 = vadd.f32 %v4531, %v4532
        %v4534 = vrot.slane %v4533, 1
        %v4535 = vadd.f32 %v4533, %v4534
        %v4536 = vrot.slane %v4353, 4
        %v4537 = vadd.f32 %v4353, %v4536
        %v4538 = vrot.slane %v4537, 2
        %v4539 = vadd.f32 %v4537, %v4538
        %v4540 = vrot.slane %v4539, 1
        %v4541 = vadd.f32 %v4539, %v4540
        %v4542 = vrot.slane %v4354, 4
        %v4543 = vadd.f32 %v4354, %v4542
        %v4544 = vrot.slane %v4543, 2
        %v4545 = vadd.f32 %v4543, %v4544
        %v4546 = vrot.slane %v4545, 1
        %v4547 = vadd.f32 %v4545, %v4546
        %v4548 = vrot.slane %v4355, 4
        %v4549 = vadd.f32 %v4355, %v4548
        %v4550 = vrot.slane %v4549, 2
        %v4551 = vadd.f32 %v4549, %v4550
        %v4552 = vrot.slane %v4551, 1
        %v4553 = vadd.f32 %v4551, %v4552
        %v4554 = vrot.slane %v4356, 4
        %v4555 = vadd.f32 %v4356, %v4554
        %v4556 = vrot.slane %v4555, 2
        %v4557 = vadd.f32 %v4555, %v4556
        %v4558 = vrot.slane %v4557, 1
        %v4559 = vadd.f32 %v4557, %v4558
        %v4560 = vrot.slane %v4357, 4
        %v4561 = vadd.f32 %v4357, %v4560
        %v4562 = vrot.slane %v4561, 2
        %v4563 = vadd.f32 %v4561, %v4562
        %v4564 = vrot.slane %v4563, 1
        %v4565 = vadd.f32 %v4563, %v4564
        %v4566 = vrot.slane %v4358, 4
        %v4567 = vadd.f32 %v4358, %v4566
        %v4568 = vrot.slane %v4567, 2
        %v4569 = vadd.f32 %v4567, %v4568
        %v4570 = vrot.slane %v4569, 1
        %v4571 = vadd.f32 %v4569, %v4570
        %v4572 = vrot.slane %v4359, 4
        %v4573 = vadd.f32 %v4359, %v4572
        %v4574 = vrot.slane %v4573, 2
        %v4575 = vadd.f32 %v4573, %v4574
        %v4576 = vrot.slane %v4575, 1
        %v4577 = vadd.f32 %v4575, %v4576
        %v4578 = vrot.slane %v4360, 4
        %v4579 = vadd.f32 %v4360, %v4578
        %v4580 = vrot.slane %v4579, 2
        %v4581 = vadd.f32 %v4579, %v4580
        %v4582 = vrot.slane %v4581, 1
        %v4583 = vadd.f32 %v4581, %v4582
        %v4584 = vrot.slane %v4361, 4
        %v4585 = vadd.f32 %v4361, %v4584
        %v4586 = vrot.slane %v4585, 2
        %v4587 = vadd.f32 %v4585, %v4586
        %v4588 = vrot.slane %v4587, 1
        %v4589 = vadd.f32 %v4587, %v4588
        %v4590 = vrot.slane %v4362, 4
        %v4591 = vadd.f32 %v4362, %v4590
        %v4592 = vrot.slane %v4591, 2
        %v4593 = vadd.f32 %v4591, %v4592
        %v4594 = vrot.slane %v4593, 1
        %v4595 = vadd.f32 %v4593, %v4594
        %v4596 = vrot.slane %v4363, 4
        %v4597 = vadd.f32 %v4363, %v4596
        %v4598 = vrot.slane %v4597, 2
        %v4599 = vadd.f32 %v4597, %v4598
        %v4600 = vrot.slane %v4599, 1
        %v4601 = vadd.f32 %v4599, %v4600
        %v4602 = vrot.slane %v4364, 4
        %v4603 = vadd.f32 %v4364, %v4602
        %v4604 = vrot.slane %v4603, 2
        %v4605 = vadd.f32 %v4603, %v4604
        %v4606 = vrot.slane %v4605, 1
        %v4607 = vadd.f32 %v4605, %v4606
        %v4608 = vrot.slane %v4365, 4
        %v4609 = vadd.f32 %v4365, %v4608
        %v4610 = vrot.slane %v4609, 2
        %v4611 = vadd.f32 %v4609, %v4610
        %v4612 = vrot.slane %v4611, 1
        %v4613 = vadd.f32 %v4611, %v4612
        %v4614 = vrot.slane %v4366, 4
        %v4615 = vadd.f32 %v4366, %v4614
        %v4616 = vrot.slane %v4615, 2
        %v4617 = vadd.f32 %v4615, %v4616
        %v4618 = vrot.slane %v4617, 1
        %v4619 = vadd.f32 %v4617, %v4618
        %v4620 = vrot.slane %v4367, 4
        %v4621 = vadd.f32 %v4367, %v4620
        %v4622 = vrot.slane %v4621, 2
        %v4623 = vadd.f32 %v4621, %v4622
        %v4624 = vrot.slane %v4623, 1
        %v4625 = vadd.f32 %v4623, %v4624
        %v4626 = vrot.slane %v4368, 4
        %v4627 = vadd.f32 %v4368, %v4626
        %v4628 = vrot.slane %v4627, 2
        %v4629 = vadd.f32 %v4627, %v4628
        %v4630 = vrot.slane %v4629, 1
        %v4631 = vadd.f32 %v4629, %v4630
        %v4632 = vrot.slane %v4369, 4
        %v4633 = vadd.f32 %v4369, %v4632
        %v4634 = vrot.slane %v4633, 2
        %v4635 = vadd.f32 %v4633, %v4634
        %v4636 = vrot.slane %v4635, 1
        %v4637 = vadd.f32 %v4635, %v4636
        %v4638 = vrot.slane %v4370, 4
        %v4639 = vadd.f32 %v4370, %v4638
        %v4640 = vrot.slane %v4639, 2
        %v4641 = vadd.f32 %v4639, %v4640
        %v4642 = vrot.slane %v4641, 1
        %v4643 = vadd.f32 %v4641, %v4642
        %v4644 = vrot.slane %v4371, 4
        %v4645 = vadd.f32 %v4371, %v4644
        %v4646 = vrot.slane %v4645, 2
        %v4647 = vadd.f32 %v4645, %v4646
        %v4648 = vrot.slane %v4647, 1
        %v4649 = vadd.f32 %v4647, %v4648
        %v4650 = vrot.slane %v4372, 4
        %v4651 = vadd.f32 %v4372, %v4650
        %v4652 = vrot.slane %v4651, 2
        %v4653 = vadd.f32 %v4651, %v4652
        %v4654 = vrot.slane %v4653, 1
        %v4655 = vadd.f32 %v4653, %v4654
        %v4656 = vrot.slane %v4373, 4
        %v4657 = vadd.f32 %v4373, %v4656
        %v4658 = vrot.slane %v4657, 2
        %v4659 = vadd.f32 %v4657, %v4658
        %v4660 = vrot.slane %v4659, 1
        %v4661 = vadd.f32 %v4659, %v4660
        %v4662 = vrot.slane %v4374, 4
        %v4663 = vadd.f32 %v4374, %v4662
        %v4664 = vrot.slane %v4663, 2
        %v4665 = vadd.f32 %v4663, %v4664
        %v4666 = vrot.slane %v4665, 1
        %v4667 = vadd.f32 %v4665, %v4666
        %v4668 = vrot.slane %v4375, 4
        %v4669 = vadd.f32 %v4375, %v4668
        %v4670 = vrot.slane %v4669, 2
        %v4671 = vadd.f32 %v4669, %v4670
        %v4672 = vrot.slane %v4671, 1
        %v4673 = vadd.f32 %v4671, %v4672
        %v4674 = vrot.slane %v4376, 4
        %v4675 = vadd.f32 %v4376, %v4674
        %v4676 = vrot.slane %v4675, 2
        %v4677 = vadd.f32 %v4675, %v4676
        %v4678 = vrot.slane %v4677, 1
        %v4679 = vadd.f32 %v4677, %v4678
        %v4680 = vrot.slane %v4377, 4
        %v4681 = vadd.f32 %v4377, %v4680
        %v4682 = vrot.slane %v4681, 2
        %v4683 = vadd.f32 %v4681, %v4682
        %v4684 = vrot.slane %v4683, 1
        %v4685 = vadd.f32 %v4683, %v4684
        %v4686 = vrot.slane %v4378, 4
        %v4687 = vadd.f32 %v4378, %v4686
        %v4688 = vrot.slane %v4687, 2
        %v4689 = vadd.f32 %v4687, %v4688
        %v4690 = vrot.slane %v4689, 1
        %v4691 = vadd.f32 %v4689, %v4690
        %v4692 = vrot.slane %v4379, 4
        %v4693 = vadd.f32 %v4379, %v4692
        %v4694 = vrot.slane %v4693, 2
        %v4695 = vadd.f32 %v4693, %v4694
        %v4696 = vrot.slane %v4695, 1
        %v4697 = vadd.f32 %v4695, %v4696
        %v4698 = vrot.slane %v4380, 4
        %v4699 = vadd.f32 %v4380, %v4698
        %v4700 = vrot.slane %v4699, 2
        %v4701 = vadd.f32 %v4699, %v4700
        %v4702 = vrot.slane %v4701, 1
        %v4703 = vadd.f32 %v4701, %v4702
        %v4704 = vrot.slane %v4381, 4
        %v4705 = vadd.f32 %v4381, %v4704
        %v4706 = vrot.slane %v4705, 2
        %v4707 = vadd.f32 %v4705, %v4706
        %v4708 = vrot.slane %v4707, 1
        %v4709 = vadd.f32 %v4707, %v4708
        %v4710 = vrot.slane %v4382, 4
        %v4711 = vadd.f32 %v4382, %v4710
        %v4712 = vrot.slane %v4711, 2
        %v4713 = vadd.f32 %v4711, %v4712
        %v4714 = vrot.slane %v4713, 1
        %v4715 = vadd.f32 %v4713, %v4714
        %v4716 = vrot.slane %v4383, 4
        %v4717 = vadd.f32 %v4383, %v4716
        %v4718 = vrot.slane %v4717, 2
        %v4719 = vadd.f32 %v4717, %v4718
        %v4720 = vrot.slane %v4719, 1
        %v4721 = vadd.f32 %v4719, %v4720
        %v4722 = vrot.slane %v4384, 4
        %v4723 = vadd.f32 %v4384, %v4722
        %v4724 = vrot.slane %v4723, 2
        %v4725 = vadd.f32 %v4723, %v4724
        %v4726 = vrot.slane %v4725, 1
        %v4727 = vadd.f32 %v4725, %v4726
        %v4728 = vrot.slane %v4385, 4
        %v4729 = vadd.f32 %v4385, %v4728
        %v4730 = vrot.slane %v4729, 2
        %v4731 = vadd.f32 %v4729, %v4730
        %v4732 = vrot.slane %v4731, 1
        %v4733 = vadd.f32 %v4731, %v4732
        %v4734 = vrot.slane %v4386, 4
        %v4735 = vadd.f32 %v4386, %v4734
        %v4736 = vrot.slane %v4735, 2
        %v4737 = vadd.f32 %v4735, %v4736
        %v4738 = vrot.slane %v4737, 1
        %v4739 = vadd.f32 %v4737, %v4738
        %v4740 = vrot.slane %v4387, 4
        %v4741 = vadd.f32 %v4387, %v4740
        %v4742 = vrot.slane %v4741, 2
        %v4743 = vadd.f32 %v4741, %v4742
        %v4744 = vrot.slane %v4743, 1
        %v4745 = vadd.f32 %v4743, %v4744
        %v4746 = vrot.slane %v4388, 4
        %v4747 = vadd.f32 %v4388, %v4746
        %v4748 = vrot.slane %v4747, 2
        %v4749 = vadd.f32 %v4747, %v4748
        %v4750 = vrot.slane %v4749, 1
        %v4751 = vadd.f32 %v4749, %v4750
        %v4752 = vrot.slane %v4389, 4
        %v4753 = vadd.f32 %v4389, %v4752
        %v4754 = vrot.slane %v4753, 2
        %v4755 = vadd.f32 %v4753, %v4754
        %v4756 = vrot.slane %v4755, 1
        %v4757 = vadd.f32 %v4755, %v4756
        %v4758 = vrot.slane %v4390, 4
        %v4759 = vadd.f32 %v4390, %v4758
        %v4760 = vrot.slane %v4759, 2
        %v4761 = vadd.f32 %v4759, %v4760
        %v4762 = vrot.slane %v4761, 1
        %v4763 = vadd.f32 %v4761, %v4762
        %v4764 = vrot.slane %v4391, 4
        %v4765 = vadd.f32 %v4391, %v4764
        %v4766 = vrot.slane %v4765, 2
        %v4767 = vadd.f32 %v4765, %v4766
        %v4768 = vrot.slane %v4767, 1
        %v4769 = vadd.f32 %v4767, %v4768
        %v4770 = vrot.slane %v4392, 4
        %v4771 = vadd.f32 %v4392, %v4770
        %v4772 = vrot.slane %v4771, 2
        %v4773 = vadd.f32 %v4771, %v4772
        %v4774 = vrot.slane %v4773, 1
        %v4775 = vadd.f32 %v4773, %v4774
        %v4776 = vrot.slane %v4393, 4
        %v4777 = vadd.f32 %v4393, %v4776
        %v4778 = vrot.slane %v4777, 2
        %v4779 = vadd.f32 %v4777, %v4778
        %v4780 = vrot.slane %v4779, 1
        %v4781 = vadd.f32 %v4779, %v4780
        %v4782 = vrot.slane %v4394, 4
        %v4783 = vadd.f32 %v4394, %v4782
        %v4784 = vrot.slane %v4783, 2
        %v4785 = vadd.f32 %v4783, %v4784
        %v4786 = vrot.slane %v4785, 1
        %v4787 = vadd.f32 %v4785, %v4786
        %v4788 = vrot.slane %v4395, 4
        %v4789 = vadd.f32 %v4395, %v4788
        %v4790 = vrot.slane %v4789, 2
        %v4791 = vadd.f32 %v4789, %v4790
        %v4792 = vrot.slane %v4791, 1
        %v4793 = vadd.f32 %v4791, %v4792
        %v4794 = vrot.slane %v4396, 4
        %v4795 = vadd.f32 %v4396, %v4794
        %v4796 = vrot.slane %v4795, 2
        %v4797 = vadd.f32 %v4795, %v4796
        %v4798 = vrot.slane %v4797, 1
        %v4799 = vadd.f32 %v4797, %v4798
        %v4800 = vrot.slane %v4397, 4
        %v4801 = vadd.f32 %v4397, %v4800
        %v4802 = vrot.slane %v4801, 2
        %v4803 = vadd.f32 %v4801, %v4802
        %v4804 = vrot.slane %v4803, 1
        %v4805 = vadd.f32 %v4803, %v4804
        %v4806 = vrot.slane %v4398, 4
        %v4807 = vadd.f32 %v4398, %v4806
        %v4808 = vrot.slane %v4807, 2
        %v4809 = vadd.f32 %v4807, %v4808
        %v4810 = vrot.slane %v4809, 1
        %v4811 = vadd.f32 %v4809, %v4810
        %v4812 = vrot.slane %v4399, 4
        %v4813 = vadd.f32 %v4399, %v4812
        %v4814 = vrot.slane %v4813, 2
        %v4815 = vadd.f32 %v4813, %v4814
        %v4816 = vrot.slane %v4815, 1
        %v4817 = vadd.f32 %v4815, %v4816
        %v4818 = vrot.slane %v4400, 4
        %v4819 = vadd.f32 %v4400, %v4818
        %v4820 = vrot.slane %v4819, 2
        %v4821 = vadd.f32 %v4819, %v4820
        %v4822 = vrot.slane %v4821, 1
        %v4823 = vadd.f32 %v4821, %v4822
        %v4824 = vrot.slane %v4401, 4
        %v4825 = vadd.f32 %v4401, %v4824
        %v4826 = vrot.slane %v4825, 2
        %v4827 = vadd.f32 %v4825, %v4826
        %v4828 = vrot.slane %v4827, 1
        %v4829 = vadd.f32 %v4827, %v4828
        %v4830 = vrot.slane %v4402, 4
        %v4831 = vadd.f32 %v4402, %v4830
        %v4832 = vrot.slane %v4831, 2
        %v4833 = vadd.f32 %v4831, %v4832
        %v4834 = vrot.slane %v4833, 1
        %v4835 = vadd.f32 %v4833, %v4834
        %v4836 = vrot.slane %v4403, 4
        %v4837 = vadd.f32 %v4403, %v4836
        %v4838 = vrot.slane %v4837, 2
        %v4839 = vadd.f32 %v4837, %v4838
        %v4840 = vrot.slane %v4839, 1
        %v4841 = vadd.f32 %v4839, %v4840
        %v4842 = vrot.slane %v4404, 4
        %v4843 = vadd.f32 %v4404, %v4842
        %v4844 = vrot.slane %v4843, 2
        %v4845 = vadd.f32 %v4843, %v4844
        %v4846 = vrot.slane %v4845, 1
        %v4847 = vadd.f32 %v4845, %v4846
        %v4848 = vrot.slane %v4405, 4
        %v4849 = vadd.f32 %v4405, %v4848
        %v4850 = vrot.slane %v4849, 2
        %v4851 = vadd.f32 %v4849, %v4850
        %v4852 = vrot.slane %v4851, 1
        %v4853 = vadd.f32 %v4851, %v4852
        %v4854 = vrot.slane %v4406, 4
        %v4855 = vadd.f32 %v4406, %v4854
        %v4856 = vrot.slane %v4855, 2
        %v4857 = vadd.f32 %v4855, %v4856
        %v4858 = vrot.slane %v4857, 1
        %v4859 = vadd.f32 %v4857, %v4858
        %v4860 = vrot.slane %v4407, 4
        %v4861 = vadd.f32 %v4407, %v4860
        %v4862 = vrot.slane %v4861, 2
        %v4863 = vadd.f32 %v4861, %v4862
        %v4864 = vrot.slane %v4863, 1
        %v4865 = vadd.f32 %v4863, %v4864
        %v4866 = vrot.slane %v4408, 4
        %v4867 = vadd.f32 %v4408, %v4866
        %v4868 = vrot.slane %v4867, 2
        %v4869 = vadd.f32 %v4867, %v4868
        %v4870 = vrot.slane %v4869, 1
        %v4871 = vadd.f32 %v4869, %v4870
        %v4872 = vrot.slane %v4409, 4
        %v4873 = vadd.f32 %v4409, %v4872
        %v4874 = vrot.slane %v4873, 2
        %v4875 = vadd.f32 %v4873, %v4874
        %v4876 = vrot.slane %v4875, 1
        %v4877 = vadd.f32 %v4875, %v4876
        %v4878 = vrot.slane %v4410, 4
        %v4879 = vadd.f32 %v4410, %v4878
        %v4880 = vrot.slane %v4879, 2
        %v4881 = vadd.f32 %v4879, %v4880
        %v4882 = vrot.slane %v4881, 1
        %v4883 = vadd.f32 %v4881, %v4882
        %v4884 = vrot.slane %v4411, 4
        %v4885 = vadd.f32 %v4411, %v4884
        %v4886 = vrot.slane %v4885, 2
        %v4887 = vadd.f32 %v4885, %v4886
        %v4888 = vrot.slane %v4887, 1
        %v4889 = vadd.f32 %v4887, %v4888
        %v4890 = vrot.slane %v4412, 4
        %v4891 = vadd.f32 %v4412, %v4890
        %v4892 = vrot.slane %v4891, 2
        %v4893 = vadd.f32 %v4891, %v4892
        %v4894 = vrot.slane %v4893, 1
        %v4895 = vadd.f32 %v4893, %v4894
        %v4896 = vrot.slane %v4413, 4
        %v4897 = vadd.f32 %v4413, %v4896
        %v4898 = vrot.slane %v4897, 2
        %v4899 = vadd.f32 %v4897, %v4898
        %v4900 = vrot.slane %v4899, 1
        %v4901 = vadd.f32 %v4899, %v4900
        %v4902 = vrot.slane %v4414, 4
        %v4903 = vadd.f32 %v4414, %v4902
        %v4904 = vrot.slane %v4903, 2
        %v4905 = vadd.f32 %v4903, %v4904
        %v4906 = vrot.slane %v4905, 1
        %v4907 = vadd.f32 %v4905, %v4906
        %v4908 = vrot.slane %v4415, 4
        %v4909 = vadd.f32 %v4415, %v4908
        %v4910 = vrot.slane %v4909, 2
        %v4911 = vadd.f32 %v4909, %v4910
        %v4912 = vrot.slane %v4911, 1
        %v4913 = vadd.f32 %v4911, %v4912
        %v4914 = vrot.slane %v4416, 4
        %v4915 = vadd.f32 %v4416, %v4914
        %v4916 = vrot.slane %v4915, 2
        %v4917 = vadd.f32 %v4915, %v4916
        %v4918 = vrot.slane %v4917, 1
        %v4919 = vadd.f32 %v4917, %v4918
        %v4920 = vrot.slane %v4417, 4
        %v4921 = vadd.f32 %v4417, %v4920
        %v4922 = vrot.slane %v4921, 2
        %v4923 = vadd.f32 %v4921, %v4922
        %v4924 = vrot.slane %v4923, 1
        %v4925 = vadd.f32 %v4923, %v4924
        %v4926 = vrot.slane %v4418, 4
        %v4927 = vadd.f32 %v4418, %v4926
        %v4928 = vrot.slane %v4927, 2
        %v4929 = vadd.f32 %v4927, %v4928
        %v4930 = vrot.slane %v4929, 1
        %v4931 = vadd.f32 %v4929, %v4930
        %v4932 = vrot.slane %v4419, 4
        %v4933 = vadd.f32 %v4419, %v4932
        %v4934 = vrot.slane %v4933, 2
        %v4935 = vadd.f32 %v4933, %v4934
        %v4936 = vrot.slane %v4935, 1
        %v4937 = vadd.f32 %v4935, %v4936
        %v4938 = vrot.slane %v4420, 4
        %v4939 = vadd.f32 %v4420, %v4938
        %v4940 = vrot.slane %v4939, 2
        %v4941 = vadd.f32 %v4939, %v4940
        %v4942 = vrot.slane %v4941, 1
        %v4943 = vadd.f32 %v4941, %v4942
        %v4944 = vrot.slane %v4421, 4
        %v4945 = vadd.f32 %v4421, %v4944
        %v4946 = vrot.slane %v4945, 2
        %v4947 = vadd.f32 %v4945, %v4946
        %v4948 = vrot.slane %v4947, 1
        %v4949 = vadd.f32 %v4947, %v4948
        %v4950 = vrot.slane %v4422, 4
        %v4951 = vadd.f32 %v4422, %v4950
        %v4952 = vrot.slane %v4951, 2
        %v4953 = vadd.f32 %v4951, %v4952
        %v4954 = vrot.slane %v4953, 1
        %v4955 = vadd.f32 %v4953, %v4954
        %v4956 = vrot.slane %v4423, 4
        %v4957 = vadd.f32 %v4423, %v4956
        %v4958 = vrot.slane %v4957, 2
        %v4959 = vadd.f32 %v4957, %v4958
        %v4960 = vrot.slane %v4959, 1
        %v4961 = vadd.f32 %v4959, %v4960
        %v4962 = vrot.slane %v4424, 4
        %v4963 = vadd.f32 %v4424, %v4962
        %v4964 = vrot.slane %v4963, 2
        %v4965 = vadd.f32 %v4963, %v4964
        %v4966 = vrot.slane %v4965, 1
        %v4967 = vadd.f32 %v4965, %v4966
        %v4968 = vrot.slane %v4425, 4
        %v4969 = vadd.f32 %v4425, %v4968
        %v4970 = vrot.slane %v4969, 2
        %v4971 = vadd.f32 %v4969, %v4970
        %v4972 = vrot.slane %v4971, 1
        %v4973 = vadd.f32 %v4971, %v4972
        %v4974 = vrot.slane %v4426, 4
        %v4975 = vadd.f32 %v4426, %v4974
        %v4976 = vrot.slane %v4975, 2
        %v4977 = vadd.f32 %v4975, %v4976
        %v4978 = vrot.slane %v4977, 1
        %v4979 = vadd.f32 %v4977, %v4978
        %v4980 = vrot.slane %v4427, 4
        %v4981 = vadd.f32 %v4427, %v4980
        %v4982 = vrot.slane %v4981, 2
        %v4983 = vadd.f32 %v4981, %v4982
        %v4984 = vrot.slane %v4983, 1
        %v4985 = vadd.f32 %v4983, %v4984
        %v4986 = vrot.slane %v4428, 4
        %v4987 = vadd.f32 %v4428, %v4986
        %v4988 = vrot.slane %v4987, 2
        %v4989 = vadd.f32 %v4987, %v4988
        %v4990 = vrot.slane %v4989, 1
        %v4991 = vadd.f32 %v4989, %v4990
        %v4992 = vrot.slane %v4429, 4
        %v4993 = vadd.f32 %v4429, %v4992
        %v4994 = vrot.slane %v4993, 2
        %v4995 = vadd.f32 %v4993, %v4994
        %v4996 = vrot.slane %v4995, 1
        %v4997 = vadd.f32 %v4995, %v4996
        %v4998 = vrot.slane %v4430, 4
        %v4999 = vadd.f32 %v4430, %v4998
        %v5000 = vrot.slane %v4999, 2
        %v5001 = vadd.f32 %v4999, %v5000
        %v5002 = vrot.slane %v5001, 1
        %v5003 = vadd.f32 %v5001, %v5002
        %v5004 = vrot.slane %v4431, 4
        %v5005 = vadd.f32 %v4431, %v5004
        %v5006 = vrot.slane %v5005, 2
        %v5007 = vadd.f32 %v5005, %v5006
        %v5008 = vrot.slane %v5007, 1
        %v5009 = vadd.f32 %v5007, %v5008
        %v5010 = vrot.slane %v4432, 4
        %v5011 = vadd.f32 %v4432, %v5010
        %v5012 = vrot.slane %v5011, 2
        %v5013 = vadd.f32 %v5011, %v5012
        %v5014 = vrot.slane %v5013, 1
        %v5015 = vadd.f32 %v5013, %v5014
        %v5016 = vrot.slane %v4433, 4
        %v5017 = vadd.f32 %v4433, %v5016
        %v5018 = vrot.slane %v5017, 2
        %v5019 = vadd.f32 %v5017, %v5018
        %v5020 = vrot.slane %v5019, 1
        %v5021 = vadd.f32 %v5019, %v5020
        %v5022 = vrot.slane %v4434, 4
        %v5023 = vadd.f32 %v4434, %v5022
        %v5024 = vrot.slane %v5023, 2
        %v5025 = vadd.f32 %v5023, %v5024
        %v5026 = vrot.slane %v5025, 1
        %v5027 = vadd.f32 %v5025, %v5026
        %v5028 = vrot.slane %v4435, 4
        %v5029 = vadd.f32 %v4435, %v5028
        %v5030 = vrot.slane %v5029, 2
        %v5031 = vadd.f32 %v5029, %v5030
        %v5032 = vrot.slane %v5031, 1
        %v5033 = vadd.f32 %v5031, %v5032
        %v5034 = vrot.slane %v4436, 4
        %v5035 = vadd.f32 %v4436, %v5034
        %v5036 = vrot.slane %v5035, 2
        %v5037 = vadd.f32 %v5035, %v5036
        %v5038 = vrot.slane %v5037, 1
        %v5039 = vadd.f32 %v5037, %v5038
        %v5040 = vrot.slane %v4437, 4
        %v5041 = vadd.f32 %v4437, %v5040
        %v5042 = vrot.slane %v5041, 2
        %v5043 = vadd.f32 %v5041, %v5042
        %v5044 = vrot.slane %v5043, 1
        %v5045 = vadd.f32 %v5043, %v5044
        %v5046 = vrot.slane %v4438, 4
        %v5047 = vadd.f32 %v4438, %v5046
        %v5048 = vrot.slane %v5047, 2
        %v5049 = vadd.f32 %v5047, %v5048
        %v5050 = vrot.slane %v5049, 1
        %v5051 = vadd.f32 %v5049, %v5050
        %v5052 = vrot.slane %v4439, 4
        %v5053 = vadd.f32 %v4439, %v5052
        %v5054 = vrot.slane %v5053, 2
        %v5055 = vadd.f32 %v5053, %v5054
        %v5056 = vrot.slane %v5055, 1
        %v5057 = vadd.f32 %v5055, %v5056
        %v5058 = vrot.slane %v4440, 4
        %v5059 = vadd.f32 %v4440, %v5058
        %v5060 = vrot.slane %v5059, 2
        %v5061 = vadd.f32 %v5059, %v5060
        %v5062 = vrot.slane %v5061, 1
        %v5063 = vadd.f32 %v5061, %v5062
        %v5064 = vrot.slane %v4441, 4
        %v5065 = vadd.f32 %v4441, %v5064
        %v5066 = vrot.slane %v5065, 2
        %v5067 = vadd.f32 %v5065, %v5066
        %v5068 = vrot.slane %v5067, 1
        %v5069 = vadd.f32 %v5067, %v5068
        %v5070 = vrot.slane %v4442, 4
        %v5071 = vadd.f32 %v4442, %v5070
        %v5072 = vrot.slane %v5071, 2
        %v5073 = vadd.f32 %v5071, %v5072
        %v5074 = vrot.slane %v5073, 1
        %v5075 = vadd.f32 %v5073, %v5074
        %v5076 = vrot.slane %v4443, 4
        %v5077 = vadd.f32 %v4443, %v5076
        %v5078 = vrot.slane %v5077, 2
        %v5079 = vadd.f32 %v5077, %v5078
        %v5080 = vrot.slane %v5079, 1
        %v5081 = vadd.f32 %v5079, %v5080
        %v5082 = vrot.slane %v4444, 4
        %v5083 = vadd.f32 %v4444, %v5082
        %v5084 = vrot.slane %v5083, 2
        %v5085 = vadd.f32 %v5083, %v5084
        %v5086 = vrot.slane %v5085, 1
        %v5087 = vadd.f32 %v5085, %v5086
        %v5088 = vrot.slane %v4445, 4
        %v5089 = vadd.f32 %v4445, %v5088
        %v5090 = vrot.slane %v5089, 2
        %v5091 = vadd.f32 %v5089, %v5090
        %v5092 = vrot.slane %v5091, 1
        %v5093 = vadd.f32 %v5091, %v5092
        %v5094 = vrot.slane %v4446, 4
        %v5095 = vadd.f32 %v4446, %v5094
        %v5096 = vrot.slane %v5095, 2
        %v5097 = vadd.f32 %v5095, %v5096
        %v5098 = vrot.slane %v5097, 1
        %v5099 = vadd.f32 %v5097, %v5098
        %v5100 = vrot.slane %v4447, 4
        %v5101 = vadd.f32 %v4447, %v5100
        %v5102 = vrot.slane %v5101, 2
        %v5103 = vadd.f32 %v5101, %v5102
        %v5104 = vrot.slane %v5103, 1
        %v5105 = vadd.f32 %v5103, %v5104
        %v5106 = vrot.slane %v4448, 4
        %v5107 = vadd.f32 %v4448, %v5106
        %v5108 = vrot.slane %v5107, 2
        %v5109 = vadd.f32 %v5107, %v5108
        %v5110 = vrot.slane %v5109, 1
        %v5111 = vadd.f32 %v5109, %v5110
        %v5112 = vrot.slane %v4449, 4
        %v5113 = vadd.f32 %v4449, %v5112
        %v5114 = vrot.slane %v5113, 2
        %v5115 = vadd.f32 %v5113, %v5114
        %v5116 = vrot.slane %v5115, 1
        %v5117 = vadd.f32 %v5115, %v5116
        %v5118 = vrot.slane %v4450, 4
        %v5119 = vadd.f32 %v4450, %v5118
        %v5120 = vrot.slane %v5119, 2
        %v5121 = vadd.f32 %v5119, %v5120
        %v5122 = vrot.slane %v5121, 1
        %v5123 = vadd.f32 %v5121, %v5122
        %v5124 = vrot.slane %v4451, 4
        %v5125 = vadd.f32 %v4451, %v5124
        %v5126 = vrot.slane %v5125, 2
        %v5127 = vadd.f32 %v5125, %v5126
        %v5128 = vrot.slane %v5127, 1
        %v5129 = vadd.f32 %v5127, %v5128
        %v5130 = vrot.slane %v4452, 4
        %v5131 = vadd.f32 %v4452, %v5130
        %v5132 = vrot.slane %v5131, 2
        %v5133 = vadd.f32 %v5131, %v5132
        %v5134 = vrot.slane %v5133, 1
        %v5135 = vadd.f32 %v5133, %v5134
        %v5136 = vrot.slane %v4453, 4
        %v5137 = vadd.f32 %v4453, %v5136
        %v5138 = vrot.slane %v5137, 2
        %v5139 = vadd.f32 %v5137, %v5138
        %v5140 = vrot.slane %v5139, 1
        %v5141 = vadd.f32 %v5139, %v5140
        %v5142 = vrot.slane %v4454, 4
        %v5143 = vadd.f32 %v4454, %v5142
        %v5144 = vrot.slane %v5143, 2
        %v5145 = vadd.f32 %v5143, %v5144
        %v5146 = vrot.slane %v5145, 1
        %v5147 = vadd.f32 %v5145, %v5146
        %v5148 = vrot.slane %v4455, 4
        %v5149 = vadd.f32 %v4455, %v5148
        %v5150 = vrot.slane %v5149, 2
        %v5151 = vadd.f32 %v5149, %v5150
        %v5152 = vrot.slane %v5151, 1
        %v5153 = vadd.f32 %v5151, %v5152
        %v5154 = vrot.slane %v4456, 4
        %v5155 = vadd.f32 %v4456, %v5154
        %v5156 = vrot.slane %v5155, 2
        %v5157 = vadd.f32 %v5155, %v5156
        %v5158 = vrot.slane %v5157, 1
        %v5159 = vadd.f32 %v5157, %v5158
        %v5160 = vrot.slane %v4457, 4
        %v5161 = vadd.f32 %v4457, %v5160
        %v5162 = vrot.slane %v5161, 2
        %v5163 = vadd.f32 %v5161, %v5162
        %v5164 = vrot.slane %v5163, 1
        %v5165 = vadd.f32 %v5163, %v5164
        %v5166 = vrot.slane %v4458, 4
        %v5167 = vadd.f32 %v4458, %v5166
        %v5168 = vrot.slane %v5167, 2
        %v5169 = vadd.f32 %v5167, %v5168
        %v5170 = vrot.slane %v5169, 1
        %v5171 = vadd.f32 %v5169, %v5170
        %v5172 = vrot.slane %v4459, 4
        %v5173 = vadd.f32 %v4459, %v5172
        %v5174 = vrot.slane %v5173, 2
        %v5175 = vadd.f32 %v5173, %v5174
        %v5176 = vrot.slane %v5175, 1
        %v5177 = vadd.f32 %v5175, %v5176
        %v5178 = vrot.slane %v4460, 4
        %v5179 = vadd.f32 %v4460, %v5178
        %v5180 = vrot.slane %v5179, 2
        %v5181 = vadd.f32 %v5179, %v5180
        %v5182 = vrot.slane %v5181, 1
        %v5183 = vadd.f32 %v5181, %v5182
        %v5184 = vrot.slane %v4461, 4
        %v5185 = vadd.f32 %v4461, %v5184
        %v5186 = vrot.slane %v5185, 2
        %v5187 = vadd.f32 %v5185, %v5186
        %v5188 = vrot.slane %v5187, 1
        %v5189 = vadd.f32 %v5187, %v5188
        %v5190 = vrot.slane %v4462, 4
        %v5191 = vadd.f32 %v4462, %v5190
        %v5192 = vrot.slane %v5191, 2
        %v5193 = vadd.f32 %v5191, %v5192
        %v5194 = vrot.slane %v5193, 1
        %v5195 = vadd.f32 %v5193, %v5194
        %v5196 = vrot.slane %v4463, 4
        %v5197 = vadd.f32 %v4463, %v5196
        %v5198 = vrot.slane %v5197, 2
        %v5199 = vadd.f32 %v5197, %v5198
        %v5200 = vrot.slane %v5199, 1
        %v5201 = vadd.f32 %v5199, %v5200
        %v5202 = vrot.slane %v4464, 4
        %v5203 = vadd.f32 %v4464, %v5202
        %v5204 = vrot.slane %v5203, 2
        %v5205 = vadd.f32 %v5203, %v5204
        %v5206 = vrot.slane %v5205, 1
        %v5207 = vadd.f32 %v5205, %v5206
        %v5208 = vrot.slane %v4465, 4
        %v5209 = vadd.f32 %v4465, %v5208
        %v5210 = vrot.slane %v5209, 2
        %v5211 = vadd.f32 %v5209, %v5210
        %v5212 = vrot.slane %v5211, 1
        %v5213 = vadd.f32 %v5211, %v5212
        %v5214 = vrot.slane %v4466, 4
        %v5215 = vadd.f32 %v4466, %v5214
        %v5216 = vrot.slane %v5215, 2
        %v5217 = vadd.f32 %v5215, %v5216
        %v5218 = vrot.slane %v5217, 1
        %v5219 = vadd.f32 %v5217, %v5218
        %v5220 = vrot.slane %v4467, 4
        %v5221 = vadd.f32 %v4467, %v5220
        %v5222 = vrot.slane %v5221, 2
        %v5223 = vadd.f32 %v5221, %v5222
        %v5224 = vrot.slane %v5223, 1
        %v5225 = vadd.f32 %v5223, %v5224
        %v5226 = vrot.slane %v4468, 4
        %v5227 = vadd.f32 %v4468, %v5226
        %v5228 = vrot.slane %v5227, 2
        %v5229 = vadd.f32 %v5227, %v5228
        %v5230 = vrot.slane %v5229, 1
        %v5231 = vadd.f32 %v5229, %v5230
        %v5232 = vrot.slane %v4469, 4
        %v5233 = vadd.f32 %v4469, %v5232
        %v5234 = vrot.slane %v5233, 2
        %v5235 = vadd.f32 %v5233, %v5234
        %v5236 = vrot.slane %v5235, 1
        %v5237 = vadd.f32 %v5235, %v5236
        %v5254 = vrot.slane %v394, 1
        %v5255 = vrot.slane %v394, 2
        %v5256 = vrot.slane %v394, 3
        %v5257 = vrot.slane %v394, 4
        %v5258 = vrot.slane %v394, 5
        %v5259 = vrot.slane %v394, 6
        %v5260 = vrot.slane %v394, 7
        %v5261 = vrot.slane %v395, 1
        %v5262 = vrot.slane %v395, 2
        %v5263 = vrot.slane %v395, 3
        %v5264 = vrot.slane %v395, 4
        %v5265 = vrot.slane %v395, 5
        %v5266 = vrot.slane %v395, 6
        %v5267 = vrot.slane %v395, 7
        %v5268 = vrot.slane %v396, 1
        %v5269 = vrot.slane %v396, 2
        %v5270 = vrot.slane %v396, 3
        %v5271 = vrot.slane %v396, 4
        %v5272 = vrot.slane %v396, 5
        %v5273 = vrot.slane %v396, 6
        %v5274 = vrot.slane %v396, 7
        %v5275 = vrot.slane %v397, 1
        %v5276 = vrot.slane %v397, 2
        %v5277 = vrot.slane %v397, 3
        %v5278 = vrot.slane %v397, 4
        %v5279 = vrot.slane %v397, 5
        %v5280 = vrot.slane %v397, 6
        %v5281 = vrot.slane %v397, 7
        %v5282 = vrot.slane %v398, 1
        %v5283 = vrot.slane %v398, 2
        %v5284 = vrot.slane %v398, 3
        %v5285 = vrot.slane %v398, 4
        %v5286 = vrot.slane %v398, 5
        %v5287 = vrot.slane %v398, 6
        %v5288 = vrot.slane %v398, 7
        %v5289 = vrot.slane %v399, 1
        %v5290 = vrot.slane %v399, 2
        %v5291 = vrot.slane %v399, 3
        %v5292 = vrot.slane %v399, 4
        %v5293 = vrot.slane %v399, 5
        %v5294 = vrot.slane %v399, 6
        %v5295 = vrot.slane %v399, 7
        %v5296 = vrot.slane %v400, 1
        %v5297 = vrot.slane %v400, 2
        %v5298 = vrot.slane %v400, 3
        %v5299 = vrot.slane %v400, 4
        %v5300 = vrot.slane %v400, 5
        %v5301 = vrot.slane %v400, 6
        %v5302 = vrot.slane %v400, 7
        %v5303 = vrot.slane %v401, 1
        %v5304 = vrot.slane %v401, 2
        %v5305 = vrot.slane %v401, 3
        %v5306 = vrot.slane %v401, 4
        %v5307 = vrot.slane %v401, 5
        %v5308 = vrot.slane %v401, 6
        %v5309 = vrot.slane %v401, 7
        %v5310 = vrot.slane %v402, 1
        %v5311 = vrot.slane %v402, 2
        %v5312 = vrot.slane %v402, 3
        %v5313 = vrot.slane %v402, 4
        %v5314 = vrot.slane %v402, 5
        %v5315 = vrot.slane %v402, 6
        %v5316 = vrot.slane %v402, 7
        %v5317 = vrot.slane %v403, 1
        %v5318 = vrot.slane %v403, 2
        %v5319 = vrot.slane %v403, 3
        %v5320 = vrot.slane %v403, 4
        %v5321 = vrot.slane %v403, 5
        %v5322 = vrot.slane %v403, 6
        %v5323 = vrot.slane %v403, 7
        %v5324 = vrot.slane %v404, 1
        %v5325 = vrot.slane %v404, 2
        %v5326 = vrot.slane %v404, 3
        %v5327 = vrot.slane %v404, 4
        %v5328 = vrot.slane %v404, 5
        %v5329 = vrot.slane %v404, 6
        %v5330 = vrot.slane %v404, 7
        %v5331 = vrot.slane %v405, 1
        %v5332 = vrot.slane %v405, 2
        %v5333 = vrot.slane %v405, 3
        %v5334 = vrot.slane %v405, 4
        %v5335 = vrot.slane %v405, 5
        %v5336 = vrot.slane %v405, 6
        %v5337 = vrot.slane %v405, 7
        %v5338 = vrot.slane %v406, 1
        %v5339 = vrot.slane %v406, 2
        %v5340 = vrot.slane %v406, 3
        %v5341 = vrot.slane %v406, 4
        %v5342 = vrot.slane %v406, 5
        %v5343 = vrot.slane %v406, 6
        %v5344 = vrot.slane %v406, 7
        %v5345 = vrot.slane %v407, 1
        %v5346 = vrot.slane %v407, 2
        %v5347 = vrot.slane %v407, 3
        %v5348 = vrot.slane %v407, 4
        %v5349 = vrot.slane %v407, 5
        %v5350 = vrot.slane %v407, 6
        %v5351 = vrot.slane %v407, 7
        %v5352 = vrot.slane %v408, 1
        %v5353 = vrot.slane %v408, 2
        %v5354 = vrot.slane %v408, 3
        %v5355 = vrot.slane %v408, 4
        %v5356 = vrot.slane %v408, 5
        %v5357 = vrot.slane %v408, 6
        %v5358 = vrot.slane %v408, 7
        %v5359 = vrot.slane %v409, 1
        %v5360 = vrot.slane %v409, 2
        %v5361 = vrot.slane %v409, 3
        %v5362 = vrot.slane %v409, 4
        %v5363 = vrot.slane %v409, 5
        %v5364 = vrot.slane %v409, 6
        %v5365 = vrot.slane %v409, 7
        %v5494 = vadd.f32 %v4475, %v394
        %v5495 = vadd.f32 %v4481, %v5254
        %v5496 = vadd.f32 %v4487, %v5255
        %v5497 = vadd.f32 %v4493, %v5256
        %v5498 = vadd.f32 %v4499, %v5257
        %v5499 = vadd.f32 %v4505, %v5258
        %v5500 = vadd.f32 %v4511, %v5259
        %v5501 = vadd.f32 %v4517, %v5260
        %v5502 = vadd.f32 %v4523, %v395
        %v5503 = vadd.f32 %v4529, %v5261
        %v5504 = vadd.f32 %v4535, %v5262
        %v5505 = vadd.f32 %v4541, %v5263
        %v5506 = vadd.f32 %v4547, %v5264
        %v5507 = vadd.f32 %v4553, %v5265
        %v5508 = vadd.f32 %v4559, %v5266
        %v5509 = vadd.f32 %v4565, %v5267
        %v5510 = vadd.f32 %v4571, %v396
        %v5511 = vadd.f32 %v4577, %v5268
        %v5512 = vadd.f32 %v4583, %v5269
        %v5513 = vadd.f32 %v4589, %v5270
        %v5514 = vadd.f32 %v4595, %v5271
        %v5515 = vadd.f32 %v4601, %v5272
        %v5516 = vadd.f32 %v4607, %v5273
        %v5517 = vadd.f32 %v4613, %v5274
        %v5518 = vadd.f32 %v4619, %v397
        %v5519 = vadd.f32 %v4625, %v5275
        %v5520 = vadd.f32 %v4631, %v5276
        %v5521 = vadd.f32 %v4637, %v5277
        %v5522 = vadd.f32 %v4643, %v5278
        %v5523 = vadd.f32 %v4649, %v5279
        %v5524 = vadd.f32 %v4655, %v5280
        %v5525 = vadd.f32 %v4661, %v5281
        %v5526 = vadd.f32 %v4667, %v398
        %v5527 = vadd.f32 %v4673, %v5282
        %v5528 = vadd.f32 %v4679, %v5283
        %v5529 = vadd.f32 %v4685, %v5284
        %v5530 = vadd.f32 %v4691, %v5285
        %v5531 = vadd.f32 %v4697, %v5286
        %v5532 = vadd.f32 %v4703, %v5287
        %v5533 = vadd.f32 %v4709, %v5288
        %v5534 = vadd.f32 %v4715, %v399
        %v5535 = vadd.f32 %v4721, %v5289
        %v5536 = vadd.f32 %v4727, %v5290
        %v5537 = vadd.f32 %v4733, %v5291
        %v5538 = vadd.f32 %v4739, %v5292
        %v5539 = vadd.f32 %v4745, %v5293
        %v5540 = vadd.f32 %v4751, %v5294
        %v5541 = vadd.f32 %v4757, %v5295
        %v5542 = vadd.f32 %v4763, %v400
        %v5543 = vadd.f32 %v4769, %v5296
        %v5544 = vadd.f32 %v4775, %v5297
        %v5545 = vadd.f32 %v4781, %v5298
        %v5546 = vadd.f32 %v4787, %v5299
        %v5547 = vadd.f32 %v4793, %v5300
        %v5548 = vadd.f32 %v4799, %v5301
        %v5549 = vadd.f32 %v4805, %v5302
        %v5550 = vadd.f32 %v4811, %v401
        %v5551 = vadd.f32 %v4817, %v5303
        %v5552 = vadd.f32 %v4823, %v5304
        %v5553 = vadd.f32 %v4829, %v5305
        %v5554 = vadd.f32 %v4835, %v5306
        %v5555 = vadd.f32 %v4841, %v5307
        %v5556 = vadd.f32 %v4847, %v5308
        %v5557 = vadd.f32 %v4853, %v5309
        %v5558 = vadd.f32 %v4859, %v402
        %v5559 = vadd.f32 %v4865, %v5310
        %v5560 = vadd.f32 %v4871, %v5311
        %v5561 = vadd.f32 %v4877, %v5312
        %v5562 = vadd.f32 %v4883, %v5313
        %v5563 = vadd.f32 %v4889, %v5314
        %v5564 = vadd.f32 %v4895, %v5315
        %v5565 = vadd.f32 %v4901, %v5316
        %v5566 = vadd.f32 %v4907, %v403
        %v5567 = vadd.f32 %v4913, %v5317
        %v5568 = vadd.f32 %v4919, %v5318
        %v5569 = vadd.f32 %v4925, %v5319
        %v5570 = vadd.f32 %v4931, %v5320
        %v5571 = vadd.f32 %v4937, %v5321
        %v5572 = vadd.f32 %v4943, %v5322
        %v5573 = vadd.f32 %v4949, %v5323
        %v5574 = vadd.f32 %v4955, %v404
        %v5575 = vadd.f32 %v4961, %v5324
        %v5576 = vadd.f32 %v4967, %v5325
        %v5577 = vadd.f32 %v4973, %v5326
        %v5578 = vadd.f32 %v4979, %v5327
        %v5579 = vadd.f32 %v4985, %v5328
        %v5580 = vadd.f32 %v4991, %v5329
        %v5581 = vadd.f32 %v4997, %v5330
        %v5582 = vadd.f32 %v5003, %v405
        %v5583 = vadd.f32 %v5009, %v5331
        %v5584 = vadd.f32 %v5015, %v5332
        %v5585 = vadd.f32 %v5021, %v5333
        %v5586 = vadd.f32 %v5027, %v5334
        %v5587 = vadd.f32 %v5033, %v5335
        %v5588 = vadd.f32 %v5039, %v5336
        %v5589 = vadd.f32 %v5045, %v5337
        %v5590 = vadd.f32 %v5051, %v406
        %v5591 = vadd.f32 %v5057, %v5338
        %v5592 = vadd.f32 %v5063, %v5339
        %v5593 = vadd.f32 %v5069, %v5340
        %v5594 = vadd.f32 %v5075, %v5341
        %v5595 = vadd.f32 %v5081, %v5342
        %v5596 = vadd.f32 %v5087, %v5343
        %v5597 = vadd.f32 %v5093, %v5344
        %v5598 = vadd.f32 %v5099, %v407
        %v5599 = vadd.f32 %v5105, %v5345
        %v5600 = vadd.f32 %v5111, %v5346
        %v5601 = vadd.f32 %v5117, %v5347
        %v5602 = vadd.f32 %v5123, %v5348
        %v5603 = vadd.f32 %v5129, %v5349
        %v5604 = vadd.f32 %v5135, %v5350
        %v5605 = vadd.f32 %v5141, %v5351
        %v5606 = vadd.f32 %v5147, %v408
        %v5607 = vadd.f32 %v5153, %v5352
        %v5608 = vadd.f32 %v5159, %v5353
        %v5609 = vadd.f32 %v5165, %v5354
        %v5610 = vadd.f32 %v5171, %v5355
        %v5611 = vadd.f32 %v5177, %v5356
        %v5612 = vadd.f32 %v5183, %v5357
        %v5613 = vadd.f32 %v5189, %v5358
        %v5614 = vadd.f32 %v5195, %v409
        %v5615 = vadd.f32 %v5201, %v5359
        %v5616 = vadd.f32 %v5207, %v5360
        %v5617 = vadd.f32 %v5213, %v5361
        %v5618 = vadd.f32 %v5219, %v5362
        %v5619 = vadd.f32 %v5225, %v5363
        %v5620 = vadd.f32 %v5231, %v5364
        %v5621 = vadd.f32 %v5237, %v5365
        %v5750 = vrot.slane %v5495, 7
        %v5751 = vsel %vm3118, %v5750, %v5494
        %v5752 = vrot.slane %v5496, 6
        %v5753 = vsel %vm3120, %v5752, %v5751
        %v5754 = vrot.slane %v5497, 5
        %v5755 = vsel %vm3122, %v5754, %v5753
        %v5756 = vrot.slane %v5498, 4
        %v5757 = vsel %vm3124, %v5756, %v5755
        %v5758 = vrot.slane %v5499, 3
        %v5759 = vsel %vm3126, %v5758, %v5757
        %v5760 = vrot.slane %v5500, 2
        %v5761 = vsel %vm3128, %v5760, %v5759
        %v5762 = vrot.slane %v5501, 1
        %v5763 = vsel %vm3130, %v5762, %v5761
        %v5764 = vrot.slane %v5503, 7
        %v5765 = vsel %vm3118, %v5764, %v5502
        %v5766 = vrot.slane %v5504, 6
        %v5767 = vsel %vm3120, %v5766, %v5765
        %v5768 = vrot.slane %v5505, 5
        %v5769 = vsel %vm3122, %v5768, %v5767
        %v5770 = vrot.slane %v5506, 4
        %v5771 = vsel %vm3124, %v5770, %v5769
        %v5772 = vrot.slane %v5507, 3
        %v5773 = vsel %vm3126, %v5772, %v5771
        %v5774 = vrot.slane %v5508, 2
        %v5775 = vsel %vm3128, %v5774, %v5773
        %v5776 = vrot.slane %v5509, 1
        %v5777 = vsel %vm3130, %v5776, %v5775
        %v5778 = vrot.slane %v5511, 7
        %v5779 = vsel %vm3118, %v5778, %v5510
        %v5780 = vrot.slane %v5512, 6
        %v5781 = vsel %vm3120, %v5780, %v5779
        %v5782 = vrot.slane %v5513, 5
        %v5783 = vsel %vm3122, %v5782, %v5781
        %v5784 = vrot.slane %v5514, 4
        %v5785 = vsel %vm3124, %v5784, %v5783
        %v5786 = vrot.slane %v5515, 3
        %v5787 = vsel %vm3126, %v5786, %v5785
        %v5788 = vrot.slane %v5516, 2
        %v5789 = vsel %vm3128, %v5788, %v5787
        %v5790 = vrot.slane %v5517, 1
        %v5791 = vsel %vm3130, %v5790, %v5789
        %v5792 = vrot.slane %v5519, 7
        %v5793 = vsel %vm3118, %v5792, %v5518
        %v5794 = vrot.slane %v5520, 6
        %v5795 = vsel %vm3120, %v5794, %v5793
        %v5796 = vrot.slane %v5521, 5
        %v5797 = vsel %vm3122, %v5796, %v5795
        %v5798 = vrot.slane %v5522, 4
        %v5799 = vsel %vm3124, %v5798, %v5797
        %v5800 = vrot.slane %v5523, 3
        %v5801 = vsel %vm3126, %v5800, %v5799
        %v5802 = vrot.slane %v5524, 2
        %v5803 = vsel %vm3128, %v5802, %v5801
        %v5804 = vrot.slane %v5525, 1
        %v5805 = vsel %vm3130, %v5804, %v5803
        %v5806 = vrot.slane %v5527, 7
        %v5807 = vsel %vm3118, %v5806, %v5526
        %v5808 = vrot.slane %v5528, 6
        %v5809 = vsel %vm3120, %v5808, %v5807
        %v5810 = vrot.slane %v5529, 5
        %v5811 = vsel %vm3122, %v5810, %v5809
        %v5812 = vrot.slane %v5530, 4
        %v5813 = vsel %vm3124, %v5812, %v5811
        %v5814 = vrot.slane %v5531, 3
        %v5815 = vsel %vm3126, %v5814, %v5813
        %v5816 = vrot.slane %v5532, 2
        %v5817 = vsel %vm3128, %v5816, %v5815
        %v5818 = vrot.slane %v5533, 1
        %v5819 = vsel %vm3130, %v5818, %v5817
        %v5820 = vrot.slane %v5535, 7
        %v5821 = vsel %vm3118, %v5820, %v5534
        %v5822 = vrot.slane %v5536, 6
        %v5823 = vsel %vm3120, %v5822, %v5821
        %v5824 = vrot.slane %v5537, 5
        %v5825 = vsel %vm3122, %v5824, %v5823
        %v5826 = vrot.slane %v5538, 4
        %v5827 = vsel %vm3124, %v5826, %v5825
        %v5828 = vrot.slane %v5539, 3
        %v5829 = vsel %vm3126, %v5828, %v5827
        %v5830 = vrot.slane %v5540, 2
        %v5831 = vsel %vm3128, %v5830, %v5829
        %v5832 = vrot.slane %v5541, 1
        %v5833 = vsel %vm3130, %v5832, %v5831
        %v5834 = vrot.slane %v5543, 7
        %v5835 = vsel %vm3118, %v5834, %v5542
        %v5836 = vrot.slane %v5544, 6
        %v5837 = vsel %vm3120, %v5836, %v5835
        %v5838 = vrot.slane %v5545, 5
        %v5839 = vsel %vm3122, %v5838, %v5837
        %v5840 = vrot.slane %v5546, 4
        %v5841 = vsel %vm3124, %v5840, %v5839
        %v5842 = vrot.slane %v5547, 3
        %v5843 = vsel %vm3126, %v5842, %v5841
        %v5844 = vrot.slane %v5548, 2
        %v5845 = vsel %vm3128, %v5844, %v5843
        %v5846 = vrot.slane %v5549, 1
        %v5847 = vsel %vm3130, %v5846, %v5845
        %v5848 = vrot.slane %v5551, 7
        %v5849 = vsel %vm3118, %v5848, %v5550
        %v5850 = vrot.slane %v5552, 6
        %v5851 = vsel %vm3120, %v5850, %v5849
        %v5852 = vrot.slane %v5553, 5
        %v5853 = vsel %vm3122, %v5852, %v5851
        %v5854 = vrot.slane %v5554, 4
        %v5855 = vsel %vm3124, %v5854, %v5853
        %v5856 = vrot.slane %v5555, 3
        %v5857 = vsel %vm3126, %v5856, %v5855
        %v5858 = vrot.slane %v5556, 2
        %v5859 = vsel %vm3128, %v5858, %v5857
        %v5860 = vrot.slane %v5557, 1
        %v5861 = vsel %vm3130, %v5860, %v5859
        %v5862 = vrot.slane %v5559, 7
        %v5863 = vsel %vm3118, %v5862, %v5558
        %v5864 = vrot.slane %v5560, 6
        %v5865 = vsel %vm3120, %v5864, %v5863
        %v5866 = vrot.slane %v5561, 5
        %v5867 = vsel %vm3122, %v5866, %v5865
        %v5868 = vrot.slane %v5562, 4
        %v5869 = vsel %vm3124, %v5868, %v5867
        %v5870 = vrot.slane %v5563, 3
        %v5871 = vsel %vm3126, %v5870, %v5869
        %v5872 = vrot.slane %v5564, 2
        %v5873 = vsel %vm3128, %v5872, %v5871
        %v5874 = vrot.slane %v5565, 1
        %v5875 = vsel %vm3130, %v5874, %v5873
        %v5876 = vrot.slane %v5567, 7
        %v5877 = vsel %vm3118, %v5876, %v5566
        %v5878 = vrot.slane %v5568, 6
        %v5879 = vsel %vm3120, %v5878, %v5877
        %v5880 = vrot.slane %v5569, 5
        %v5881 = vsel %vm3122, %v5880, %v5879
        %v5882 = vrot.slane %v5570, 4
        %v5883 = vsel %vm3124, %v5882, %v5881
        %v5884 = vrot.slane %v5571, 3
        %v5885 = vsel %vm3126, %v5884, %v5883
        %v5886 = vrot.slane %v5572, 2
        %v5887 = vsel %vm3128, %v5886, %v5885
        %v5888 = vrot.slane %v5573, 1
        %v5889 = vsel %vm3130, %v5888, %v5887
        %v5890 = vrot.slane %v5575, 7
        %v5891 = vsel %vm3118, %v5890, %v5574
        %v5892 = vrot.slane %v5576, 6
        %v5893 = vsel %vm3120, %v5892, %v5891
        %v5894 = vrot.slane %v5577, 5
        %v5895 = vsel %vm3122, %v5894, %v5893
        %v5896 = vrot.slane %v5578, 4
        %v5897 = vsel %vm3124, %v5896, %v5895
        %v5898 = vrot.slane %v5579, 3
        %v5899 = vsel %vm3126, %v5898, %v5897
        %v5900 = vrot.slane %v5580, 2
        %v5901 = vsel %vm3128, %v5900, %v5899
        %v5902 = vrot.slane %v5581, 1
        %v5903 = vsel %vm3130, %v5902, %v5901
        %v5904 = vrot.slane %v5583, 7
        %v5905 = vsel %vm3118, %v5904, %v5582
        %v5906 = vrot.slane %v5584, 6
        %v5907 = vsel %vm3120, %v5906, %v5905
        %v5908 = vrot.slane %v5585, 5
        %v5909 = vsel %vm3122, %v5908, %v5907
        %v5910 = vrot.slane %v5586, 4
        %v5911 = vsel %vm3124, %v5910, %v5909
        %v5912 = vrot.slane %v5587, 3
        %v5913 = vsel %vm3126, %v5912, %v5911
        %v5914 = vrot.slane %v5588, 2
        %v5915 = vsel %vm3128, %v5914, %v5913
        %v5916 = vrot.slane %v5589, 1
        %v5917 = vsel %vm3130, %v5916, %v5915
        %v5918 = vrot.slane %v5591, 7
        %v5919 = vsel %vm3118, %v5918, %v5590
        %v5920 = vrot.slane %v5592, 6
        %v5921 = vsel %vm3120, %v5920, %v5919
        %v5922 = vrot.slane %v5593, 5
        %v5923 = vsel %vm3122, %v5922, %v5921
        %v5924 = vrot.slane %v5594, 4
        %v5925 = vsel %vm3124, %v5924, %v5923
        %v5926 = vrot.slane %v5595, 3
        %v5927 = vsel %vm3126, %v5926, %v5925
        %v5928 = vrot.slane %v5596, 2
        %v5929 = vsel %vm3128, %v5928, %v5927
        %v5930 = vrot.slane %v5597, 1
        %v5931 = vsel %vm3130, %v5930, %v5929
        %v5932 = vrot.slane %v5599, 7
        %v5933 = vsel %vm3118, %v5932, %v5598
        %v5934 = vrot.slane %v5600, 6
        %v5935 = vsel %vm3120, %v5934, %v5933
        %v5936 = vrot.slane %v5601, 5
        %v5937 = vsel %vm3122, %v5936, %v5935
        %v5938 = vrot.slane %v5602, 4
        %v5939 = vsel %vm3124, %v5938, %v5937
        %v5940 = vrot.slane %v5603, 3
        %v5941 = vsel %vm3126, %v5940, %v5939
        %v5942 = vrot.slane %v5604, 2
        %v5943 = vsel %vm3128, %v5942, %v5941
        %v5944 = vrot.slane %v5605, 1
        %v5945 = vsel %vm3130, %v5944, %v5943
        %v5946 = vrot.slane %v5607, 7
        %v5947 = vsel %vm3118, %v5946, %v5606
        %v5948 = vrot.slane %v5608, 6
        %v5949 = vsel %vm3120, %v5948, %v5947
        %v5950 = vrot.slane %v5609, 5
        %v5951 = vsel %vm3122, %v5950, %v5949
        %v5952 = vrot.slane %v5610, 4
        %v5953 = vsel %vm3124, %v5952, %v5951
        %v5954 = vrot.slane %v5611, 3
        %v5955 = vsel %vm3126, %v5954, %v5953
        %v5956 = vrot.slane %v5612, 2
        %v5957 = vsel %vm3128, %v5956, %v5955
        %v5958 = vrot.slane %v5613, 1
        %v5959 = vsel %vm3130, %v5958, %v5957
        %v5960 = vrot.slane %v5615, 7
        %v5961 = vsel %vm3118, %v5960, %v5614
        %v5962 = vrot.slane %v5616, 6
        %v5963 = vsel %vm3120, %v5962, %v5961
        %v5964 = vrot.slane %v5617, 5
        %v5965 = vsel %vm3122, %v5964, %v5963
        %v5966 = vrot.slane %v5618, 4
        %v5967 = vsel %vm3124, %v5966, %v5965
        %v5968 = vrot.slane %v5619, 3
        %v5969 = vsel %vm3126, %v5968, %v5967
        %v5970 = vrot.slane %v5620, 2
        %v5971 = vsel %vm3128, %v5970, %v5969
        %v5972 = vrot.slane %v5621, 1
        %v5973 = vsel %vm3130, %v5972, %v5971
        %5990 = vst [vmem:[%s378] sm:$0xff] %v5763
        %5991 = vst [vmem:[%s378 + $0x8] sm:$0xff] %v5777
        %5992 = vst [vmem:[%s378 + $0x10] sm:$0xff] %v5791
        %5993 = vst [vmem:[%s378 + $0x18] sm:$0xff] %v5805
        %5994 = vst [vmem:[%s378 + $0x20] sm:$0xff] %v5819
        %5995 = vst [vmem:[%s378 + $0x28] sm:$0xff] %v5833
        %5996 = vst [vmem:[%s378 + $0x30] sm:$0xff] %v5847
        %5997 = vst [vmem:[%s378 + $0x38] sm:$0xff] %v5861
        %5998 = vst [vmem:[%s378 + $0x40] sm:$0xff] %v5875
        %5999 = vst [vmem:[%s378 + $0x48] sm:$0xff] %v5889
        %6000 = vst [vmem:[%s378 + $0x50] sm:$0xff] %v5903
        %6001 = vst [vmem:[%s378 + $0x58] sm:$0xff] %v5917
        %6002 = vst [vmem:[%s378 + $0x60] sm:$0xff] %v5931
        %6003 = vst [vmem:[%s378 + $0x68] sm:$0xff] %v5945
        %6004 = vst [vmem:[%s378 + $0x70] sm:$0xff] %v5959
        %6005 = vst [vmem:[%s378 + $0x78] sm:$0xff] %v5973
        %s6006 = sand.u32 %s181, 1
        %s6007 = scalar_lea.sflag [#allocation4], %s6006
        %s6008 = sand.u32 %s181, 1
        %s6009 = smul.addr %s6008, 128
        %s6010 = scalar_lea.vmem [#allocation10], %s6009
        // Predicated region
        $region61: #{tpu_custom_call.1} parent=43 // pred_check
          %p6011 = pneg %p191
        $region62: #{tpu_custom_call.1} parent=43 // pred_check_branch
          %6013 = sbr.rel (%p6011) target = $region64
        $region63: #{tpu_custom_call.1} parent=43 // pred_region
          %s6014 = smul.u32 16, %s27
          %6016 = vsyncadd %s6007, 0
          %s6017 = smul.addr %s6014, 8
          %s6018 = scalar_lea.hbm %s6, %s6017
          %s6019 = sshll.u32 %s6010, 4
          %s6020 = int_to_ptr.vmem [resolvable:$true] %s6019
          %s6021 = sshll.u32 %s6018, 4
          %s6022 = int_to_ptr.hbm [resolvable:$true] %s6021
          %6027 = dma.vmem_to_hbm [thread:$0]  %s6020, 2048, %s6022, %s6007, 128, 128, 8
        $region64: #{tpu_custom_call.1} parent=43 // pred_fallthru
          _
      $region44: #{tpu_custom_call.1} parent=5 // pred_fallthru
        _
      %p6028 = scmp.le.s32.totalorder 2, %s22
      // Predicated region
      $region65: #{tpu_custom_call.1} parent=5 // pred_check
        %p6029 = pneg %p6028
      $region66: #{tpu_custom_call.1} parent=5 // pred_check_branch
        %6031 = sbr.rel (%p6029) target = $region68
      $region67: #{tpu_custom_call.1} parent=5 // pred_region
        %s6032 = ssub.s32 %s22, 2
        // Predicated region
        $region69: #{tpu_custom_call.1} parent=67 // pred_check
          %p6033 = pneg %p197
        $region70: #{tpu_custom_call.1} parent=67 // pred_check_branch
          %6035 = sbr.rel (%p6033) target = $region72
        $region71: #{tpu_custom_call.1} parent=67 // pred_region
          %s6036 = sand.u32 %s182, 1
          %s6037 = scalar_lea.sflag [#allocation4], %s6036
          %s6038 = sand.u32 %s182, 1
          %s6039 = smul.addr %s6038, 128
          %s6040 = scalar_lea.vmem [#allocation10], %s6039
          %6042 = dma.done %s6037, 2048
        $region72: #{tpu_custom_call.1} parent=67 // pred_fallthru
          _
      $region68: #{tpu_custom_call.1} parent=5 // pred_fallthru
        _
    $region6: #{tpu_custom_call.1} parent=1 // loop_footer
      %s26 = sadd.s32 1, %s22
    $region7: #{tpu_custom_call.1} parent=1 // loop_footer_branch
      %21 = sbr.rel target = $region3
    $region8: #{tpu_custom_call.1} parent=1 // loop_exit
      _
    %6043 = vsyncpa [#allocation3], 1
    %s6044 = scalar_lea.sflag [#allocation3], 1
    %6045 = vsyncpa %s6044, 1
    %6046 = vsyncpa [#allocation6], 1
    %s6047 = scalar_lea.sflag [#allocation6], 1
    %6048 = vsyncpa %s6047, 1
    %6049 = vsyncpa [#allocation9], 1
    %6050 = vsyncpa [#allocation4], 1
    %s6051 = scalar_lea.sflag [#allocation4], 1
    %6052 = vsyncpa %s6051, 1

</llo_original>
